<compile_context>
chip_gen: v6e
topology: v6e:2x2x1
jax: 0.10.0
libtpu: 0.0.40
codegen_flags: <defaults>
</compile_context>

<pallas_src>
import jax
import jax.numpy as jnp
from jax.experimental import pallas as pl
from jax.experimental.pallas import tpu as pltpu


# ---------------------------------------------------------------------------
# Rotation-invariant feature construction (plain JAX).
# TODO(synk): the per-group argmax + descending sort + data-dependent gathers
# (order_index / index_points) are left in plain JAX; a Pallas version would
# need an in-kernel sorting network and manual DMA gathers.
# ---------------------------------------------------------------------------
def _index_points(points, idx):
    """points: (B, N, C); idx: (B, S, K) int -> (B, S, K, C)."""
    b = jnp.arange(points.shape[0])[:, None, None]
    return points[b, idx]


def _order_index(xyz, new_norm, idx):
    """xyz: (B,S,K,3), new_norm: (B,S,3,1), idx: (B,S,K) -> (dots_sorted, idx_ordered)."""
    B, S, K, C = xyz.shape
    dist_plane = jnp.matmul(xyz, new_norm)                          # (B,S,K,1)
    proj = xyz - dist_plane * jnp.swapaxes(new_norm, -1, -2)        # (B,S,K,3)
    proj_len = jnp.linalg.norm(proj, axis=-1, keepdims=True)        # (B,S,K,1)
    proj_unit = proj / proj_len
    proj_unit = jnp.where(jnp.isnan(proj_unit), 0.0, proj_unit)
    length_max_idx = jnp.argmax(proj_len, axis=2)                   # (B,S,1)
    vec_ref = jnp.take_along_axis(proj_unit, length_max_idx[..., None], axis=2)  # (B,S,1,3)
    dots = jnp.matmul(proj_unit, jnp.swapaxes(vec_ref, -1, -2))     # (B,S,K,1)
    sgn = jnp.cross(proj_unit, jnp.broadcast_to(vec_ref, (B, S, K, C)))
    sgn = jnp.matmul(sgn, new_norm)                                 # (B,S,K,1)
    sgn = jnp.sign(sgn)
    sgn = sgn.at[:, :, 0, 0].set(1.0)
    dots = sgn * dots - (1.0 - sgn)
    order = jnp.argsort(-dots[..., 0], axis=2)                      # descending sort
    dots_sorted = jnp.take_along_axis(dots, order[..., None], axis=2)
    idx_ordered = jnp.take_along_axis(idx, order, axis=2)
    return dots_sorted, idx_ordered


def _ri_features(xyz, centers, center_norms, idx, pts, norm_ori):
    """Returns ri_feat (B, S, K, 8) and the ordered index (B, S, K)."""
    B, S, _ = centers.shape
    new_norm = center_norms[..., None]                              # (B,S,3,1)
    dots_sorted, idx_ordered = _order_index(xyz, new_norm, idx)
    eps = 1e-7

    grouped_xyz = _index_points(pts, idx_ordered)                   # (B,S,K,3)
    g_local = grouped_xyz - centers[:, :, None, :]
    g_len = jnp.linalg.norm(g_local, axis=-1, keepdims=True)
    g_unit = g_local / g_len
    g_unit = jnp.where(jnp.isnan(g_unit), 0.0, g_unit)
    g_norm = _index_points(norm_ori, idx_ordered)                   # (B,S,K,3)

    angle_0 = jnp.matmul(g_unit, new_norm)                          # (B,S,K,1)
    angle_1 = jnp.sum(g_unit * g_norm, axis=-1, keepdims=True)
    angle_n = jnp.matmul(g_norm, new_norm)
    angle_n = jnp.arccos(jnp.clip(angle_n, -1.0 + eps, 1.0 - eps))
    # TODO(synk): modern PyTorch `D_0[D_0==0] = -1` on a bool tensor degenerates
    # to all-True; the intended +/-1 sign convention is implemented here.
    d0 = jnp.where(angle_0 < angle_1, 1.0, -1.0)
    angle_n = d0 * angle_n

    inner_vec = g_local - jnp.roll(g_local, 1, axis=2)
    inner_len = jnp.linalg.norm(inner_vec, axis=-1, keepdims=True)
    inner_unit = inner_vec / inner_len
    inner_unit = jnp.where(jnp.isnan(inner_unit), 0.0, inner_unit)
    in_a0 = jnp.sum(inner_unit * g_norm, axis=-1, keepdims=True)
    in_a1 = jnp.sum(inner_unit * jnp.roll(g_norm, 1, axis=2), axis=-1, keepdims=True)
    in_a2 = jnp.sum(g_norm * jnp.roll(g_norm, 1, axis=2), axis=-1, keepdims=True)
    in_a2 = jnp.arccos(jnp.clip(in_a2, -1.0 + eps, 1.0 - eps))
    d1 = jnp.where(in_a0 < in_a1, 1.0, -1.0)
    in_a2 = d1 * in_a2

    proj_inner = dots_sorted - jnp.roll(dots_sorted, 1, axis=2)
    proj_inner = proj_inner.at[:, :, 0, 0].set(-3.0 - dots_sorted[:, :, -1, 0])

    ri_feat = jnp.concatenate(
        [g_len, proj_inner, angle_0, angle_1, angle_n, in_a0, in_a1, in_a2],
        axis=-1)                                                    # (B,S,K,8)
    return ri_feat, idx_ordered


# ---------------------------------------------------------------------------
# Pallas kernel: Conv2d(1x1)+BN+ReLU x3 (BN pre-folded, bf16 MXU inputs,
# f32 accumulate) + max over the nsample axis.  One grid step processes
# gb point groups = gb*K matmul rows.
# ---------------------------------------------------------------------------
def _mlp_max_kernel(x_ref, w1_ref, b1_ref, w2_ref, b2_ref, w3_ref, b3_ref,
                    out_ref):
    gb, c_pad = out_ref.shape
    rows = x_ref.shape[0]
    k = rows // gb

    x = x_ref[...]                                                  # (rows, 8) bf16
    h = jnp.dot(x, w1_ref[...], preferred_element_type=jnp.float32) + b1_ref[...]
    h = jnp.maximum(h, 0.0)                                         # (rows, 64) f32
    h = jnp.dot(h.astype(w2_ref.dtype), w2_ref[...],
                preferred_element_type=jnp.float32) + b2_ref[...]
    h = jnp.maximum(h, 0.0)                                         # (rows, 128) f32
    h = jnp.dot(h.astype(w3_ref.dtype), w3_ref[...],
                preferred_element_type=jnp.float32) + b3_ref[...]
    h = jnp.maximum(h, 0.0)                                         # (rows, c_pad) f32

    # Per-group max-pool over the nsample axis; lane-dense (c_pad % 128 == 0)
    # store.  TODO(synk): switch to a log2(K) pairwise-max tree only if a
    # bundle profile shows the XLU (not the MXU) saturating.
    out_ref[...] = jnp.max(h.reshape(gb, k, c_pad), axis=1)         # (gb, c_pad)


def _fold_bn(w, b, gamma, beta, mean, var, eps=1e-5):
    """Fold eval-mode BatchNorm into a channels-last (Cin, Cout) conv weight."""
    scale = gamma / jnp.sqrt(var + eps)                             # (Cout,)
    return w * scale[None, :], (b - mean[None, :]) * scale[None, :] + beta[None, :]


def ri_encoder_forward(xyz, centers, norm, center_norms, idx, pts, norm_ori,
                       params, *, groups_per_block=512):
    """Full RI_encoder forward -> (B, S, encoder_channel)."""
    del norm  # unused by the PyTorch forward as well
    ri_feat, _ = _ri_features(xyz, centers, center_norms, idx, pts, norm_ori)
    B, S, K, CIN = ri_feat.shape

    # Fold eval-mode BatchNorm into the 1x1 conv weights.
    w1, b1 = _fold_bn(params["w1"], params["b1"], params["g1"], params["be1"],
                      params["m1"], params["v1"])
    w2, b2 = _fold_bn(params["w2"], params["b2"], params["g2"], params["be2"],
                      params["m2"], params["v2"])
    w3, b3 = _fold_bn(params["w3"], params["b3"], params["g3"], params["be3"],
                      params["m3"], params["v3"])
    c1, c2, C = w1.shape[1], w2.shape[1], w3.shape[1]

    # Lane-dense output stores: pad final channel dim to a multiple of 128.
    c_pad = ((C + 127) // 128) * 128
    if c_pad != C:
        w3 = jnp.pad(w3, ((0, 0), (0, c_pad - C)))
        b3 = jnp.pad(b3, ((0, 0), (0, c_pad - C)))

    # bf16 MXU inputs; biases / accumulation stay f32.
    w1b, w2b, w3b = (w.astype(jnp.bfloat16) for w in (w1, w2, w3))
    b1f, b2f, b3f = (b.astype(jnp.float32) for b in (b1, b2, b3))

    # --- Tile the group axis: large gb (overhead-bound otherwise), multiple
    # of 8 sublanes, and >= 2 blocks when there is enough work so the
    # "parallel" axis can shard across both v7x TensorCores.
    bg = B * S
    gb = max(8, (min(groups_per_block, bg) // 8) * 8)
    if bg > 8 and pl.cdiv(bg, gb) < 2:
        gb = max(8, (((bg + 1) // 2) // 8) * 8)        # split roughly in half
    bg_pad = pl.cdiv(bg, gb) * gb
    n_blocks = bg_pad // gb

    # (bg, K, CIN) -> (bg_pad*K, CIN) reshape done here (free HBM view) so the
    # kernel never relays (gb, K, 8) tiles into (rows, 8) inside VMEM.
    x = ri_feat.reshape(bg, K, CIN)
    if bg_pad != bg:
        x = jnp.pad(x, ((0, bg_pad - bg), (0, 0), (0, 0)))
    x = x.reshape(bg_pad * K, CIN).astype(jnp.bfloat16)

    rows_block = gb * K
    rows_total = bg_pad * K
    flops = 2 * rows_total * (CIN * c1 + c1 * c2 + c2 * c_pad)
    bytes_accessed = (
        x.size * 2                                              # bf16 input
        + (w1b.size + w2b.size + w3b.size) * 2                  # bf16 weights
        + (b1f.size + b2f.size + b3f.size) * 4                  # f32 biases
        + rows_total * c_pad * 4                                # max-pool reads
        + bg_pad * c_pad * 4)                                   # output store

    # Explicit VMEM budget (v5e default scoped limit ~16 MiB; v7x 64 MiB/TC).
    vmem_bytes = (
        2 * rows_block * CIN * 2                                # x, double-buffered
        + 2 * gb * c_pad * 4                                    # out, double-buffered
        + 2 * (w1b.size + w2b.size + w3b.size) * 2
        + 2 * (b1f.size + b2f.size + b3f.size) * 4
        + rows_block * (c1 + c2 + c_pad) * 4)                   # live f32 activations
    vmem_limit = int(min(max(2 * vmem_bytes, 32 * 1024 * 1024),
                         56 * 1024 * 1024))

    out = pl.pallas_call(
        _mlp_max_kernel,
        out_shape=jax.ShapeDtypeStruct((bg_pad, c_pad), jnp.float32),
        grid_spec=pltpu.PrefetchScalarGridSpec(
            num_scalar_prefetch=0,
            grid=(n_blocks,),
            in_specs=[
                pl.BlockSpec((rows_block, CIN), lambda i: (i, 0)),
                pl.BlockSpec((CIN, c1), lambda i: (0, 0)),
                pl.BlockSpec((1, c1), lambda i: (0, 0)),
                pl.BlockSpec((c1, c2), lambda i: (0, 0)),
                pl.BlockSpec((1, c2), lambda i: (0, 0)),
                pl.BlockSpec((c2, c_pad), lambda i: (0, 0)),
                pl.BlockSpec((1, c_pad), lambda i: (0, 0)),
            ],
            out_specs=pl.BlockSpec((gb, c_pad), lambda i: (i, 0)),
        ),
        compiler_params=pltpu.CompilerParams(
            dimension_semantics=("parallel",),     # group axis has no carry
            vmem_limit_bytes=vmem_limit),
        cost_estimate=pl.CostEstimate(
            flops=flops, transcendentals=0, bytes_accessed=bytes_accessed),
    )(x, w1b, b1f, w2b, b2f, w3b, b3f)

    return out[:bg, :C].reshape(B, S, C)


# ---------------------------------------------------------------------------
# Plain-JAX reference (same folded-BN eval semantics, same bf16-in/f32-acc
# matmul dtypes) and synthetic params.
# ---------------------------------------------------------------------------
def ri_encoder_reference(xyz, centers, norm, center_norms, idx, pts, norm_ori,
                         params):
    del norm
    ri_feat, _ = _ri_features(xyz, centers, center_norms, idx, pts, norm_ori)
    w1, b1 = _fold_bn(params["w1"], params["b1"], params["g1"], params["be1"],
                      params["m1"], params["v1"])
    w2, b2 = _fold_bn(params["w2"], params["b2"], params["g2"], params["be2"],
                      params["m2"], params["v2"])
    w3, b3 = _fold_bn(params["w3"], params["b3"], params["g3"], params["be3"],
                      params["m3"], params["v3"])
    w1b, w2b, w3b = (w.astype(jnp.bfloat16) for w in (w1, w2, w3))
    h = jnp.maximum(jnp.einsum("bskc,cd->bskd", ri_feat.astype(jnp.bfloat16), w1b,
                               preferred_element_type=jnp.float32) + b1, 0.0)
    h = jnp.maximum(jnp.einsum("bskc,cd->bskd", h.astype(jnp.bfloat16), w2b,
                               preferred_element_type=jnp.float32) + b2, 0.0)
    h = jnp.maximum(jnp.einsum("bskc,cd->bskd", h.astype(jnp.bfloat16), w3b,
                               preferred_element_type=jnp.float32) + b3, 0.0)
    return jnp.max(h, axis=2)                                       # (B, S, C)


def make_params(encoder_channel, key):
    """Synthetic params with the shapes implied by RIConv2SetAbstraction.__init__."""
    ks = jax.random.split(key, 6)

    def w(k, cin, cout, scale=0.1):
        return (scale * jax.random.normal(k, (cin, cout))).astype(jnp.float32)

    def b(k, cout, scale=0.05):
        return (scale * jax.random.normal(k, (1, cout))).astype(jnp.float32)

    def bn(c):  # fresh BatchNorm2d (eval-mode semantics): gamma, beta, mean, var
        return (jnp.ones((c,), jnp.float32), jnp.zeros((c,), jnp.float32),
                jnp.zeros((c,), jnp.float32), jnp.ones((c,), jnp.float32))

    g1, be1, m1, v1 = bn(64)
    g2, be2, m2, v2 = bn(128)
    g3, be3, m3, v3 = bn(encoder_channel)
    return {
        "w1": w(ks[0], 8, 64),     "b1": b(ks[1], 64),
        "g1": g1, "be1": be1, "m1": m1, "v1": v1,
        "w2": w(ks[2], 64, 128),   "b2": b(ks[3], 128),
        "g2": g2, "be2": be2, "m2": m2, "v2": v2,
        "w3": w(ks[4], 128, encoder_channel), "b3": b(ks[5], encoder_channel),
        "g3": g3, "be3": be3, "m3": m3, "v3": v3,
    }


if __name__ == "__main__":
    B, S, K, N = 2, 64, 16, 128          # batch, npoint, nsample, #raw points
    ENCODER_CHANNEL = 64

    key = jax.random.PRNGKey(0)
    k_pts, k_nrm, k_idx, k_c, k_cn, k_p = jax.random.split(key, 6)

    pts = jax.random.normal(k_pts, (B, N, 3), dtype=jnp.float32)
    norm_ori = jax.random.normal(k_nrm, (B, N, 3), dtype=jnp.float32)
    norm_ori = norm_ori / jnp.linalg.norm(norm_ori, axis=-1, keepdims=True)
    idx = jax.random.randint(k_idx, (B, S, K), 0, N, dtype=jnp.int32)
    centers = 0.5 * jax.random.normal(k_c, (B, S, 3), dtype=jnp.float32)
    center_norms = jax.random.normal(k_cn, (B, S, 3), dtype=jnp.float32)
    center_norms = center_norms / jnp.linalg.norm(center_norms, axis=-1, keepdims=True)
    xyz = _index_points(pts, idx) - centers[:, :, None, :]          # (B,S,K,3) local coords
    norm = _index_points(norm_ori, idx)                             # (B,S,K,3) (unused)

    params = make_params(ENCODER_CHANNEL, k_p)

    out = ri_encoder_forward(xyz, centers, norm, center_norms, idx, pts,
                             norm_ori, params)
    out = jax.block_until_ready(out)

    ref = ri_encoder_reference(xyz, centers, norm, center_norms, idx, pts,
                               norm_ori, params)
    assert out.shape == (B, S, ENCODER_CHANNEL), out.shape
    err = float(jnp.max(jnp.abs(out - ref)))
    assert err < 2e-3, err

    print("KERNEL_OK")
</pallas_src>

<mosaic_0001>
module attributes {stable_mosaic.version = 11 : i64} {
  func.func @_mlp_max_kernel(%arg0: i32, %arg1: memref<1024x8xbf16, #tpu.memory_space<vmem>>, %arg2: memref<8x64xbf16, #tpu.memory_space<vmem>>, %arg3: memref<1x64xf32, #tpu.memory_space<vmem>>, %arg4: memref<64x128xbf16, #tpu.memory_space<vmem>>, %arg5: memref<1x128xf32, #tpu.memory_space<vmem>>, %arg6: memref<128x128xbf16, #tpu.memory_space<vmem>>, %arg7: memref<1x128xf32, #tpu.memory_space<vmem>>, %arg8: memref<64x128xf32, #tpu.memory_space<vmem>>) attributes {dimension_semantics = [#tpu.dimension_semantics<parallel>], iteration_bounds = array<i64: 2>, scalar_prefetch = 0 : i64, scratch_operands = 0 : i64, tpu.core_type = #tpu.core_type<tc>, window_params = [{transform_indices = @transform_0, window_bounds = array<i64: 1024, 8>}, {pipeline_mode = #tpu.pipeline_mode<synchronous>, transform_indices = @transform_1, window_bounds = array<i64: 8, 64>}, {pipeline_mode = #tpu.pipeline_mode<synchronous>, transform_indices = @transform_2, window_bounds = array<i64: 1, 64>}, {pipeline_mode = #tpu.pipeline_mode<synchronous>, transform_indices = @transform_3, window_bounds = array<i64: 64, 128>}, {pipeline_mode = #tpu.pipeline_mode<synchronous>, transform_indices = @transform_4, window_bounds = array<i64: 1, 128>}, {pipeline_mode = #tpu.pipeline_mode<synchronous>, transform_indices = @transform_5, window_bounds = array<i64: 128, 128>}, {pipeline_mode = #tpu.pipeline_mode<synchronous>, transform_indices = @transform_6, window_bounds = array<i64: 1, 128>}, {transform_indices = @transform_7, window_bounds = array<i64: 64, 128>}]} {
    %c0 = arith.constant 0 : index
    %c0_0 = arith.constant 0 : index
    %0 = vector.load %arg1[%c0, %c0_0] : memref<1024x8xbf16, #tpu.memory_space<vmem>>, vector<1024x8xbf16>
    %c0_1 = arith.constant 0 : index
    %c0_2 = arith.constant 0 : index
    %1 = vector.load %arg2[%c0_1, %c0_2] : memref<8x64xbf16, #tpu.memory_space<vmem>>, vector<8x64xbf16>
    %cst = arith.constant dense<0.000000e+00> : vector<1024x64xf32>
    %2 = tpu.matmul %0, %1, %cst {dimension_numbers = #tpu.dot_dimension_numbers<[1], [0], [0], [1], [0, 0, 1, 1], [], []>} : vector<1024x8xbf16>, vector<8x64xbf16>, vector<1024x64xf32> -> vector<1024x64xf32>
    %c0_3 = arith.constant 0 : index
    %c0_4 = arith.constant 0 : index
    %3 = vector.load %arg3[%c0_3, %c0_4] : memref<1x64xf32, #tpu.memory_space<vmem>>, vector<1x64xf32>
    %4 = vector.broadcast %3 : vector<1x64xf32> to vector<1024x64xf32>
    %5 = arith.addf %2, %4 : vector<1024x64xf32>
    %cst_5 = arith.constant 0.000000e+00 : f32
    %6 = vector.broadcast %cst_5 : f32 to vector<1024x64xf32>
    %7 = arith.maximumf %5, %6 : vector<1024x64xf32>
    %8 = arith.truncf %7 : vector<1024x64xf32> to vector<1024x64xbf16>
    %c0_6 = arith.constant 0 : index
    %c0_7 = arith.constant 0 : index
    %9 = vector.load %arg4[%c0_6, %c0_7] : memref<64x128xbf16, #tpu.memory_space<vmem>>, vector<64x128xbf16>
    %cst_8 = arith.constant dense<0.000000e+00> : vector<1024x128xf32>
    %10 = tpu.matmul %8, %9, %cst_8 {dimension_numbers = #tpu.dot_dimension_numbers<[1], [0], [0], [1], [0, 0, 1, 1], [], []>} : vector<1024x64xbf16>, vector<64x128xbf16>, vector<1024x128xf32> -> vector<1024x128xf32>
    %c0_9 = arith.constant 0 : index
    %c0_10 = arith.constant 0 : index
    %11 = vector.load %arg5[%c0_9, %c0_10] : memref<1x128xf32, #tpu.memory_space<vmem>>, vector<1x128xf32>
    %12 = vector.broadcast %11 : vector<1x128xf32> to vector<1024x128xf32>
    %13 = arith.addf %10, %12 : vector<1024x128xf32>
    %cst_11 = arith.constant 0.000000e+00 : f32
    %14 = vector.broadcast %cst_11 : f32 to vector<1024x128xf32>
    %15 = arith.maximumf %13, %14 : vector<1024x128xf32>
    %16 = arith.truncf %15 : vector<1024x128xf32> to vector<1024x128xbf16>
    %c0_12 = arith.constant 0 : index
    %c0_13 = arith.constant 0 : index
    %17 = vector.load %arg6[%c0_12, %c0_13] : memref<128x128xbf16, #tpu.memory_space<vmem>>, vector<128x128xbf16>
    %cst_14 = arith.constant dense<0.000000e+00> : vector<1024x128xf32>
    %18 = tpu.matmul %16, %17, %cst_14 {dimension_numbers = #tpu.dot_dimension_numbers<[1], [0], [0], [1], [0, 0, 1, 1], [], []>} : vector<1024x128xbf16>, vector<128x128xbf16>, vector<1024x128xf32> -> vector<1024x128xf32>
    %c0_15 = arith.constant 0 : index
    %c0_16 = arith.constant 0 : index
    %19 = vector.load %arg7[%c0_15, %c0_16] : memref<1x128xf32, #tpu.memory_space<vmem>>, vector<1x128xf32>
    %20 = vector.broadcast %19 : vector<1x128xf32> to vector<1024x128xf32>
    %21 = arith.addf %18, %20 : vector<1024x128xf32>
    %cst_17 = arith.constant 0.000000e+00 : f32
    %22 = vector.broadcast %cst_17 : f32 to vector<1024x128xf32>
    %23 = arith.maximumf %21, %22 : vector<1024x128xf32>
    %24 = vector.shape_cast %23 : vector<1024x128xf32> to vector<64x16x128xf32>
    %cst_18 = arith.constant dense<0xFF800000> : vector<64x128xf32>
    %25 = vector.multi_reduction <maximumf>, %24, %cst_18 [1] : vector<64x16x128xf32> to vector<64x128xf32>
    %c0_19 = arith.constant 0 : index
    %c0_20 = arith.constant 0 : index
    %26 = vector.load %arg8[%c0_19, %c0_20] : memref<64x128xf32, #tpu.memory_space<vmem>>, vector<64x128xf32>
    tpu.vector_store %arg8[%c0_19, %c0_20], %25 {strides = array<i32>} : memref<64x128xf32, #tpu.memory_space<vmem>>, vector<64x128xf32>,
    return
  }
  func.func @transform_0(%arg0: i32) -> (i32, i32) {
    %c0_i32 = arith.constant 0 : i32
    %c0_i32_0 = arith.constant 0 : i32
    return %arg0, %c0_i32 : i32, i32
  }
  func.func @transform_1(%arg0: i32) -> (i32, i32) {
    %c0_i32 = arith.constant 0 : i32
    %c0_i32_0 = arith.constant 0 : i32
    %c0_i32_1 = arith.constant 0 : i32
    return %c0_i32, %c0_i32_0 : i32, i32
  }
  func.func @transform_2(%arg0: i32) -> (i32, i32) {
    %c0_i32 = arith.constant 0 : i32
    %c0_i32_0 = arith.constant 0 : i32
    %c0_i32_1 = arith.constant 0 : i32
    return %c0_i32, %c0_i32_0 : i32, i32
  }
  func.func @transform_3(%arg0: i32) -> (i32, i32) {
    %c0_i32 = arith.constant 0 : i32
    %c0_i32_0 = arith.constant 0 : i32
    %c0_i32_1 = arith.constant 0 : i32
    return %c0_i32, %c0_i32_0 : i32, i32
  }
  func.func @transform_4(%arg0: i32) -> (i32, i32) {
    %c0_i32 = arith.constant 0 : i32
    %c0_i32_0 = arith.constant 0 : i32
    %c0_i32_1 = arith.constant 0 : i32
    return %c0_i32, %c0_i32_0 : i32, i32
  }
  func.func @transform_5(%arg0: i32) -> (i32, i32) {
    %c0_i32 = arith.constant 0 : i32
    %c0_i32_0 = arith.constant 0 : i32
    %c0_i32_1 = arith.constant 0 : i32
    return %c0_i32, %c0_i32_0 : i32, i32
  }
  func.func @transform_6(%arg0: i32) -> (i32, i32) {
    %c0_i32 = arith.constant 0 : i32
    %c0_i32_0 = arith.constant 0 : i32
    %c0_i32_1 = arith.constant 0 : i32
    return %c0_i32, %c0_i32_0 : i32, i32
  }
  func.func @transform_7(%arg0: i32) -> (i32, i32) {
    %c0_i32 = arith.constant 0 : i32
    %c0_i32_0 = arith.constant 0 : i32
    return %arg0, %c0_i32 : i32, i32
  }
}

</mosaic_0001>

<llo_original>
// kernel: tpu_custom_call.1
$region0: #{tpu_custom_call.1}
  #allocation0 [shape = 'u32[]', space=smem, size = 0x4, offset = 0x4, fixed_abs, tag = 'smem constant byte address 0x4 - core index']
  #allocation1 [shape = 'u32[144,128]{1,0:T(1,128)}', space=vmem, size = 0x12000, scoped, tag = 'internal scratch']
  %s0 = inlined_call_operand.vmem [shape: bf16[2048,8], index: 0, kind: input, shape index: {}]
  %s1 = inlined_call_operand.vmem [shape: bf16[8,64], index: 1, kind: input, shape index: {}]
  %s2 = inlined_call_operand.vmem [shape: f32[1,64], index: 2, kind: input, shape index: {}]
  %s3 = inlined_call_operand.vmem [shape: bf16[64,128], index: 3, kind: input, shape index: {}]
  %s4 = inlined_call_operand.vmem [shape: f32[1,128], index: 4, kind: input, shape index: {}]
  %s5 = inlined_call_operand.vmem [shape: bf16[128,128], index: 5, kind: input, shape index: {}]
  %s6 = inlined_call_operand.vmem [shape: f32[1,128], index: 6, kind: input, shape index: {}]
  %s7 = inlined_call_operand.hbm [shape: f32[128,128], index: 7, kind: output, shape index: {}]
  %s8 = sld [smem:[#allocation0]]
  $region61: #{tpu_custom_call.1} parent=0
    _
  %s10 = ssub.s32 1, %s8
  %s11 = scalar_select 0, %s10, %s8
  $region1: #{tpu_custom_call.1} parent=0
    #allocation2 [shape = 'u8[65536]{0}', space=vmem, size = 0x10000, scoped, tag = 'output window, operand 0']
    #allocation3 [shape = 's32[2]{0}', space=sflag, size = 0x8, scoped, tag = 'scoped memory for tpu_custom_call.1']
    %12 = vsyncpa [#allocation3], 0
    %s13 = scalar_lea.sflag [#allocation3], 1
    %14 = vsyncpa %s13, 0
    loop: start=0, step=1, limit=4
    $region2: #{tpu_custom_call.1} parent=1 // loop_pre_header
      _
    $region3: #{tpu_custom_call.1} parent=1 // loop_header
      %s16 = sphi 0, %s20
      %p17 = scmp.ge.s32.totalorder %s16, 4
      %s26 = sphi 0, %s28
      %s29 = sphi 0, %s26
      %s30 = sphi 0, %s29
      %s46 = sphi 0, %s30
      %s50 = sphi 0, %s50
      %s52 = sphi 0, %s50
      %s53 = sphi 0, %s52
      %s67 = sphi 0, %s53
      %s71 = sphi 0, %s71
      %s73 = sphi 0, %s71
      %s74 = sphi 0, %s73
      %s88 = sphi 0, %s74
      %s92 = sphi 0, %s92
      %s94 = sphi 0, %s92
      %s95 = sphi 0, %s94
      %s109 = sphi 0, %s95
      %s113 = sphi 0, %s113
      %s115 = sphi 0, %s113
      %s116 = sphi 0, %s115
      %s130 = sphi 0, %s116
      %s134 = sphi 0, %s134
      %s136 = sphi 0, %s134
      %s137 = sphi 0, %s136
      %s151 = sphi 0, %s137
      %s155 = sphi 0, %s155
      %s157 = sphi 0, %s155
      %s158 = sphi 0, %s157
      %s172 = sphi 0, %s158
      %s178 = sphi 0, %s180
      %s181 = sphi 0, %s178
      %s182 = sphi 0, %s181
      %s198 = sphi 0, %s182
    $region4: #{tpu_custom_call.1} parent=1 // loop_header_branch
      %19 = sbr.rel (%p17) target = $region8
    $region5: #{tpu_custom_call.1} parent=1 // loop_body
      %s21 = ssub.s32 %s16, 1
      %s22 = ssub.s32 %s16, 2
      %s23 = sadd.s32 %s16, 1
      %s24 = ssub.s32 %s16, %s23
      %p25 = scmp.eq.s32.totalorder %s24, 0
      %s27 = sadd.s32 %s26, 1
      %s28 = scalar_select %p25, %s26, %s27
      %p31 = pneg %p25
      %p32 = scmp.eq.s32.totalorder %s16, 1
      %p33 = por %p31, %p32
      %p34 = scmp.ne.s32.totalorder %s26, %s29
      %p35 = scmp.eq.s32.totalorder %s16, 0
      %p36 = por %p34, %p35
      %p37 = scmp.ne.s32.totalorder %s26, %s29
      %p38 = scmp.eq.s32.totalorder %s21, 1
      %p39 = por %p37, %p38
      %p40 = scmp.ne.s32.totalorder %s29, %s30
      %p41 = scmp.eq.s32.totalorder %s21, 0
      %p42 = por %p40, %p41
      %p43 = scmp.ne.s32.totalorder %s29, %s30
      %p44 = scmp.eq.s32.totalorder %s22, 1
      %p45 = por %p43, %p44
      %p47 = scmp.ne.s32.totalorder %s30, %s46
      %p48 = scmp.eq.s32.totalorder %s22, 0
      %p49 = por %p47, %p48
      %s51 = sadd.s32 %s50, 1
      %p54 = scmp.eq.s32.totalorder %s16, 1
      %p55 = scmp.ne.s32.totalorder %s50, %s52
      %p56 = scmp.eq.s32.totalorder %s16, 0
      %p57 = por %p55, %p56
      %p58 = scmp.ne.s32.totalorder %s50, %s52
      %p59 = scmp.eq.s32.totalorder %s21, 1
      %p60 = por %p58, %p59
      %p61 = scmp.ne.s32.totalorder %s52, %s53
      %p62 = scmp.eq.s32.totalorder %s21, 0
      %p63 = por %p61, %p62
      %p64 = scmp.ne.s32.totalorder %s52, %s53
      %p65 = scmp.eq.s32.totalorder %s22, 1
      %p66 = por %p64, %p65
      %p68 = scmp.ne.s32.totalorder %s53, %s67
      %p69 = scmp.eq.s32.totalorder %s22, 0
      %p70 = por %p68, %p69
      %s72 = sadd.s32 %s71, 1
      %p75 = scmp.eq.s32.totalorder %s16, 1
      %p76 = scmp.ne.s32.totalorder %s71, %s73
      %p77 = scmp.eq.s32.totalorder %s16, 0
      %p78 = por %p76, %p77
      %p79 = scmp.ne.s32.totalorder %s71, %s73
      %p80 = scmp.eq.s32.totalorder %s21, 1
      %p81 = por %p79, %p80
      %p82 = scmp.ne.s32.totalorder %s73, %s74
      %p83 = scmp.eq.s32.totalorder %s21, 0
      %p84 = por %p82, %p83
      %p85 = scmp.ne.s32.totalorder %s73, %s74
      %p86 = scmp.eq.s32.totalorder %s22, 1
      %p87 = por %p85, %p86
      %p89 = scmp.ne.s32.totalorder %s74, %s88
      %p90 = scmp.eq.s32.totalorder %s22, 0
      %p91 = por %p89, %p90
      %s93 = sadd.s32 %s92, 1
      %p96 = scmp.eq.s32.totalorder %s16, 1
      %p97 = scmp.ne.s32.totalorder %s92, %s94
      %p98 = scmp.eq.s32.totalorder %s16, 0
      %p99 = por %p97, %p98
      %p100 = scmp.ne.s32.totalorder %s92, %s94
      %p101 = scmp.eq.s32.totalorder %s21, 1
      %p102 = por %p100, %p101
      %p103 = scmp.ne.s32.totalorder %s94, %s95
      %p104 = scmp.eq.s32.totalorder %s21, 0
      %p105 = por %p103, %p104
      %p106 = scmp.ne.s32.totalorder %s94, %s95
      %p107 = scmp.eq.s32.totalorder %s22, 1
      %p108 = por %p106, %p107
      %p110 = scmp.ne.s32.totalorder %s95, %s109
      %p111 = scmp.eq.s32.totalorder %s22, 0
      %p112 = por %p110, %p111
      %s114 = sadd.s32 %s113, 1
      %p117 = scmp.eq.s32.totalorder %s16, 1
      %p118 = scmp.ne.s32.totalorder %s113, %s115
      %p119 = scmp.eq.s32.totalorder %s16, 0
      %p120 = por %p118, %p119
      %p121 = scmp.ne.s32.totalorder %s113, %s115
      %p122 = scmp.eq.s32.totalorder %s21, 1
      %p123 = por %p121, %p122
      %p124 = scmp.ne.s32.totalorder %s115, %s116
      %p125 = scmp.eq.s32.totalorder %s21, 0
      %p126 = por %p124, %p125
      %p127 = scmp.ne.s32.totalorder %s115, %s116
      %p128 = scmp.eq.s32.totalorder %s22, 1
      %p129 = por %p127, %p128
      %p131 = scmp.ne.s32.totalorder %s116, %s130
      %p132 = scmp.eq.s32.totalorder %s22, 0
      %p133 = por %p131, %p132
      %s135 = sadd.s32 %s134, 1
      %p138 = scmp.eq.s32.totalorder %s16, 1
      %p139 = scmp.ne.s32.totalorder %s134, %s136
      %p140 = scmp.eq.s32.totalorder %s16, 0
      %p141 = por %p139, %p140
      %p142 = scmp.ne.s32.totalorder %s134, %s136
      %p143 = scmp.eq.s32.totalorder %s21, 1
      %p144 = por %p142, %p143
      %p145 = scmp.ne.s32.totalorder %s136, %s137
      %p146 = scmp.eq.s32.totalorder %s21, 0
      %p147 = por %p145, %p146
      %p148 = scmp.ne.s32.totalorder %s136, %s137
      %p149 = scmp.eq.s32.totalorder %s22, 1
      %p150 = por %p148, %p149
      %p152 = scmp.ne.s32.totalorder %s137, %s151
      %p153 = scmp.eq.s32.totalorder %s22, 0
      %p154 = por %p152, %p153
      %s156 = sadd.s32 %s155, 1
      %p159 = scmp.eq.s32.totalorder %s16, 1
      %p160 = scmp.ne.s32.totalorder %s155, %s157
      %p161 = scmp.eq.s32.totalorder %s16, 0
      %p162 = por %p160, %p161
      %p163 = scmp.ne.s32.totalorder %s155, %s157
      %p164 = scmp.eq.s32.totalorder %s21, 1
      %p165 = por %p163, %p164
      %p166 = scmp.ne.s32.totalorder %s157, %s158
      %p167 = scmp.eq.s32.totalorder %s21, 0
      %p168 = por %p166, %p167
      %p169 = scmp.ne.s32.totalorder %s157, %s158
      %p170 = scmp.eq.s32.totalorder %s22, 1
      %p171 = por %p169, %p170
      %p173 = scmp.ne.s32.totalorder %s158, %s172
      %p174 = scmp.eq.s32.totalorder %s22, 0
      %p175 = por %p173, %p174
      %s176 = ssub.s32 %s16, %s23
      %p177 = scmp.eq.s32.totalorder %s176, 0
      %s179 = sadd.s32 %s178, 1
      %s180 = scalar_select %p177, %s178, %s179
      %p183 = pneg %p177
      %p184 = scmp.eq.s32.totalorder %s16, 1
      %p185 = por %p183, %p184
      %p186 = scmp.ne.s32.totalorder %s178, %s181
      %p187 = scmp.eq.s32.totalorder %s16, 0
      %p188 = por %p186, %p187
      %p189 = scmp.ne.s32.totalorder %s178, %s181
      %p190 = scmp.eq.s32.totalorder %s21, 1
      %p191 = por %p189, %p190
      %p192 = scmp.ne.s32.totalorder %s181, %s182
      %p193 = scmp.eq.s32.totalorder %s21, 0
      %p194 = por %p192, %p193
      %p195 = scmp.ne.s32.totalorder %s181, %s182
      %p196 = scmp.eq.s32.totalorder %s22, 1
      %p197 = por %p195, %p196
      %p199 = scmp.ne.s32.totalorder %s182, %s198
      %p200 = scmp.eq.s32.totalorder %s22, 0
      %p201 = por %p199, %p200
      %p202 = scmp.le.s32.totalorder 1, %s16
      %p203 = scmp.lt.s32.totalorder %s16, 3
      %p204 = pnand %p202, %p203
      %p205 = pneg %p204
      // Predicated region
      $region9: #{tpu_custom_call.1} parent=5 // pred_check
        _
      $region10: #{tpu_custom_call.1} parent=5 // pred_check_branch
        %207 = sbr.rel (%p204) target = $region12
      $region11: #{tpu_custom_call.1} parent=5 // pred_region
        %s208 = ssub.s32 %s16, 1
        // Predicated region
        $region13: #{tpu_custom_call.1} parent=11 // pred_check
          %p209 = pneg %p63
        $region14: #{tpu_custom_call.1} parent=11 // pred_check_branch
          %211 = sbr.rel (%p209) target = $region16
        $region15: #{tpu_custom_call.1} parent=11 // pred_region
          _
        $region16: #{tpu_custom_call.1} parent=11 // pred_fallthru
          _
        // Predicated region
        $region17: #{tpu_custom_call.1} parent=11 // pred_check
          %p212 = pneg %p84
        $region18: #{tpu_custom_call.1} parent=11 // pred_check_branch
          %214 = sbr.rel (%p212) target = $region20
        $region19: #{tpu_custom_call.1} parent=11 // pred_region
          _
        $region20: #{tpu_custom_call.1} parent=11 // pred_fallthru
          _
        // Predicated region
        $region21: #{tpu_custom_call.1} parent=11 // pred_check
          %p215 = pneg %p105
        $region22: #{tpu_custom_call.1} parent=11 // pred_check_branch
          %217 = sbr.rel (%p215) target = $region24
        $region23: #{tpu_custom_call.1} parent=11 // pred_region
          _
        $region24: #{tpu_custom_call.1} parent=11 // pred_fallthru
          _
        // Predicated region
        $region25: #{tpu_custom_call.1} parent=11 // pred_check
          %p218 = pneg %p126
        $region26: #{tpu_custom_call.1} parent=11 // pred_check_branch
          %220 = sbr.rel (%p218) target = $region28
        $region27: #{tpu_custom_call.1} parent=11 // pred_region
          _
        $region28: #{tpu_custom_call.1} parent=11 // pred_fallthru
          _
        // Predicated region
        $region29: #{tpu_custom_call.1} parent=11 // pred_check
          %p221 = pneg %p147
        $region30: #{tpu_custom_call.1} parent=11 // pred_check_branch
          %223 = sbr.rel (%p221) target = $region32
        $region31: #{tpu_custom_call.1} parent=11 // pred_region
          _
        $region32: #{tpu_custom_call.1} parent=11 // pred_fallthru
          _
        // Predicated region
        $region33: #{tpu_custom_call.1} parent=11 // pred_check
          %p224 = pneg %p168
        $region34: #{tpu_custom_call.1} parent=11 // pred_check_branch
          %226 = sbr.rel (%p224) target = $region36
        $region35: #{tpu_custom_call.1} parent=11 // pred_region
          _
        $region36: #{tpu_custom_call.1} parent=11 // pred_fallthru
          _
      $region12: #{tpu_custom_call.1} parent=5 // pred_fallthru
        _
      %p227 = scmp.lt.s32.totalorder %s16, 2
      // Predicated region
      $region37: #{tpu_custom_call.1} parent=5 // pred_check
        %p228 = pneg %p227
      $region38: #{tpu_custom_call.1} parent=5 // pred_check_branch
        %230 = sbr.rel (%p228) target = $region40
      $region39: #{tpu_custom_call.1} parent=5 // pred_region
        // Predicated region
        $region41: #{tpu_custom_call.1} parent=39 // pred_check
          %p231 = pneg %p36
        $region42: #{tpu_custom_call.1} parent=39 // pred_check_branch
          %233 = sbr.rel (%p231) target = $region44
        $region43: #{tpu_custom_call.1} parent=39 // pred_region
          %s234 = smul.u32 128, %s16
          %p235 = scmp.lt.s32.totalorder %s234, 255
          %s236 = scalar_select %p235, %s234, 255
          %s237 = smul.addr %s236, 4
          %s238 = scalar_lea.vmem %s0, %s237
          %s239 = smul.u32 128, %s16
        $region44: #{tpu_custom_call.1} parent=39 // pred_fallthru
          _
      $region40: #{tpu_custom_call.1} parent=5 // pred_fallthru
        _
      %p240 = scmp.le.s32.totalorder 1, %s16
      %p241 = scmp.lt.s32.totalorder %s16, 3
      %p242 = pnand %p240, %p241
      %p243 = pneg %p242
      // Predicated region
      $region45: #{tpu_custom_call.1} parent=5 // pred_check
        _
      $region46: #{tpu_custom_call.1} parent=5 // pred_check_branch
        %245 = sbr.rel (%p242) target = $region48
      $region47: #{tpu_custom_call.1} parent=5 // pred_region
        %s246 = ssub.s32 %s16, 1
        %s247 = smul.u32 128, %s21
        %p248 = scmp.lt.s32.totalorder %s247, 255
        %s249 = scalar_select %p248, %s247, 255
        %s250 = smul.addr %s249, 4
        %s251 = scalar_lea.vmem %s0, %s250
        %p252 = pneg %p42
        %p253 = pneg %p39
        %p254 = pneg %p63
        %p255 = pneg %p60
        %p256 = pneg %p84
        %p257 = pneg %p81
        %p258 = pneg %p105
        %p259 = pneg %p102
        %p260 = pneg %p126
        %p261 = pneg %p123
        %p262 = pneg %p147
        %p263 = pneg %p144
        %p264 = pneg %p168
        %p265 = pneg %p165
        %p266 = pneg %p194
        %p267 = pneg %p191
        %s268 = sand.u32 %s181, 1
        %s269 = scalar_lea.sflag [#allocation3], %s268
        %s270 = sand.u32 %s181, 1
        %s271 = smul.addr %s270, 64
        %s272 = scalar_lea.vmem [#allocation2], %s271
        %s273 = smul.u32 128, %s21
        %p274 = scmp.lt.s32.totalorder %s273, 255
        %s275 = scalar_select %p274, %s273, 255
        %s276 = smul.addr %s275, 4
        %s277 = scalar_lea.vmem %s0, %s276
        %s278 = smul.u32 128, %s21
        %s279 = smul.u32 8, %s21
        %v281 = vld [vmem:[%s277] sm:$0xf]
        %v282 = vld [vmem:[%s277 + $0x4] sm:$0xf]
        %v283 = vld [vmem:[%s277 + $0x8] sm:$0xf]
        %v284 = vld [vmem:[%s277 + $0xc] sm:$0xf]
        %v285 = vld [vmem:[%s277 + $0x10] sm:$0xf]
        %v286 = vld [vmem:[%s277 + $0x14] sm:$0xf]
        %v287 = vld [vmem:[%s277 + $0x18] sm:$0xf]
        %v288 = vld [vmem:[%s277 + $0x1c] sm:$0xf]
        %v289 = vld [vmem:[%s277 + $0x20] sm:$0xf]
        %v290 = vld [vmem:[%s277 + $0x24] sm:$0xf]
        %v291 = vld [vmem:[%s277 + $0x28] sm:$0xf]
        %v292 = vld [vmem:[%s277 + $0x2c] sm:$0xf]
        %v293 = vld [vmem:[%s277 + $0x30] sm:$0xf]
        %v294 = vld [vmem:[%s277 + $0x34] sm:$0xf]
        %v295 = vld [vmem:[%s277 + $0x38] sm:$0xf]
        %v296 = vld [vmem:[%s277 + $0x3c] sm:$0xf]
        %v297 = vld [vmem:[%s277 + $0x40] sm:$0xf]
        %v298 = vld [vmem:[%s277 + $0x44] sm:$0xf]
        %v299 = vld [vmem:[%s277 + $0x48] sm:$0xf]
        %v300 = vld [vmem:[%s277 + $0x4c] sm:$0xf]
        %v301 = vld [vmem:[%s277 + $0x50] sm:$0xf]
        %v302 = vld [vmem:[%s277 + $0x54] sm:$0xf]
        %v303 = vld [vmem:[%s277 + $0x58] sm:$0xf]
        %v304 = vld [vmem:[%s277 + $0x5c] sm:$0xf]
        %v305 = vld [vmem:[%s277 + $0x60] sm:$0xf]
        %v306 = vld [vmem:[%s277 + $0x64] sm:$0xf]
        %v307 = vld [vmem:[%s277 + $0x68] sm:$0xf]
        %v308 = vld [vmem:[%s277 + $0x6c] sm:$0xf]
        %v309 = vld [vmem:[%s277 + $0x70] sm:$0xf]
        %v310 = vld [vmem:[%s277 + $0x74] sm:$0xf]
        %v311 = vld [vmem:[%s277 + $0x78] sm:$0xf]
        %v312 = vld [vmem:[%s277 + $0x7c] sm:$0xf]
        %v313 = vld [vmem:[%s277 + $0x80] sm:$0xf]
        %v314 = vld [vmem:[%s277 + $0x84] sm:$0xf]
        %v315 = vld [vmem:[%s277 + $0x88] sm:$0xf]
        %v316 = vld [vmem:[%s277 + $0x8c] sm:$0xf]
        %v317 = vld [vmem:[%s277 + $0x90] sm:$0xf]
        %v318 = vld [vmem:[%s277 + $0x94] sm:$0xf]
        %v319 = vld [vmem:[%s277 + $0x98] sm:$0xf]
        %v320 = vld [vmem:[%s277 + $0x9c] sm:$0xf]
        %v321 = vld [vmem:[%s277 + $0xa0] sm:$0xf]
        %v322 = vld [vmem:[%s277 + $0xa4] sm:$0xf]
        %v323 = vld [vmem:[%s277 + $0xa8] sm:$0xf]
        %v324 = vld [vmem:[%s277 + $0xac] sm:$0xf]
        %v325 = vld [vmem:[%s277 + $0xb0] sm:$0xf]
        %v326 = vld [vmem:[%s277 + $0xb4] sm:$0xf]
        %v327 = vld [vmem:[%s277 + $0xb8] sm:$0xf]
        %v328 = vld [vmem:[%s277 + $0xbc] sm:$0xf]
        %v329 = vld [vmem:[%s277 + $0xc0] sm:$0xf]
        %v330 = vld [vmem:[%s277 + $0xc4] sm:$0xf]
        %v331 = vld [vmem:[%s277 + $0xc8] sm:$0xf]
        %v332 = vld [vmem:[%s277 + $0xcc] sm:$0xf]
        %v333 = vld [vmem:[%s277 + $0xd0] sm:$0xf]
        %v334 = vld [vmem:[%s277 + $0xd4] sm:$0xf]
        %v335 = vld [vmem:[%s277 + $0xd8] sm:$0xf]
        %v336 = vld [vmem:[%s277 + $0xdc] sm:$0xf]
        %v337 = vld [vmem:[%s277 + $0xe0] sm:$0xf]
        %v338 = vld [vmem:[%s277 + $0xe4] sm:$0xf]
        %v339 = vld [vmem:[%s277 + $0xe8] sm:$0xf]
        %v340 = vld [vmem:[%s277 + $0xec] sm:$0xf]
        %v341 = vld [vmem:[%s277 + $0xf0] sm:$0xf]
        %v342 = vld [vmem:[%s277 + $0xf4] sm:$0xf]
        %v343 = vld [vmem:[%s277 + $0xf8] sm:$0xf]
        %v344 = vld [vmem:[%s277 + $0xfc] sm:$0xf]
        %v345 = vld [vmem:[%s277 + $0x100] sm:$0xf]
        %v346 = vld [vmem:[%s277 + $0x104] sm:$0xf]
        %v347 = vld [vmem:[%s277 + $0x108] sm:$0xf]
        %v348 = vld [vmem:[%s277 + $0x10c] sm:$0xf]
        %v349 = vld [vmem:[%s277 + $0x110] sm:$0xf]
        %v350 = vld [vmem:[%s277 + $0x114] sm:$0xf]
        %v351 = vld [vmem:[%s277 + $0x118] sm:$0xf]
        %v352 = vld [vmem:[%s277 + $0x11c] sm:$0xf]
        %v353 = vld [vmem:[%s277 + $0x120] sm:$0xf]
        %v354 = vld [vmem:[%s277 + $0x124] sm:$0xf]
        %v355 = vld [vmem:[%s277 + $0x128] sm:$0xf]
        %v356 = vld [vmem:[%s277 + $0x12c] sm:$0xf]
        %v357 = vld [vmem:[%s277 + $0x130] sm:$0xf]
        %v358 = vld [vmem:[%s277 + $0x134] sm:$0xf]
        %v359 = vld [vmem:[%s277 + $0x138] sm:$0xf]
        %v360 = vld [vmem:[%s277 + $0x13c] sm:$0xf]
        %v361 = vld [vmem:[%s277 + $0x140] sm:$0xf]
        %v362 = vld [vmem:[%s277 + $0x144] sm:$0xf]
        %v363 = vld [vmem:[%s277 + $0x148] sm:$0xf]
        %v364 = vld [vmem:[%s277 + $0x14c] sm:$0xf]
        %v365 = vld [vmem:[%s277 + $0x150] sm:$0xf]
        %v366 = vld [vmem:[%s277 + $0x154] sm:$0xf]
        %v367 = vld [vmem:[%s277 + $0x158] sm:$0xf]
        %v368 = vld [vmem:[%s277 + $0x15c] sm:$0xf]
        %v369 = vld [vmem:[%s277 + $0x160] sm:$0xf]
        %v370 = vld [vmem:[%s277 + $0x164] sm:$0xf]
        %v371 = vld [vmem:[%s277 + $0x168] sm:$0xf]
        %v372 = vld [vmem:[%s277 + $0x16c] sm:$0xf]
        %v373 = vld [vmem:[%s277 + $0x170] sm:$0xf]
        %v374 = vld [vmem:[%s277 + $0x174] sm:$0xf]
        %v375 = vld [vmem:[%s277 + $0x178] sm:$0xf]
        %v376 = vld [vmem:[%s277 + $0x17c] sm:$0xf]
        %v377 = vld [vmem:[%s277 + $0x180] sm:$0xf]
        %v378 = vld [vmem:[%s277 + $0x184] sm:$0xf]
        %v379 = vld [vmem:[%s277 + $0x188] sm:$0xf]
        %v380 = vld [vmem:[%s277 + $0x18c] sm:$0xf]
        %v381 = vld [vmem:[%s277 + $0x190] sm:$0xf]
        %v382 = vld [vmem:[%s277 + $0x194] sm:$0xf]
        %v383 = vld [vmem:[%s277 + $0x198] sm:$0xf]
        %v384 = vld [vmem:[%s277 + $0x19c] sm:$0xf]
        %v385 = vld [vmem:[%s277 + $0x1a0] sm:$0xf]
        %v386 = vld [vmem:[%s277 + $0x1a4] sm:$0xf]
        %v387 = vld [vmem:[%s277 + $0x1a8] sm:$0xf]
        %v388 = vld [vmem:[%s277 + $0x1ac] sm:$0xf]
        %v389 = vld [vmem:[%s277 + $0x1b0] sm:$0xf]
        %v390 = vld [vmem:[%s277 + $0x1b4] sm:$0xf]
        %v391 = vld [vmem:[%s277 + $0x1b8] sm:$0xf]
        %v392 = vld [vmem:[%s277 + $0x1bc] sm:$0xf]
        %v393 = vld [vmem:[%s277 + $0x1c0] sm:$0xf]
        %v394 = vld [vmem:[%s277 + $0x1c4] sm:$0xf]
        %v395 = vld [vmem:[%s277 + $0x1c8] sm:$0xf]
        %v396 = vld [vmem:[%s277 + $0x1cc] sm:$0xf]
        %v397 = vld [vmem:[%s277 + $0x1d0] sm:$0xf]
        %v398 = vld [vmem:[%s277 + $0x1d4] sm:$0xf]
        %v399 = vld [vmem:[%s277 + $0x1d8] sm:$0xf]
        %v400 = vld [vmem:[%s277 + $0x1dc] sm:$0xf]
        %v401 = vld [vmem:[%s277 + $0x1e0] sm:$0xf]
        %v402 = vld [vmem:[%s277 + $0x1e4] sm:$0xf]
        %v403 = vld [vmem:[%s277 + $0x1e8] sm:$0xf]
        %v404 = vld [vmem:[%s277 + $0x1ec] sm:$0xf]
        %v405 = vld [vmem:[%s277 + $0x1f0] sm:$0xf]
        %v406 = vld [vmem:[%s277 + $0x1f4] sm:$0xf]
        %v407 = vld [vmem:[%s277 + $0x1f8] sm:$0xf]
        %v408 = vld [vmem:[%s277 + $0x1fc] sm:$0xf]
        %v409 = vld [vmem:[%s1] sm:$0xf]
        %v410 = vld [vmem:[%s2] sm:$0x1]
        %v412 = vlaneseq
        %v413 = vshrl.u32 %v412, 7
        %v414 = vsub.s32 0, %v413
        %v415 = vrot.slane %v410, %v414
        %v545 = vunpack.c.l.b16 %v281
        %v546 = vunpack.c.l.b16 %v282
        %v547 = vunpack.c.l.b16 %v283
        %v548 = vunpack.c.l.b16 %v284
        %v549 = vunpack.c.l.b16 %v285
        %v550 = vunpack.c.l.b16 %v286
        %v551 = vunpack.c.l.b16 %v287
        %v552 = vunpack.c.l.b16 %v288
        %v553 = vunpack.c.l.b16 %v289
        %v554 = vunpack.c.l.b16 %v290
        %v555 = vunpack.c.l.b16 %v291
        %v556 = vunpack.c.l.b16 %v292
        %v557 = vunpack.c.l.b16 %v293
        %v558 = vunpack.c.l.b16 %v294
        %v559 = vunpack.c.l.b16 %v295
        %v560 = vunpack.c.l.b16 %v296
        %v561 = vunpack.c.l.b16 %v297
        %v562 = vunpack.c.l.b16 %v298
        %v563 = vunpack.c.l.b16 %v299
        %v564 = vunpack.c.l.b16 %v300
        %v565 = vunpack.c.l.b16 %v301
        %v566 = vunpack.c.l.b16 %v302
        %v567 = vunpack.c.l.b16 %v303
        %v568 = vunpack.c.l.b16 %v304
        %v569 = vunpack.c.l.b16 %v305
        %v570 = vunpack.c.l.b16 %v306
        %v571 = vunpack.c.l.b16 %v307
        %v572 = vunpack.c.l.b16 %v308
        %v573 = vunpack.c.l.b16 %v309
        %v574 = vunpack.c.l.b16 %v310
        %v575 = vunpack.c.l.b16 %v311
        %v576 = vunpack.c.l.b16 %v312
        %v577 = vunpack.c.l.b16 %v313
        %v578 = vunpack.c.l.b16 %v314
        %v579 = vunpack.c.l.b16 %v315
        %v580 = vunpack.c.l.b16 %v316
        %v581 = vunpack.c.l.b16 %v317
        %v582 = vunpack.c.l.b16 %v318
        %v583 = vunpack.c.l.b16 %v319
        %v584 = vunpack.c.l.b16 %v320
        %v585 = vunpack.c.l.b16 %v321
        %v586 = vunpack.c.l.b16 %v322
        %v587 = vunpack.c.l.b16 %v323
        %v588 = vunpack.c.l.b16 %v324
        %v589 = vunpack.c.l.b16 %v325
        %v590 = vunpack.c.l.b16 %v326
        %v591 = vunpack.c.l.b16 %v327
        %v592 = vunpack.c.l.b16 %v328
        %v593 = vunpack.c.l.b16 %v329
        %v594 = vunpack.c.l.b16 %v330
        %v595 = vunpack.c.l.b16 %v331
        %v596 = vunpack.c.l.b16 %v332
        %v597 = vunpack.c.l.b16 %v333
        %v598 = vunpack.c.l.b16 %v334
        %v599 = vunpack.c.l.b16 %v335
        %v600 = vunpack.c.l.b16 %v336
        %v601 = vunpack.c.l.b16 %v337
        %v602 = vunpack.c.l.b16 %v338
        %v603 = vunpack.c.l.b16 %v339
        %v604 = vunpack.c.l.b16 %v340
        %v605 = vunpack.c.l.b16 %v341
        %v606 = vunpack.c.l.b16 %v342
        %v607 = vunpack.c.l.b16 %v343
        %v608 = vunpack.c.l.b16 %v344
        %v609 = vunpack.c.l.b16 %v345
        %v610 = vunpack.c.l.b16 %v346
        %v611 = vunpack.c.l.b16 %v347
        %v612 = vunpack.c.l.b16 %v348
        %v613 = vunpack.c.l.b16 %v349
        %v614 = vunpack.c.l.b16 %v350
        %v615 = vunpack.c.l.b16 %v351
        %v616 = vunpack.c.l.b16 %v352
        %v617 = vunpack.c.l.b16 %v353
        %v618 = vunpack.c.l.b16 %v354
        %v619 = vunpack.c.l.b16 %v355
        %v620 = vunpack.c.l.b16 %v356
        %v621 = vunpack.c.l.b16 %v357
        %v622 = vunpack.c.l.b16 %v358
        %v623 = vunpack.c.l.b16 %v359
        %v624 = vunpack.c.l.b16 %v360
        %v625 = vunpack.c.l.b16 %v361
        %v626 = vunpack.c.l.b16 %v362
        %v627 = vunpack.c.l.b16 %v363
        %v628 = vunpack.c.l.b16 %v364
        %v629 = vunpack.c.l.b16 %v365
        %v630 = vunpack.c.l.b16 %v366
        %v631 = vunpack.c.l.b16 %v367
        %v632 = vunpack.c.l.b16 %v368
        %v633 = vunpack.c.l.b16 %v369
        %v634 = vunpack.c.l.b16 %v370
        %v635 = vunpack.c.l.b16 %v371
        %v636 = vunpack.c.l.b16 %v372
        %v637 = vunpack.c.l.b16 %v373
        %v638 = vunpack.c.l.b16 %v374
        %v639 = vunpack.c.l.b16 %v375
        %v640 = vunpack.c.l.b16 %v376
        %v641 = vunpack.c.l.b16 %v377
        %v642 = vunpack.c.l.b16 %v378
        %v643 = vunpack.c.l.b16 %v379
        %v644 = vunpack.c.l.b16 %v380
        %v645 = vunpack.c.l.b16 %v381
        %v646 = vunpack.c.l.b16 %v382
        %v647 = vunpack.c.l.b16 %v383
        %v648 = vunpack.c.l.b16 %v384
        %v649 = vunpack.c.l.b16 %v385
        %v650 = vunpack.c.l.b16 %v386
        %v651 = vunpack.c.l.b16 %v387
        %v652 = vunpack.c.l.b16 %v388
        %v653 = vunpack.c.l.b16 %v389
        %v654 = vunpack.c.l.b16 %v390
        %v655 = vunpack.c.l.b16 %v391
        %v656 = vunpack.c.l.b16 %v392
        %v657 = vunpack.c.l.b16 %v393
        %v658 = vunpack.c.l.b16 %v394
        %v659 = vunpack.c.l.b16 %v395
        %v660 = vunpack.c.l.b16 %v396
        %v661 = vunpack.c.l.b16 %v397
        %v662 = vunpack.c.l.b16 %v398
        %v663 = vunpack.c.l.b16 %v399
        %v664 = vunpack.c.l.b16 %v400
        %v665 = vunpack.c.l.b16 %v401
        %v666 = vunpack.c.l.b16 %v402
        %v667 = vunpack.c.l.b16 %v403
        %v668 = vunpack.c.l.b16 %v404
        %v669 = vunpack.c.l.b16 %v405
        %v670 = vunpack.c.l.b16 %v406
        %v671 = vunpack.c.l.b16 %v407
        %v672 = vunpack.c.l.b16 %v408
        %v673 = vpack.c.b16 %v546, %v545
        %v674 = vpack.c.b16 %v548, %v547
        %v675 = vpack.c.b16 %v550, %v549
        %v676 = vpack.c.b16 %v552, %v551
        %v677 = vpack.c.b16 %v554, %v553
        %v678 = vpack.c.b16 %v556, %v555
        %v679 = vpack.c.b16 %v558, %v557
        %v680 = vpack.c.b16 %v560, %v559
        %v681 = vpack.c.b16 %v562, %v561
        %v682 = vpack.c.b16 %v564, %v563
        %v683 = vpack.c.b16 %v566, %v565
        %v684 = vpack.c.b16 %v568, %v567
        %v685 = vpack.c.b16 %v570, %v569
        %v686 = vpack.c.b16 %v572, %v571
        %v687 = vpack.c.b16 %v574, %v573
        %v688 = vpack.c.b16 %v576, %v575
        %v689 = vpack.c.b16 %v578, %v577
        %v690 = vpack.c.b16 %v580, %v579
        %v691 = vpack.c.b16 %v582, %v581
        %v692 = vpack.c.b16 %v584, %v583
        %v693 = vpack.c.b16 %v586, %v585
        %v694 = vpack.c.b16 %v588, %v587
        %v695 = vpack.c.b16 %v590, %v589
        %v696 = vpack.c.b16 %v592, %v591
        %v697 = vpack.c.b16 %v594, %v593
        %v698 = vpack.c.b16 %v596, %v595
        %v699 = vpack.c.b16 %v598, %v597
        %v700 = vpack.c.b16 %v600, %v599
        %v701 = vpack.c.b16 %v602, %v601
        %v702 = vpack.c.b16 %v604, %v603
        %v703 = vpack.c.b16 %v606, %v605
        %v704 = vpack.c.b16 %v608, %v607
        %v705 = vpack.c.b16 %v610, %v609
        %v706 = vpack.c.b16 %v612, %v611
        %v707 = vpack.c.b16 %v614, %v613
        %v708 = vpack.c.b16 %v616, %v615
        %v709 = vpack.c.b16 %v618, %v617
        %v710 = vpack.c.b16 %v620, %v619
        %v711 = vpack.c.b16 %v622, %v621
        %v712 = vpack.c.b16 %v624, %v623
        %v713 = vpack.c.b16 %v626, %v625
        %v714 = vpack.c.b16 %v628, %v627
        %v715 = vpack.c.b16 %v630, %v629
        %v716 = vpack.c.b16 %v632, %v631
        %v717 = vpack.c.b16 %v634, %v633
        %v718 = vpack.c.b16 %v636, %v635
        %v719 = vpack.c.b16 %v638, %v637
        %v720 = vpack.c.b16 %v640, %v639
        %v721 = vpack.c.b16 %v642, %v641
        %v722 = vpack.c.b16 %v644, %v643
        %v723 = vpack.c.b16 %v646, %v645
        %v724 = vpack.c.b16 %v648, %v647
        %v725 = vpack.c.b16 %v650, %v649
        %v726 = vpack.c.b16 %v652, %v651
        %v727 = vpack.c.b16 %v654, %v653
        %v728 = vpack.c.b16 %v656, %v655
        %v729 = vpack.c.b16 %v658, %v657
        %v730 = vpack.c.b16 %v660, %v659
        %v731 = vpack.c.b16 %v662, %v661
        %v732 = vpack.c.b16 %v664, %v663
        %v733 = vpack.c.b16 %v666, %v665
        %v734 = vpack.c.b16 %v668, %v667
        %v735 = vpack.c.b16 %v670, %v669
        %v736 = vpack.c.b16 %v672, %v671
        %vm737 = vcmask 64512
        %v739 = vsel %vm737, %v673, 0
        %v742 = vsel %vm737, %v674, 0
        %v745 = vsel %vm737, %v675, 0
        %v748 = vsel %vm737, %v676, 0
        %v751 = vsel %vm737, %v677, 0
        %v754 = vsel %vm737, %v678, 0
        %v757 = vsel %vm737, %v679, 0
        %v760 = vsel %vm737, %v680, 0
        %v763 = vsel %vm737, %v681, 0
        %v766 = vsel %vm737, %v682, 0
        %v769 = vsel %vm737, %v683, 0
        %v772 = vsel %vm737, %v684, 0
        %v775 = vsel %vm737, %v685, 0
        %v778 = vsel %vm737, %v686, 0
        %v781 = vsel %vm737, %v687, 0
        %v784 = vsel %vm737, %v688, 0
        %v787 = vsel %vm737, %v689, 0
        %v790 = vsel %vm737, %v690, 0
        %v793 = vsel %vm737, %v691, 0
        %v796 = vsel %vm737, %v692, 0
        %v799 = vsel %vm737, %v693, 0
        %v802 = vsel %vm737, %v694, 0
        %v805 = vsel %vm737, %v695, 0
        %v808 = vsel %vm737, %v696, 0
        %v811 = vsel %vm737, %v697, 0
        %v814 = vsel %vm737, %v698, 0
        %v817 = vsel %vm737, %v699, 0
        %v820 = vsel %vm737, %v700, 0
        %v823 = vsel %vm737, %v701, 0
        %v826 = vsel %vm737, %v702, 0
        %v829 = vsel %vm737, %v703, 0
        %v832 = vsel %vm737, %v704, 0
        %v835 = vsel %vm737, %v705, 0
        %v838 = vsel %vm737, %v706, 0
        %v841 = vsel %vm737, %v707, 0
        %v844 = vsel %vm737, %v708, 0
        %v847 = vsel %vm737, %v709, 0
        %v850 = vsel %vm737, %v710, 0
        %v853 = vsel %vm737, %v711, 0
        %v856 = vsel %vm737, %v712, 0
        %v859 = vsel %vm737, %v713, 0
        %v862 = vsel %vm737, %v714, 0
        %v865 = vsel %vm737, %v715, 0
        %v868 = vsel %vm737, %v716, 0
        %v871 = vsel %vm737, %v717, 0
        %v874 = vsel %vm737, %v718, 0
        %v877 = vsel %vm737, %v719, 0
        %v880 = vsel %vm737, %v720, 0
        %v883 = vsel %vm737, %v721, 0
        %v886 = vsel %vm737, %v722, 0
        %v889 = vsel %vm737, %v723, 0
        %v892 = vsel %vm737, %v724, 0
        %v895 = vsel %vm737, %v725, 0
        %v898 = vsel %vm737, %v726, 0
        %v901 = vsel %vm737, %v727, 0
        %v904 = vsel %vm737, %v728, 0
        %v907 = vsel %vm737, %v729, 0
        %v910 = vsel %vm737, %v730, 0
        %v913 = vsel %vm737, %v731, 0
        %v916 = vsel %vm737, %v732, 0
        %v919 = vsel %vm737, %v733, 0
        %v922 = vsel %vm737, %v734, 0
        %v925 = vsel %vm737, %v735, 0
        %v928 = vsel %vm737, %v736, 0
        %vm930 = vcmask 1043456
        %v932 = vsel %vm930, %v409, 0
        %934 = vmatprep.subr.bf16.mxu0 0
        %935 = vmatpush1.bf16.msra.mxu0 0
        %936 = vmatprep.subr.bf16.mxu0 0
        %937 = vmatpush1.bf16.msra.mxu0 0
        %938 = vmatprep.subr.bf16.mxu0 0
        %939 = vmatpush1.bf16.msra.mxu0 0
        %940 = vmatprep.subr.bf16.mxu0 0
        %941 = vmatpush1.bf16.msra.mxu0 0
        %942 = vmatprep.subr.bf16.mxu0 0
        %943 = vmatpush1.bf16.msra.mxu0 0
        %944 = vmatprep.subr.bf16.mxu0 0
        %945 = vmatpush1.bf16.msra.mxu0 0
        %946 = vmatprep.subr.bf16.mxu0 0
        %947 = vmatpush1.bf16.msra.mxu0 0
        %948 = vmatprep.subr.bf16.mxu0 0
        %949 = vmatpush1.bf16.msra.mxu0 %v932
        %950 = vmatprep.subr.bf16.mxu0 0
        %951 = vmatpush2.bf16.msra.mxu0 0
        %952 = vmatprep.subr.bf16.mxu0 0
        %953 = vmatpush2.bf16.msra.mxu0 0
        %954 = vmatprep.subr.bf16.mxu0 0
        %955 = vmatpush2.bf16.msra.mxu0 0
        %956 = vmatprep.subr.bf16.mxu0 0
        %957 = vmatpush2.bf16.msra.mxu0 0
        %958 = vmatprep.subr.bf16.mxu0 0
        %959 = vmatpush2.bf16.msra.mxu0 0
        %960 = vmatprep.subr.bf16.mxu0 0
        %961 = vmatpush2.bf16.msra.mxu0 0
        %962 = vmatprep.subr.bf16.mxu0 0
        %963 = vmatpush2.bf16.msra.mxu0 0
        %964 = vmatprep.subr.bf16.mxu0 0
        %965 = vmatpush2.bf16.msra.mxu0 0
        %966 = vmatprep.mubr.bf16.mxu0 0
        %967 = vmatmul.mubr.bf16.gmra.mxu0 %v739
        %v968 = vpop.f32.mrf.mxu0
        %v969 = vadd.f32 %v415, %v968
        %v970 = vpop.f32.mrf.mxu0
        %v971 = vpop.f32.mrf.mxu0
        %v972 = vadd.f32 %v415, %v971
        %v973 = vpop.f32.mrf.mxu0
        %974 = vmatprep.mubr.bf16.mxu0 0
        %975 = vmatmul.mubr.bf16.gmra.mxu0 %v742
        %v976 = vpop.f32.mrf.mxu0
        %v977 = vadd.f32 %v415, %v976
        %v978 = vpop.f32.mrf.mxu0
        %v979 = vpop.f32.mrf.mxu0
        %v980 = vadd.f32 %v415, %v979
        %v981 = vpop.f32.mrf.mxu0
        %982 = vmatprep.mubr.bf16.mxu0 0
        %983 = vmatmul.mubr.bf16.gmra.mxu0 %v745
        %v984 = vpop.f32.mrf.mxu0
        %v985 = vadd.f32 %v415, %v984
        %v986 = vpop.f32.mrf.mxu0
        %v987 = vpop.f32.mrf.mxu0
        %v988 = vadd.f32 %v415, %v987
        %v989 = vpop.f32.mrf.mxu0
        %990 = vmatprep.mubr.bf16.mxu0 0
        %991 = vmatmul.mubr.bf16.gmra.mxu0 %v748
        %v992 = vpop.f32.mrf.mxu0
        %v993 = vadd.f32 %v415, %v992
        %v994 = vpop.f32.mrf.mxu0
        %v995 = vpop.f32.mrf.mxu0
        %v996 = vadd.f32 %v415, %v995
        %v997 = vpop.f32.mrf.mxu0
        %998 = vmatprep.mubr.bf16.mxu0 0
        %999 = vmatmul.mubr.bf16.gmra.mxu0 %v751
        %v1000 = vpop.f32.mrf.mxu0
        %v1001 = vadd.f32 %v415, %v1000
        %v1002 = vpop.f32.mrf.mxu0
        %v1003 = vpop.f32.mrf.mxu0
        %v1004 = vadd.f32 %v415, %v1003
        %v1005 = vpop.f32.mrf.mxu0
        %1006 = vmatprep.mubr.bf16.mxu0 0
        %1007 = vmatmul.mubr.bf16.gmra.mxu0 %v754
        %v1008 = vpop.f32.mrf.mxu0
        %v1009 = vadd.f32 %v415, %v1008
        %v1010 = vpop.f32.mrf.mxu0
        %v1011 = vpop.f32.mrf.mxu0
        %v1012 = vadd.f32 %v415, %v1011
        %v1013 = vpop.f32.mrf.mxu0
        %1014 = vmatprep.mubr.bf16.mxu0 0
        %1015 = vmatmul.mubr.bf16.gmra.mxu0 %v757
        %v1016 = vpop.f32.mrf.mxu0
        %v1017 = vadd.f32 %v415, %v1016
        %v1018 = vpop.f32.mrf.mxu0
        %v1019 = vpop.f32.mrf.mxu0
        %v1020 = vadd.f32 %v415, %v1019
        %v1021 = vpop.f32.mrf.mxu0
        %1022 = vmatprep.mubr.bf16.mxu0 0
        %1023 = vmatmul.mubr.bf16.gmra.mxu0 %v760
        %v1024 = vpop.f32.mrf.mxu0
        %v1025 = vadd.f32 %v415, %v1024
        %v1026 = vpop.f32.mrf.mxu0
        %v1027 = vpop.f32.mrf.mxu0
        %v1028 = vadd.f32 %v415, %v1027
        %v1029 = vpop.f32.mrf.mxu0
        %1030 = vmatprep.mubr.bf16.mxu0 0
        %1031 = vmatmul.mubr.bf16.gmra.mxu0 %v763
        %v1032 = vpop.f32.mrf.mxu0
        %v1033 = vadd.f32 %v415, %v1032
        %v1034 = vpop.f32.mrf.mxu0
        %v1035 = vpop.f32.mrf.mxu0
        %v1036 = vadd.f32 %v415, %v1035
        %v1037 = vpop.f32.mrf.mxu0
        %1038 = vmatprep.mubr.bf16.mxu0 0
        %1039 = vmatmul.mubr.bf16.gmra.mxu0 %v766
        %v1040 = vpop.f32.mrf.mxu0
        %v1041 = vadd.f32 %v415, %v1040
        %v1042 = vpop.f32.mrf.mxu0
        %v1043 = vpop.f32.mrf.mxu0
        %v1044 = vadd.f32 %v415, %v1043
        %v1045 = vpop.f32.mrf.mxu0
        %1046 = vmatprep.mubr.bf16.mxu0 0
        %1047 = vmatmul.mubr.bf16.gmra.mxu0 %v769
        %v1048 = vpop.f32.mrf.mxu0
        %v1049 = vadd.f32 %v415, %v1048
        %v1050 = vpop.f32.mrf.mxu0
        %v1051 = vpop.f32.mrf.mxu0
        %v1052 = vadd.f32 %v415, %v1051
        %v1053 = vpop.f32.mrf.mxu0
        %1054 = vmatprep.mubr.bf16.mxu0 0
        %1055 = vmatmul.mubr.bf16.gmra.mxu0 %v772
        %v1056 = vpop.f32.mrf.mxu0
        %v1057 = vadd.f32 %v415, %v1056
        %v1058 = vpop.f32.mrf.mxu0
        %v1059 = vpop.f32.mrf.mxu0
        %v1060 = vadd.f32 %v415, %v1059
        %v1061 = vpop.f32.mrf.mxu0
        %1062 = vmatprep.mubr.bf16.mxu0 0
        %1063 = vmatmul.mubr.bf16.gmra.mxu0 %v775
        %v1064 = vpop.f32.mrf.mxu0
        %v1065 = vadd.f32 %v415, %v1064
        %v1066 = vpop.f32.mrf.mxu0
        %v1067 = vpop.f32.mrf.mxu0
        %v1068 = vadd.f32 %v415, %v1067
        %v1069 = vpop.f32.mrf.mxu0
        %1070 = vmatprep.mubr.bf16.mxu0 0
        %1071 = vmatmul.mubr.bf16.gmra.mxu0 %v778
        %v1072 = vpop.f32.mrf.mxu0
        %v1073 = vadd.f32 %v415, %v1072
        %v1074 = vpop.f32.mrf.mxu0
        %v1075 = vpop.f32.mrf.mxu0
        %v1076 = vadd.f32 %v415, %v1075
        %v1077 = vpop.f32.mrf.mxu0
        %1078 = vmatprep.mubr.bf16.mxu0 0
        %1079 = vmatmul.mubr.bf16.gmra.mxu0 %v781
        %v1080 = vpop.f32.mrf.mxu0
        %v1081 = vadd.f32 %v415, %v1080
        %v1082 = vpop.f32.mrf.mxu0
        %v1083 = vpop.f32.mrf.mxu0
        %v1084 = vadd.f32 %v415, %v1083
        %v1085 = vpop.f32.mrf.mxu0
        %1086 = vmatprep.mubr.bf16.mxu0 0
        %1087 = vmatmul.mubr.bf16.gmra.mxu0 %v784
        %v1088 = vpop.f32.mrf.mxu0
        %v1089 = vadd.f32 %v415, %v1088
        %v1090 = vpop.f32.mrf.mxu0
        %v1091 = vpop.f32.mrf.mxu0
        %v1092 = vadd.f32 %v415, %v1091
        %v1093 = vpop.f32.mrf.mxu0
        %1094 = vmatprep.mubr.bf16.mxu0 0
        %1095 = vmatmul.mubr.bf16.gmra.mxu0 %v787
        %v1096 = vpop.f32.mrf.mxu0
        %v1097 = vadd.f32 %v415, %v1096
        %v1098 = vpop.f32.mrf.mxu0
        %v1099 = vpop.f32.mrf.mxu0
        %v1100 = vadd.f32 %v415, %v1099
        %v1101 = vpop.f32.mrf.mxu0
        %1102 = vmatprep.mubr.bf16.mxu0 0
        %1103 = vmatmul.mubr.bf16.gmra.mxu0 %v790
        %v1104 = vpop.f32.mrf.mxu0
        %v1105 = vadd.f32 %v415, %v1104
        %v1106 = vpop.f32.mrf.mxu0
        %v1107 = vpop.f32.mrf.mxu0
        %v1108 = vadd.f32 %v415, %v1107
        %v1109 = vpop.f32.mrf.mxu0
        %1110 = vmatprep.mubr.bf16.mxu0 0
        %1111 = vmatmul.mubr.bf16.gmra.mxu0 %v793
        %v1112 = vpop.f32.mrf.mxu0
        %v1113 = vadd.f32 %v415, %v1112
        %v1114 = vpop.f32.mrf.mxu0
        %v1115 = vpop.f32.mrf.mxu0
        %v1116 = vadd.f32 %v415, %v1115
        %v1117 = vpop.f32.mrf.mxu0
        %1118 = vmatprep.mubr.bf16.mxu0 0
        %1119 = vmatmul.mubr.bf16.gmra.mxu0 %v796
        %v1120 = vpop.f32.mrf.mxu0
        %v1121 = vadd.f32 %v415, %v1120
        %v1122 = vpop.f32.mrf.mxu0
        %v1123 = vpop.f32.mrf.mxu0
        %v1124 = vadd.f32 %v415, %v1123
        %v1125 = vpop.f32.mrf.mxu0
        %1126 = vmatprep.mubr.bf16.mxu0 0
        %1127 = vmatmul.mubr.bf16.gmra.mxu0 %v799
        %v1128 = vpop.f32.mrf.mxu0
        %v1129 = vadd.f32 %v415, %v1128
        %v1130 = vpop.f32.mrf.mxu0
        %v1131 = vpop.f32.mrf.mxu0
        %v1132 = vadd.f32 %v415, %v1131
        %v1133 = vpop.f32.mrf.mxu0
        %1134 = vmatprep.mubr.bf16.mxu0 0
        %1135 = vmatmul.mubr.bf16.gmra.mxu0 %v802
        %v1136 = vpop.f32.mrf.mxu0
        %v1137 = vadd.f32 %v415, %v1136
        %v1138 = vpop.f32.mrf.mxu0
        %v1139 = vpop.f32.mrf.mxu0
        %v1140 = vadd.f32 %v415, %v1139
        %v1141 = vpop.f32.mrf.mxu0
        %1142 = vmatprep.mubr.bf16.mxu0 0
        %1143 = vmatmul.mubr.bf16.gmra.mxu0 %v805
        %v1144 = vpop.f32.mrf.mxu0
        %v1145 = vadd.f32 %v415, %v1144
        %v1146 = vpop.f32.mrf.mxu0
        %v1147 = vpop.f32.mrf.mxu0
        %v1148 = vadd.f32 %v415, %v1147
        %v1149 = vpop.f32.mrf.mxu0
        %1150 = vmatprep.mubr.bf16.mxu0 0
        %1151 = vmatmul.mubr.bf16.gmra.mxu0 %v808
        %v1152 = vpop.f32.mrf.mxu0
        %v1153 = vadd.f32 %v415, %v1152
        %v1154 = vpop.f32.mrf.mxu0
        %v1155 = vpop.f32.mrf.mxu0
        %v1156 = vadd.f32 %v415, %v1155
        %v1157 = vpop.f32.mrf.mxu0
        %1158 = vmatprep.mubr.bf16.mxu0 0
        %1159 = vmatmul.mubr.bf16.gmra.mxu0 %v811
        %v1160 = vpop.f32.mrf.mxu0
        %v1161 = vadd.f32 %v415, %v1160
        %v1162 = vpop.f32.mrf.mxu0
        %v1163 = vpop.f32.mrf.mxu0
        %v1164 = vadd.f32 %v415, %v1163
        %v1165 = vpop.f32.mrf.mxu0
        %1166 = vmatprep.mubr.bf16.mxu0 0
        %1167 = vmatmul.mubr.bf16.gmra.mxu0 %v814
        %v1168 = vpop.f32.mrf.mxu0
        %v1169 = vadd.f32 %v415, %v1168
        %v1170 = vpop.f32.mrf.mxu0
        %v1171 = vpop.f32.mrf.mxu0
        %v1172 = vadd.f32 %v415, %v1171
        %v1173 = vpop.f32.mrf.mxu0
        %1174 = vmatprep.mubr.bf16.mxu0 0
        %1175 = vmatmul.mubr.bf16.gmra.mxu0 %v817
        %v1176 = vpop.f32.mrf.mxu0
        %v1177 = vadd.f32 %v415, %v1176
        %v1178 = vpop.f32.mrf.mxu0
        %v1179 = vpop.f32.mrf.mxu0
        %v1180 = vadd.f32 %v415, %v1179
        %v1181 = vpop.f32.mrf.mxu0
        %1182 = vmatprep.mubr.bf16.mxu0 0
        %1183 = vmatmul.mubr.bf16.gmra.mxu0 %v820
        %v1184 = vpop.f32.mrf.mxu0
        %v1185 = vadd.f32 %v415, %v1184
        %v1186 = vpop.f32.mrf.mxu0
        %v1187 = vpop.f32.mrf.mxu0
        %v1188 = vadd.f32 %v415, %v1187
        %v1189 = vpop.f32.mrf.mxu0
        %1190 = vmatprep.mubr.bf16.mxu0 0
        %1191 = vmatmul.mubr.bf16.gmra.mxu0 %v823
        %v1192 = vpop.f32.mrf.mxu0
        %v1193 = vadd.f32 %v415, %v1192
        %v1194 = vpop.f32.mrf.mxu0
        %v1195 = vpop.f32.mrf.mxu0
        %v1196 = vadd.f32 %v415, %v1195
        %v1197 = vpop.f32.mrf.mxu0
        %1198 = vmatprep.mubr.bf16.mxu0 0
        %1199 = vmatmul.mubr.bf16.gmra.mxu0 %v826
        %v1200 = vpop.f32.mrf.mxu0
        %v1201 = vadd.f32 %v415, %v1200
        %v1202 = vpop.f32.mrf.mxu0
        %v1203 = vpop.f32.mrf.mxu0
        %v1204 = vadd.f32 %v415, %v1203
        %v1205 = vpop.f32.mrf.mxu0
        %1206 = vmatprep.mubr.bf16.mxu0 0
        %1207 = vmatmul.mubr.bf16.gmra.mxu0 %v829
        %v1208 = vpop.f32.mrf.mxu0
        %v1209 = vadd.f32 %v415, %v1208
        %v1210 = vpop.f32.mrf.mxu0
        %v1211 = vpop.f32.mrf.mxu0
        %v1212 = vadd.f32 %v415, %v1211
        %v1213 = vpop.f32.mrf.mxu0
        %1214 = vmatprep.mubr.bf16.mxu0 0
        %1215 = vmatmul.mubr.bf16.gmra.mxu0 %v832
        %v1216 = vpop.f32.mrf.mxu0
        %v1217 = vadd.f32 %v415, %v1216
        %v1218 = vpop.f32.mrf.mxu0
        %v1219 = vpop.f32.mrf.mxu0
        %v1220 = vadd.f32 %v415, %v1219
        %v1221 = vpop.f32.mrf.mxu0
        %1222 = vmatprep.mubr.bf16.mxu0 0
        %1223 = vmatmul.mubr.bf16.gmra.mxu0 %v835
        %v1224 = vpop.f32.mrf.mxu0
        %v1225 = vadd.f32 %v415, %v1224
        %v1226 = vpop.f32.mrf.mxu0
        %v1227 = vpop.f32.mrf.mxu0
        %v1228 = vadd.f32 %v415, %v1227
        %v1229 = vpop.f32.mrf.mxu0
        %1230 = vmatprep.mubr.bf16.mxu0 0
        %1231 = vmatmul.mubr.bf16.gmra.mxu0 %v838
        %v1232 = vpop.f32.mrf.mxu0
        %v1233 = vadd.f32 %v415, %v1232
        %v1234 = vpop.f32.mrf.mxu0
        %v1235 = vpop.f32.mrf.mxu0
        %v1236 = vadd.f32 %v415, %v1235
        %v1237 = vpop.f32.mrf.mxu0
        %1238 = vmatprep.mubr.bf16.mxu0 0
        %1239 = vmatmul.mubr.bf16.gmra.mxu0 %v841
        %v1240 = vpop.f32.mrf.mxu0
        %v1241 = vadd.f32 %v415, %v1240
        %v1242 = vpop.f32.mrf.mxu0
        %v1243 = vpop.f32.mrf.mxu0
        %v1244 = vadd.f32 %v415, %v1243
        %v1245 = vpop.f32.mrf.mxu0
        %1246 = vmatprep.mubr.bf16.mxu0 0
        %1247 = vmatmul.mubr.bf16.gmra.mxu0 %v844
        %v1248 = vpop.f32.mrf.mxu0
        %v1249 = vadd.f32 %v415, %v1248
        %v1250 = vpop.f32.mrf.mxu0
        %v1251 = vpop.f32.mrf.mxu0
        %v1252 = vadd.f32 %v415, %v1251
        %v1253 = vpop.f32.mrf.mxu0
        %1254 = vmatprep.mubr.bf16.mxu0 0
        %1255 = vmatmul.mubr.bf16.gmra.mxu0 %v847
        %v1256 = vpop.f32.mrf.mxu0
        %v1257 = vadd.f32 %v415, %v1256
        %v1258 = vpop.f32.mrf.mxu0
        %v1259 = vpop.f32.mrf.mxu0
        %v1260 = vadd.f32 %v415, %v1259
        %v1261 = vpop.f32.mrf.mxu0
        %1262 = vmatprep.mubr.bf16.mxu0 0
        %1263 = vmatmul.mubr.bf16.gmra.mxu0 %v850
        %v1264 = vpop.f32.mrf.mxu0
        %v1265 = vadd.f32 %v415, %v1264
        %v1266 = vpop.f32.mrf.mxu0
        %v1267 = vpop.f32.mrf.mxu0
        %v1268 = vadd.f32 %v415, %v1267
        %v1269 = vpop.f32.mrf.mxu0
        %1270 = vmatprep.mubr.bf16.mxu0 0
        %1271 = vmatmul.mubr.bf16.gmra.mxu0 %v853
        %v1272 = vpop.f32.mrf.mxu0
        %v1273 = vadd.f32 %v415, %v1272
        %v1274 = vpop.f32.mrf.mxu0
        %v1275 = vpop.f32.mrf.mxu0
        %v1276 = vadd.f32 %v415, %v1275
        %v1277 = vpop.f32.mrf.mxu0
        %1278 = vmatprep.mubr.bf16.mxu0 0
        %1279 = vmatmul.mubr.bf16.gmra.mxu0 %v856
        %v1280 = vpop.f32.mrf.mxu0
        %v1281 = vadd.f32 %v415, %v1280
        %v1282 = vpop.f32.mrf.mxu0
        %v1283 = vpop.f32.mrf.mxu0
        %v1284 = vadd.f32 %v415, %v1283
        %v1285 = vpop.f32.mrf.mxu0
        %1286 = vmatprep.mubr.bf16.mxu0 0
        %1287 = vmatmul.mubr.bf16.gmra.mxu0 %v859
        %v1288 = vpop.f32.mrf.mxu0
        %v1289 = vadd.f32 %v415, %v1288
        %v1290 = vpop.f32.mrf.mxu0
        %v1291 = vpop.f32.mrf.mxu0
        %v1292 = vadd.f32 %v415, %v1291
        %v1293 = vpop.f32.mrf.mxu0
        %1294 = vmatprep.mubr.bf16.mxu0 0
        %1295 = vmatmul.mubr.bf16.gmra.mxu0 %v862
        %v1296 = vpop.f32.mrf.mxu0
        %v1297 = vadd.f32 %v415, %v1296
        %v1298 = vpop.f32.mrf.mxu0
        %v1299 = vpop.f32.mrf.mxu0
        %v1300 = vadd.f32 %v415, %v1299
        %v1301 = vpop.f32.mrf.mxu0
        %1302 = vmatprep.mubr.bf16.mxu0 0
        %1303 = vmatmul.mubr.bf16.gmra.mxu0 %v865
        %v1304 = vpop.f32.mrf.mxu0
        %v1305 = vadd.f32 %v415, %v1304
        %v1306 = vpop.f32.mrf.mxu0
        %v1307 = vpop.f32.mrf.mxu0
        %v1308 = vadd.f32 %v415, %v1307
        %v1309 = vpop.f32.mrf.mxu0
        %1310 = vmatprep.mubr.bf16.mxu0 0
        %1311 = vmatmul.mubr.bf16.gmra.mxu0 %v868
        %v1312 = vpop.f32.mrf.mxu0
        %v1313 = vadd.f32 %v415, %v1312
        %v1314 = vpop.f32.mrf.mxu0
        %v1315 = vpop.f32.mrf.mxu0
        %v1316 = vadd.f32 %v415, %v1315
        %v1317 = vpop.f32.mrf.mxu0
        %1318 = vmatprep.mubr.bf16.mxu0 0
        %1319 = vmatmul.mubr.bf16.gmra.mxu0 %v871
        %v1320 = vpop.f32.mrf.mxu0
        %v1321 = vadd.f32 %v415, %v1320
        %v1322 = vpop.f32.mrf.mxu0
        %v1323 = vpop.f32.mrf.mxu0
        %v1324 = vadd.f32 %v415, %v1323
        %v1325 = vpop.f32.mrf.mxu0
        %1326 = vmatprep.mubr.bf16.mxu0 0
        %1327 = vmatmul.mubr.bf16.gmra.mxu0 %v874
        %v1328 = vpop.f32.mrf.mxu0
        %v1329 = vadd.f32 %v415, %v1328
        %v1330 = vpop.f32.mrf.mxu0
        %v1331 = vpop.f32.mrf.mxu0
        %v1332 = vadd.f32 %v415, %v1331
        %v1333 = vpop.f32.mrf.mxu0
        %1334 = vmatprep.mubr.bf16.mxu0 0
        %1335 = vmatmul.mubr.bf16.gmra.mxu0 %v877
        %v1336 = vpop.f32.mrf.mxu0
        %v1337 = vadd.f32 %v415, %v1336
        %v1338 = vpop.f32.mrf.mxu0
        %v1339 = vpop.f32.mrf.mxu0
        %v1340 = vadd.f32 %v415, %v1339
        %v1341 = vpop.f32.mrf.mxu0
        %1342 = vmatprep.mubr.bf16.mxu0 0
        %1343 = vmatmul.mubr.bf16.gmra.mxu0 %v880
        %v1344 = vpop.f32.mrf.mxu0
        %v1345 = vadd.f32 %v415, %v1344
        %v1346 = vpop.f32.mrf.mxu0
        %v1347 = vpop.f32.mrf.mxu0
        %v1348 = vadd.f32 %v415, %v1347
        %v1349 = vpop.f32.mrf.mxu0
        %1350 = vmatprep.mubr.bf16.mxu0 0
        %1351 = vmatmul.mubr.bf16.gmra.mxu0 %v883
        %v1352 = vpop.f32.mrf.mxu0
        %v1353 = vadd.f32 %v415, %v1352
        %v1354 = vpop.f32.mrf.mxu0
        %v1355 = vpop.f32.mrf.mxu0
        %v1356 = vadd.f32 %v415, %v1355
        %v1357 = vpop.f32.mrf.mxu0
        %1358 = vmatprep.mubr.bf16.mxu0 0
        %1359 = vmatmul.mubr.bf16.gmra.mxu0 %v886
        %v1360 = vpop.f32.mrf.mxu0
        %v1361 = vadd.f32 %v415, %v1360
        %v1362 = vpop.f32.mrf.mxu0
        %v1363 = vpop.f32.mrf.mxu0
        %v1364 = vadd.f32 %v415, %v1363
        %v1365 = vpop.f32.mrf.mxu0
        %1366 = vmatprep.mubr.bf16.mxu0 0
        %1367 = vmatmul.mubr.bf16.gmra.mxu0 %v889
        %v1368 = vpop.f32.mrf.mxu0
        %v1369 = vadd.f32 %v415, %v1368
        %v1370 = vpop.f32.mrf.mxu0
        %v1371 = vpop.f32.mrf.mxu0
        %v1372 = vadd.f32 %v415, %v1371
        %v1373 = vpop.f32.mrf.mxu0
        %1374 = vmatprep.mubr.bf16.mxu0 0
        %1375 = vmatmul.mubr.bf16.gmra.mxu0 %v892
        %v1376 = vpop.f32.mrf.mxu0
        %v1377 = vadd.f32 %v415, %v1376
        %v1378 = vpop.f32.mrf.mxu0
        %v1379 = vpop.f32.mrf.mxu0
        %v1380 = vadd.f32 %v415, %v1379
        %v1381 = vpop.f32.mrf.mxu0
        %1382 = vmatprep.mubr.bf16.mxu0 0
        %1383 = vmatmul.mubr.bf16.gmra.mxu0 %v895
        %v1384 = vpop.f32.mrf.mxu0
        %v1385 = vadd.f32 %v415, %v1384
        %v1386 = vpop.f32.mrf.mxu0
        %v1387 = vpop.f32.mrf.mxu0
        %v1388 = vadd.f32 %v415, %v1387
        %v1389 = vpop.f32.mrf.mxu0
        %1390 = vmatprep.mubr.bf16.mxu0 0
        %1391 = vmatmul.mubr.bf16.gmra.mxu0 %v898
        %v1392 = vpop.f32.mrf.mxu0
        %v1393 = vadd.f32 %v415, %v1392
        %v1394 = vpop.f32.mrf.mxu0
        %v1395 = vpop.f32.mrf.mxu0
        %v1396 = vadd.f32 %v415, %v1395
        %v1397 = vpop.f32.mrf.mxu0
        %1398 = vmatprep.mubr.bf16.mxu0 0
        %1399 = vmatmul.mubr.bf16.gmra.mxu0 %v901
        %v1400 = vpop.f32.mrf.mxu0
        %v1401 = vadd.f32 %v415, %v1400
        %v1402 = vpop.f32.mrf.mxu0
        %v1403 = vpop.f32.mrf.mxu0
        %v1404 = vadd.f32 %v415, %v1403
        %v1405 = vpop.f32.mrf.mxu0
        %1406 = vmatprep.mubr.bf16.mxu0 0
        %1407 = vmatmul.mubr.bf16.gmra.mxu0 %v904
        %v1408 = vpop.f32.mrf.mxu0
        %v1409 = vadd.f32 %v415, %v1408
        %v1410 = vpop.f32.mrf.mxu0
        %v1411 = vpop.f32.mrf.mxu0
        %v1412 = vadd.f32 %v415, %v1411
        %v1413 = vpop.f32.mrf.mxu0
        %1414 = vmatprep.mubr.bf16.mxu0 0
        %1415 = vmatmul.mubr.bf16.gmra.mxu0 %v907
        %v1416 = vpop.f32.mrf.mxu0
        %v1417 = vadd.f32 %v415, %v1416
        %v1418 = vpop.f32.mrf.mxu0
        %v1419 = vpop.f32.mrf.mxu0
        %v1420 = vadd.f32 %v415, %v1419
        %v1421 = vpop.f32.mrf.mxu0
        %1422 = vmatprep.mubr.bf16.mxu0 0
        %1423 = vmatmul.mubr.bf16.gmra.mxu0 %v910
        %v1424 = vpop.f32.mrf.mxu0
        %v1425 = vadd.f32 %v415, %v1424
        %v1426 = vpop.f32.mrf.mxu0
        %v1427 = vpop.f32.mrf.mxu0
        %v1428 = vadd.f32 %v415, %v1427
        %v1429 = vpop.f32.mrf.mxu0
        %1430 = vmatprep.mubr.bf16.mxu0 0
        %1431 = vmatmul.mubr.bf16.gmra.mxu0 %v913
        %v1432 = vpop.f32.mrf.mxu0
        %v1433 = vadd.f32 %v415, %v1432
        %v1434 = vpop.f32.mrf.mxu0
        %v1435 = vpop.f32.mrf.mxu0
        %v1436 = vadd.f32 %v415, %v1435
        %v1437 = vpop.f32.mrf.mxu0
        %1438 = vmatprep.mubr.bf16.mxu0 0
        %1439 = vmatmul.mubr.bf16.gmra.mxu0 %v916
        %v1440 = vpop.f32.mrf.mxu0
        %v1441 = vadd.f32 %v415, %v1440
        %v1442 = vpop.f32.mrf.mxu0
        %v1443 = vpop.f32.mrf.mxu0
        %v1444 = vadd.f32 %v415, %v1443
        %v1445 = vpop.f32.mrf.mxu0
        %1446 = vmatprep.mubr.bf16.mxu0 0
        %1447 = vmatmul.mubr.bf16.gmra.mxu0 %v919
        %v1448 = vpop.f32.mrf.mxu0
        %v1449 = vadd.f32 %v415, %v1448
        %v1450 = vpop.f32.mrf.mxu0
        %v1451 = vpop.f32.mrf.mxu0
        %v1452 = vadd.f32 %v415, %v1451
        %v1453 = vpop.f32.mrf.mxu0
        %1454 = vmatprep.mubr.bf16.mxu0 0
        %1455 = vmatmul.mubr.bf16.gmra.mxu0 %v922
        %v1456 = vpop.f32.mrf.mxu0
        %v1457 = vadd.f32 %v415, %v1456
        %v1458 = vpop.f32.mrf.mxu0
        %v1459 = vpop.f32.mrf.mxu0
        %v1460 = vadd.f32 %v415, %v1459
        %v1461 = vpop.f32.mrf.mxu0
        %1462 = vmatprep.mubr.bf16.mxu0 0
        %1463 = vmatmul.mubr.bf16.gmra.mxu0 %v925
        %v1464 = vpop.f32.mrf.mxu0
        %v1465 = vadd.f32 %v415, %v1464
        %v1466 = vpop.f32.mrf.mxu0
        %v1467 = vpop.f32.mrf.mxu0
        %v1468 = vadd.f32 %v415, %v1467
        %v1469 = vpop.f32.mrf.mxu0
        %1470 = vmatprep.mubr.bf16.mxu0 0
        %1471 = vmatmul.mubr.bf16.gmra.mxu0 %v928
        %v1472 = vpop.f32.mrf.mxu0
        %v1473 = vadd.f32 %v415, %v1472
        %v1474 = vpop.f32.mrf.mxu0
        %v1475 = vpop.f32.mrf.mxu0
        %v1476 = vadd.f32 %v415, %v1475
        %v1477 = vpop.f32.mrf.mxu0
        %1478 = vdwg.mxu0
        %v1479 = vmax.f32 %v969, 0.0
        %v1480 = vmax.f32 %v972, 0.0
        %v1481 = vmax.f32 %v977, 0.0
        %v1482 = vmax.f32 %v980, 0.0
        %v1483 = vmax.f32 %v985, 0.0
        %v1484 = vmax.f32 %v988, 0.0
        %v1485 = vmax.f32 %v993, 0.0
        %v1486 = vmax.f32 %v996, 0.0
        %v1487 = vmax.f32 %v1001, 0.0
        %v1488 = vmax.f32 %v1004, 0.0
        %v1489 = vmax.f32 %v1009, 0.0
        %v1490 = vmax.f32 %v1012, 0.0
        %v1491 = vmax.f32 %v1017, 0.0
        %v1492 = vmax.f32 %v1020, 0.0
        %v1493 = vmax.f32 %v1025, 0.0
        %v1494 = vmax.f32 %v1028, 0.0
        %v1495 = vmax.f32 %v1033, 0.0
        %v1496 = vmax.f32 %v1036, 0.0
        %v1497 = vmax.f32 %v1041, 0.0
        %v1498 = vmax.f32 %v1044, 0.0
        %v1499 = vmax.f32 %v1049, 0.0
        %v1500 = vmax.f32 %v1052, 0.0
        %v1501 = vmax.f32 %v1057, 0.0
        %v1502 = vmax.f32 %v1060, 0.0
        %v1503 = vmax.f32 %v1065, 0.0
        %v1504 = vmax.f32 %v1068, 0.0
        %v1505 = vmax.f32 %v1073, 0.0
        %v1506 = vmax.f32 %v1076, 0.0
        %v1507 = vmax.f32 %v1081, 0.0
        %v1508 = vmax.f32 %v1084, 0.0
        %v1509 = vmax.f32 %v1089, 0.0
        %v1510 = vmax.f32 %v1092, 0.0
        %v1511 = vmax.f32 %v1097, 0.0
        %v1512 = vmax.f32 %v1100, 0.0
        %v1513 = vmax.f32 %v1105, 0.0
        %v1514 = vmax.f32 %v1108, 0.0
        %v1515 = vmax.f32 %v1113, 0.0
        %v1516 = vmax.f32 %v1116, 0.0
        %v1517 = vmax.f32 %v1121, 0.0
        %v1518 = vmax.f32 %v1124, 0.0
        %v1519 = vmax.f32 %v1129, 0.0
        %v1520 = vmax.f32 %v1132, 0.0
        %v1521 = vmax.f32 %v1137, 0.0
        %v1522 = vmax.f32 %v1140, 0.0
        %v1523 = vmax.f32 %v1145, 0.0
        %v1524 = vmax.f32 %v1148, 0.0
        %v1525 = vmax.f32 %v1153, 0.0
        %v1526 = vmax.f32 %v1156, 0.0
        %v1527 = vmax.f32 %v1161, 0.0
        %v1528 = vmax.f32 %v1164, 0.0
        %v1529 = vmax.f32 %v1169, 0.0
        %v1530 = vmax.f32 %v1172, 0.0
        %v1531 = vmax.f32 %v1177, 0.0
        %v1532 = vmax.f32 %v1180, 0.0
        %v1533 = vmax.f32 %v1185, 0.0
        %v1534 = vmax.f32 %v1188, 0.0
        %v1535 = vmax.f32 %v1193, 0.0
        %v1536 = vmax.f32 %v1196, 0.0
        %v1537 = vmax.f32 %v1201, 0.0
        %v1538 = vmax.f32 %v1204, 0.0
        %v1539 = vmax.f32 %v1209, 0.0
        %v1540 = vmax.f32 %v1212, 0.0
        %v1541 = vmax.f32 %v1217, 0.0
        %v1542 = vmax.f32 %v1220, 0.0
        %v1543 = vmax.f32 %v1225, 0.0
        %v1544 = vmax.f32 %v1228, 0.0
        %v1545 = vmax.f32 %v1233, 0.0
        %v1546 = vmax.f32 %v1236, 0.0
        %v1547 = vmax.f32 %v1241, 0.0
        %v1548 = vmax.f32 %v1244, 0.0
        %v1549 = vmax.f32 %v1249, 0.0
        %v1550 = vmax.f32 %v1252, 0.0
        %v1551 = vmax.f32 %v1257, 0.0
        %v1552 = vmax.f32 %v1260, 0.0
        %v1553 = vmax.f32 %v1265, 0.0
        %v1554 = vmax.f32 %v1268, 0.0
        %v1555 = vmax.f32 %v1273, 0.0
        %v1556 = vmax.f32 %v1276, 0.0
        %v1557 = vmax.f32 %v1281, 0.0
        %v1558 = vmax.f32 %v1284, 0.0
        %v1559 = vmax.f32 %v1289, 0.0
        %v1560 = vmax.f32 %v1292, 0.0
        %v1561 = vmax.f32 %v1297, 0.0
        %v1562 = vmax.f32 %v1300, 0.0
        %v1563 = vmax.f32 %v1305, 0.0
        %v1564 = vmax.f32 %v1308, 0.0
        %v1565 = vmax.f32 %v1313, 0.0
        %v1566 = vmax.f32 %v1316, 0.0
        %v1567 = vmax.f32 %v1321, 0.0
        %v1568 = vmax.f32 %v1324, 0.0
        %v1569 = vmax.f32 %v1329, 0.0
        %v1570 = vmax.f32 %v1332, 0.0
        %v1571 = vmax.f32 %v1337, 0.0
        %v1572 = vmax.f32 %v1340, 0.0
        %v1573 = vmax.f32 %v1345, 0.0
        %v1574 = vmax.f32 %v1348, 0.0
        %v1575 = vmax.f32 %v1353, 0.0
        %v1576 = vmax.f32 %v1356, 0.0
        %v1577 = vmax.f32 %v1361, 0.0
        %v1578 = vmax.f32 %v1364, 0.0
        %v1579 = vmax.f32 %v1369, 0.0
        %v1580 = vmax.f32 %v1372, 0.0
        %v1581 = vmax.f32 %v1377, 0.0
        %v1582 = vmax.f32 %v1380, 0.0
        %v1583 = vmax.f32 %v1385, 0.0
        %v1584 = vmax.f32 %v1388, 0.0
        %v1585 = vmax.f32 %v1393, 0.0
        %v1586 = vmax.f32 %v1396, 0.0
        %v1587 = vmax.f32 %v1401, 0.0
        %v1588 = vmax.f32 %v1404, 0.0
        %v1589 = vmax.f32 %v1409, 0.0
        %v1590 = vmax.f32 %v1412, 0.0
        %v1591 = vmax.f32 %v1417, 0.0
        %v1592 = vmax.f32 %v1420, 0.0
        %v1593 = vmax.f32 %v1425, 0.0
        %v1594 = vmax.f32 %v1428, 0.0
        %v1595 = vmax.f32 %v1433, 0.0
        %v1596 = vmax.f32 %v1436, 0.0
        %v1597 = vmax.f32 %v1441, 0.0
        %v1598 = vmax.f32 %v1444, 0.0
        %v1599 = vmax.f32 %v1449, 0.0
        %v1600 = vmax.f32 %v1452, 0.0
        %v1601 = vmax.f32 %v1457, 0.0
        %v1602 = vmax.f32 %v1460, 0.0
        %v1603 = vmax.f32 %v1465, 0.0
        %v1604 = vmax.f32 %v1468, 0.0
        %v1605 = vmax.f32 %v1473, 0.0
        %v1606 = vmax.f32 %v1476, 0.0
        %v1607 = vpack.c.bf16 %v1480, %v1479
        %v1608 = vpack.c.bf16 %v1482, %v1481
        %v1609 = vpack.c.bf16 %v1484, %v1483
        %v1610 = vpack.c.bf16 %v1486, %v1485
        %v1611 = vpack.c.bf16 %v1488, %v1487
        %v1612 = vpack.c.bf16 %v1490, %v1489
        %v1613 = vpack.c.bf16 %v1492, %v1491
        %v1614 = vpack.c.bf16 %v1494, %v1493
        %v1615 = vpack.c.bf16 %v1496, %v1495
        %v1616 = vpack.c.bf16 %v1498, %v1497
        %v1617 = vpack.c.bf16 %v1500, %v1499
        %v1618 = vpack.c.bf16 %v1502, %v1501
        %v1619 = vpack.c.bf16 %v1504, %v1503
        %v1620 = vpack.c.bf16 %v1506, %v1505
        %v1621 = vpack.c.bf16 %v1508, %v1507
        %v1622 = vpack.c.bf16 %v1510, %v1509
        %v1623 = vpack.c.bf16 %v1512, %v1511
        %v1624 = vpack.c.bf16 %v1514, %v1513
        %v1625 = vpack.c.bf16 %v1516, %v1515
        %v1626 = vpack.c.bf16 %v1518, %v1517
        %v1627 = vpack.c.bf16 %v1520, %v1519
        %v1628 = vpack.c.bf16 %v1522, %v1521
        %v1629 = vpack.c.bf16 %v1524, %v1523
        %v1630 = vpack.c.bf16 %v1526, %v1525
        %v1631 = vpack.c.bf16 %v1528, %v1527
        %v1632 = vpack.c.bf16 %v1530, %v1529
        %v1633 = vpack.c.bf16 %v1532, %v1531
        %v1634 = vpack.c.bf16 %v1534, %v1533
        %v1635 = vpack.c.bf16 %v1536, %v1535
        %v1636 = vpack.c.bf16 %v1538, %v1537
        %v1637 = vpack.c.bf16 %v1540, %v1539
        %v1638 = vpack.c.bf16 %v1542, %v1541
        %v1639 = vpack.c.bf16 %v1544, %v1543
        %v1640 = vpack.c.bf16 %v1546, %v1545
        %v1641 = vpack.c.bf16 %v1548, %v1547
        %v1642 = vpack.c.bf16 %v1550, %v1549
        %v1643 = vpack.c.bf16 %v1552, %v1551
        %v1644 = vpack.c.bf16 %v1554, %v1553
        %v1645 = vpack.c.bf16 %v1556, %v1555
        %v1646 = vpack.c.bf16 %v1558, %v1557
        %v1647 = vpack.c.bf16 %v1560, %v1559
        %v1648 = vpack.c.bf16 %v1562, %v1561
        %v1649 = vpack.c.bf16 %v1564, %v1563
        %v1650 = vpack.c.bf16 %v1566, %v1565
        %v1651 = vpack.c.bf16 %v1568, %v1567
        %v1652 = vpack.c.bf16 %v1570, %v1569
        %v1653 = vpack.c.bf16 %v1572, %v1571
        %v1654 = vpack.c.bf16 %v1574, %v1573
        %v1655 = vpack.c.bf16 %v1576, %v1575
        %v1656 = vpack.c.bf16 %v1578, %v1577
        %v1657 = vpack.c.bf16 %v1580, %v1579
        %v1658 = vpack.c.bf16 %v1582, %v1581
        %v1659 = vpack.c.bf16 %v1584, %v1583
        %v1660 = vpack.c.bf16 %v1586, %v1585
        %v1661 = vpack.c.bf16 %v1588, %v1587
        %v1662 = vpack.c.bf16 %v1590, %v1589
        %v1663 = vpack.c.bf16 %v1592, %v1591
        %v1664 = vpack.c.bf16 %v1594, %v1593
        %v1665 = vpack.c.bf16 %v1596, %v1595
        %v1666 = vpack.c.bf16 %v1598, %v1597
        %v1667 = vpack.c.bf16 %v1600, %v1599
        %v1668 = vpack.c.bf16 %v1602, %v1601
        %v1669 = vpack.c.bf16 %v1604, %v1603
        %v1670 = vpack.c.bf16 %v1606, %v1605
        %v1671 = vld [vmem:[%s3] sm:$0xf]
        %v1672 = vld [vmem:[%s3 + $0x4] sm:$0xf]
        %v1673 = vld [vmem:[%s3 + $0x8] sm:$0xf]
        %v1674 = vld [vmem:[%s3 + $0xc] sm:$0xf]
        %v1675 = vld [vmem:[%s3 + $0x10] sm:$0xf]
        %v1676 = vld [vmem:[%s3 + $0x14] sm:$0xf]
        %v1677 = vld [vmem:[%s3 + $0x18] sm:$0xf]
        %v1678 = vld [vmem:[%s3 + $0x1c] sm:$0xf]
        %v1679 = vld [vmem:[%s4] sm:$0x1]
        %v1681 = vlaneseq
        %v1682 = vshrl.u32 %v1681, 7
        %v1683 = vsub.s32 0, %v1682
        %v1684 = vrot.slane %v1679, %v1683
        %v1694 = vunpack.c.l.b16 %v1671
        %v1695 = vunpack.c.l.b16 %v1672
        %v1696 = vunpack.c.l.b16 %v1673
        %v1697 = vunpack.c.l.b16 %v1674
        %v1698 = vunpack.c.l.b16 %v1675
        %v1699 = vunpack.c.l.b16 %v1676
        %v1700 = vunpack.c.l.b16 %v1677
        %v1701 = vunpack.c.l.b16 %v1678
        %v1702 = vpack.c.b16 %v1695, %v1694
        %v1703 = vpack.c.b16 %v1697, %v1696
        %v1704 = vpack.c.b16 %v1699, %v1698
        %v1705 = vpack.c.b16 %v1701, %v1700
        %vm1710 = vcmask 523264
        %v1712 = vsel %vm1710, %v1607, 0
        %v1715 = vsel %vm1710, %v1608, 0
        %v1718 = vsel %vm1710, %v1609, 0
        %v1721 = vsel %vm1710, %v1610, 0
        %v1724 = vsel %vm1710, %v1611, 0
        %v1727 = vsel %vm1710, %v1612, 0
        %v1730 = vsel %vm1710, %v1613, 0
        %v1733 = vsel %vm1710, %v1614, 0
        %v1736 = vsel %vm1710, %v1615, 0
        %v1739 = vsel %vm1710, %v1616, 0
        %v1742 = vsel %vm1710, %v1617, 0
        %v1745 = vsel %vm1710, %v1618, 0
        %v1748 = vsel %vm1710, %v1619, 0
        %v1751 = vsel %vm1710, %v1620, 0
        %v1754 = vsel %vm1710, %v1621, 0
        %v1757 = vsel %vm1710, %v1622, 0
        %v1760 = vsel %vm1710, %v1623, 0
        %v1763 = vsel %vm1710, %v1624, 0
        %v1766 = vsel %vm1710, %v1625, 0
        %v1769 = vsel %vm1710, %v1626, 0
        %v1772 = vsel %vm1710, %v1627, 0
        %v1775 = vsel %vm1710, %v1628, 0
        %v1778 = vsel %vm1710, %v1629, 0
        %v1781 = vsel %vm1710, %v1630, 0
        %v1784 = vsel %vm1710, %v1631, 0
        %v1787 = vsel %vm1710, %v1632, 0
        %v1790 = vsel %vm1710, %v1633, 0
        %v1793 = vsel %vm1710, %v1634, 0
        %v1796 = vsel %vm1710, %v1635, 0
        %v1799 = vsel %vm1710, %v1636, 0
        %v1802 = vsel %vm1710, %v1637, 0
        %v1805 = vsel %vm1710, %v1638, 0
        %v1808 = vsel %vm1710, %v1639, 0
        %v1811 = vsel %vm1710, %v1640, 0
        %v1814 = vsel %vm1710, %v1641, 0
        %v1817 = vsel %vm1710, %v1642, 0
        %v1820 = vsel %vm1710, %v1643, 0
        %v1823 = vsel %vm1710, %v1644, 0
        %v1826 = vsel %vm1710, %v1645, 0
        %v1829 = vsel %vm1710, %v1646, 0
        %v1832 = vsel %vm1710, %v1647, 0
        %v1835 = vsel %vm1710, %v1648, 0
        %v1838 = vsel %vm1710, %v1649, 0
        %v1841 = vsel %vm1710, %v1650, 0
        %v1844 = vsel %vm1710, %v1651, 0
        %v1847 = vsel %vm1710, %v1652, 0
        %v1850 = vsel %vm1710, %v1653, 0
        %v1853 = vsel %vm1710, %v1654, 0
        %v1856 = vsel %vm1710, %v1655, 0
        %v1859 = vsel %vm1710, %v1656, 0
        %v1862 = vsel %vm1710, %v1657, 0
        %v1865 = vsel %vm1710, %v1658, 0
        %v1868 = vsel %vm1710, %v1659, 0
        %v1871 = vsel %vm1710, %v1660, 0
        %v1874 = vsel %vm1710, %v1661, 0
        %v1877 = vsel %vm1710, %v1662, 0
        %v1880 = vsel %vm1710, %v1663, 0
        %v1883 = vsel %vm1710, %v1664, 0
        %v1886 = vsel %vm1710, %v1665, 0
        %v1889 = vsel %vm1710, %v1666, 0
        %v1892 = vsel %vm1710, %v1667, 0
        %v1895 = vsel %vm1710, %v1668, 0
        %v1898 = vsel %vm1710, %v1669, 0
        %v1901 = vsel %vm1710, %v1670, 0
        %1903 = vmatprep.subr.bf16.mxu0 0
        %1904 = vmatpush1.bf16.msra.mxu0 0
        %1905 = vmatprep.subr.bf16.mxu0 0
        %1906 = vmatpush1.bf16.msra.mxu0 0
        %1907 = vmatprep.subr.bf16.mxu0 0
        %1908 = vmatpush1.bf16.msra.mxu0 0
        %1909 = vmatprep.subr.bf16.mxu0 0
        %1910 = vmatpush1.bf16.msra.mxu0 0
        %1911 = vmatprep.subr.bf16.mxu0 0
        %1912 = vmatpush1.bf16.msra.mxu0 %v1705
        %1913 = vmatprep.subr.bf16.mxu0 0
        %1914 = vmatpush1.bf16.msra.mxu0 %v1704
        %1915 = vmatprep.subr.bf16.mxu0 0
        %1916 = vmatpush1.bf16.msra.mxu0 %v1703
        %1917 = vmatprep.subr.bf16.mxu0 0
        %1918 = vmatpush1.bf16.msra.mxu0 %v1702
        %1919 = vmatprep.subr.bf16.mxu0 0
        %1920 = vmatpush2.bf16.msra.mxu0 0
        %1921 = vmatprep.subr.bf16.mxu0 0
        %1922 = vmatpush2.bf16.msra.mxu0 0
        %1923 = vmatprep.subr.bf16.mxu0 0
        %1924 = vmatpush2.bf16.msra.mxu0 0
        %1925 = vmatprep.subr.bf16.mxu0 0
        %1926 = vmatpush2.bf16.msra.mxu0 0
        %1927 = vmatprep.subr.bf16.mxu0 0
        %1928 = vmatpush2.bf16.msra.mxu0 0
        %1929 = vmatprep.subr.bf16.mxu0 0
        %1930 = vmatpush2.bf16.msra.mxu0 0
        %1931 = vmatprep.subr.bf16.mxu0 0
        %1932 = vmatpush2.bf16.msra.mxu0 0
        %1933 = vmatprep.subr.bf16.mxu0 0
        %1934 = vmatpush2.bf16.msra.mxu0 0
        %1935 = vmatprep.mubr.bf16.mxu0 0
        %1936 = vmatmul.mubr.bf16.gmra.mxu0 %v1712
        %v1937 = vpop.f32.mrf.mxu0
        %v1938 = vadd.f32 %v1684, %v1937
        %v1939 = vpop.f32.mrf.mxu0
        %v1940 = vpop.f32.mrf.mxu0
        %v1941 = vadd.f32 %v1684, %v1940
        %v1942 = vpop.f32.mrf.mxu0
        %1943 = vmatprep.mubr.bf16.mxu0 0
        %1944 = vmatmul.mubr.bf16.gmra.mxu0 %v1715
        %v1945 = vpop.f32.mrf.mxu0
        %v1946 = vadd.f32 %v1684, %v1945
        %v1947 = vpop.f32.mrf.mxu0
        %v1948 = vpop.f32.mrf.mxu0
        %v1949 = vadd.f32 %v1684, %v1948
        %v1950 = vpop.f32.mrf.mxu0
        %1951 = vmatprep.mubr.bf16.mxu0 0
        %1952 = vmatmul.mubr.bf16.gmra.mxu0 %v1718
        %v1953 = vpop.f32.mrf.mxu0
        %v1954 = vadd.f32 %v1684, %v1953
        %v1955 = vpop.f32.mrf.mxu0
        %v1956 = vpop.f32.mrf.mxu0
        %v1957 = vadd.f32 %v1684, %v1956
        %v1958 = vpop.f32.mrf.mxu0
        %1959 = vmatprep.mubr.bf16.mxu0 0
        %1960 = vmatmul.mubr.bf16.gmra.mxu0 %v1721
        %v1961 = vpop.f32.mrf.mxu0
        %v1962 = vadd.f32 %v1684, %v1961
        %v1963 = vpop.f32.mrf.mxu0
        %v1964 = vpop.f32.mrf.mxu0
        %v1965 = vadd.f32 %v1684, %v1964
        %v1966 = vpop.f32.mrf.mxu0
        %1967 = vmatprep.mubr.bf16.mxu0 0
        %1968 = vmatmul.mubr.bf16.gmra.mxu0 %v1724
        %v1969 = vpop.f32.mrf.mxu0
        %v1970 = vadd.f32 %v1684, %v1969
        %v1971 = vpop.f32.mrf.mxu0
        %v1972 = vpop.f32.mrf.mxu0
        %v1973 = vadd.f32 %v1684, %v1972
        %v1974 = vpop.f32.mrf.mxu0
        %1975 = vmatprep.mubr.bf16.mxu0 0
        %1976 = vmatmul.mubr.bf16.gmra.mxu0 %v1727
        %v1977 = vpop.f32.mrf.mxu0
        %v1978 = vadd.f32 %v1684, %v1977
        %v1979 = vpop.f32.mrf.mxu0
        %v1980 = vpop.f32.mrf.mxu0
        %v1981 = vadd.f32 %v1684, %v1980
        %v1982 = vpop.f32.mrf.mxu0
        %1983 = vmatprep.mubr.bf16.mxu0 0
        %1984 = vmatmul.mubr.bf16.gmra.mxu0 %v1730
        %v1985 = vpop.f32.mrf.mxu0
        %v1986 = vadd.f32 %v1684, %v1985
        %v1987 = vpop.f32.mrf.mxu0
        %v1988 = vpop.f32.mrf.mxu0
        %v1989 = vadd.f32 %v1684, %v1988
        %v1990 = vpop.f32.mrf.mxu0
        %1991 = vmatprep.mubr.bf16.mxu0 0
        %1992 = vmatmul.mubr.bf16.gmra.mxu0 %v1733
        %v1993 = vpop.f32.mrf.mxu0
        %v1994 = vadd.f32 %v1684, %v1993
        %v1995 = vpop.f32.mrf.mxu0
        %v1996 = vpop.f32.mrf.mxu0
        %v1997 = vadd.f32 %v1684, %v1996
        %v1998 = vpop.f32.mrf.mxu0
        %1999 = vmatprep.mubr.bf16.mxu0 0
        %2000 = vmatmul.mubr.bf16.gmra.mxu0 %v1736
        %v2001 = vpop.f32.mrf.mxu0
        %v2002 = vadd.f32 %v1684, %v2001
        %v2003 = vpop.f32.mrf.mxu0
        %v2004 = vpop.f32.mrf.mxu0
        %v2005 = vadd.f32 %v1684, %v2004
        %v2006 = vpop.f32.mrf.mxu0
        %2007 = vmatprep.mubr.bf16.mxu0 0
        %2008 = vmatmul.mubr.bf16.gmra.mxu0 %v1739
        %v2009 = vpop.f32.mrf.mxu0
        %v2010 = vadd.f32 %v1684, %v2009
        %v2011 = vpop.f32.mrf.mxu0
        %v2012 = vpop.f32.mrf.mxu0
        %v2013 = vadd.f32 %v1684, %v2012
        %v2014 = vpop.f32.mrf.mxu0
        %2015 = vmatprep.mubr.bf16.mxu0 0
        %2016 = vmatmul.mubr.bf16.gmra.mxu0 %v1742
        %v2017 = vpop.f32.mrf.mxu0
        %v2018 = vadd.f32 %v1684, %v2017
        %v2019 = vpop.f32.mrf.mxu0
        %v2020 = vpop.f32.mrf.mxu0
        %v2021 = vadd.f32 %v1684, %v2020
        %v2022 = vpop.f32.mrf.mxu0
        %2023 = vmatprep.mubr.bf16.mxu0 0
        %2024 = vmatmul.mubr.bf16.gmra.mxu0 %v1745
        %v2025 = vpop.f32.mrf.mxu0
        %v2026 = vadd.f32 %v1684, %v2025
        %v2027 = vpop.f32.mrf.mxu0
        %v2028 = vpop.f32.mrf.mxu0
        %v2029 = vadd.f32 %v1684, %v2028
        %v2030 = vpop.f32.mrf.mxu0
        %2031 = vmatprep.mubr.bf16.mxu0 0
        %2032 = vmatmul.mubr.bf16.gmra.mxu0 %v1748
        %v2033 = vpop.f32.mrf.mxu0
        %v2034 = vadd.f32 %v1684, %v2033
        %v2035 = vpop.f32.mrf.mxu0
        %v2036 = vpop.f32.mrf.mxu0
        %v2037 = vadd.f32 %v1684, %v2036
        %v2038 = vpop.f32.mrf.mxu0
        %2039 = vmatprep.mubr.bf16.mxu0 0
        %2040 = vmatmul.mubr.bf16.gmra.mxu0 %v1751
        %v2041 = vpop.f32.mrf.mxu0
        %v2042 = vadd.f32 %v1684, %v2041
        %v2043 = vpop.f32.mrf.mxu0
        %v2044 = vpop.f32.mrf.mxu0
        %v2045 = vadd.f32 %v1684, %v2044
        %v2046 = vpop.f32.mrf.mxu0
        %2047 = vmatprep.mubr.bf16.mxu0 0
        %2048 = vmatmul.mubr.bf16.gmra.mxu0 %v1754
        %v2049 = vpop.f32.mrf.mxu0
        %v2050 = vadd.f32 %v1684, %v2049
        %v2051 = vpop.f32.mrf.mxu0
        %v2052 = vpop.f32.mrf.mxu0
        %v2053 = vadd.f32 %v1684, %v2052
        %v2054 = vpop.f32.mrf.mxu0
        %2055 = vmatprep.mubr.bf16.mxu0 0
        %2056 = vmatmul.mubr.bf16.gmra.mxu0 %v1757
        %v2057 = vpop.f32.mrf.mxu0
        %v2058 = vadd.f32 %v1684, %v2057
        %v2059 = vpop.f32.mrf.mxu0
        %v2060 = vpop.f32.mrf.mxu0
        %v2061 = vadd.f32 %v1684, %v2060
        %v2062 = vpop.f32.mrf.mxu0
        %2063 = vmatprep.mubr.bf16.mxu0 0
        %2064 = vmatmul.mubr.bf16.gmra.mxu0 %v1760
        %v2065 = vpop.f32.mrf.mxu0
        %v2066 = vadd.f32 %v1684, %v2065
        %v2067 = vpop.f32.mrf.mxu0
        %v2068 = vpop.f32.mrf.mxu0
        %v2069 = vadd.f32 %v1684, %v2068
        %v2070 = vpop.f32.mrf.mxu0
        %2071 = vmatprep.mubr.bf16.mxu0 0
        %2072 = vmatmul.mubr.bf16.gmra.mxu0 %v1763
        %v2073 = vpop.f32.mrf.mxu0
        %v2074 = vadd.f32 %v1684, %v2073
        %v2075 = vpop.f32.mrf.mxu0
        %v2076 = vpop.f32.mrf.mxu0
        %v2077 = vadd.f32 %v1684, %v2076
        %v2078 = vpop.f32.mrf.mxu0
        %2079 = vmatprep.mubr.bf16.mxu0 0
        %2080 = vmatmul.mubr.bf16.gmra.mxu0 %v1766
        %v2081 = vpop.f32.mrf.mxu0
        %v2082 = vadd.f32 %v1684, %v2081
        %v2083 = vpop.f32.mrf.mxu0
        %v2084 = vpop.f32.mrf.mxu0
        %v2085 = vadd.f32 %v1684, %v2084
        %v2086 = vpop.f32.mrf.mxu0
        %2087 = vmatprep.mubr.bf16.mxu0 0
        %2088 = vmatmul.mubr.bf16.gmra.mxu0 %v1769
        %v2089 = vpop.f32.mrf.mxu0
        %v2090 = vadd.f32 %v1684, %v2089
        %v2091 = vpop.f32.mrf.mxu0
        %v2092 = vpop.f32.mrf.mxu0
        %v2093 = vadd.f32 %v1684, %v2092
        %v2094 = vpop.f32.mrf.mxu0
        %2095 = vmatprep.mubr.bf16.mxu0 0
        %2096 = vmatmul.mubr.bf16.gmra.mxu0 %v1772
        %v2097 = vpop.f32.mrf.mxu0
        %v2098 = vadd.f32 %v1684, %v2097
        %v2099 = vpop.f32.mrf.mxu0
        %v2100 = vpop.f32.mrf.mxu0
        %v2101 = vadd.f32 %v1684, %v2100
        %v2102 = vpop.f32.mrf.mxu0
        %2103 = vmatprep.mubr.bf16.mxu0 0
        %2104 = vmatmul.mubr.bf16.gmra.mxu0 %v1775
        %v2105 = vpop.f32.mrf.mxu0
        %v2106 = vadd.f32 %v1684, %v2105
        %v2107 = vpop.f32.mrf.mxu0
        %v2108 = vpop.f32.mrf.mxu0
        %v2109 = vadd.f32 %v1684, %v2108
        %v2110 = vpop.f32.mrf.mxu0
        %2111 = vmatprep.mubr.bf16.mxu0 0
        %2112 = vmatmul.mubr.bf16.gmra.mxu0 %v1778
        %v2113 = vpop.f32.mrf.mxu0
        %v2114 = vadd.f32 %v1684, %v2113
        %v2115 = vpop.f32.mrf.mxu0
        %v2116 = vpop.f32.mrf.mxu0
        %v2117 = vadd.f32 %v1684, %v2116
        %v2118 = vpop.f32.mrf.mxu0
        %2119 = vmatprep.mubr.bf16.mxu0 0
        %2120 = vmatmul.mubr.bf16.gmra.mxu0 %v1781
        %v2121 = vpop.f32.mrf.mxu0
        %v2122 = vadd.f32 %v1684, %v2121
        %v2123 = vpop.f32.mrf.mxu0
        %v2124 = vpop.f32.mrf.mxu0
        %v2125 = vadd.f32 %v1684, %v2124
        %v2126 = vpop.f32.mrf.mxu0
        %2127 = vmatprep.mubr.bf16.mxu0 0
        %2128 = vmatmul.mubr.bf16.gmra.mxu0 %v1784
        %v2129 = vpop.f32.mrf.mxu0
        %v2130 = vadd.f32 %v1684, %v2129
        %v2131 = vpop.f32.mrf.mxu0
        %v2132 = vpop.f32.mrf.mxu0
        %v2133 = vadd.f32 %v1684, %v2132
        %v2134 = vpop.f32.mrf.mxu0
        %2135 = vmatprep.mubr.bf16.mxu0 0
        %2136 = vmatmul.mubr.bf16.gmra.mxu0 %v1787
        %v2137 = vpop.f32.mrf.mxu0
        %v2138 = vadd.f32 %v1684, %v2137
        %v2139 = vpop.f32.mrf.mxu0
        %v2140 = vpop.f32.mrf.mxu0
        %v2141 = vadd.f32 %v1684, %v2140
        %v2142 = vpop.f32.mrf.mxu0
        %2143 = vmatprep.mubr.bf16.mxu0 0
        %2144 = vmatmul.mubr.bf16.gmra.mxu0 %v1790
        %v2145 = vpop.f32.mrf.mxu0
        %v2146 = vadd.f32 %v1684, %v2145
        %v2147 = vpop.f32.mrf.mxu0
        %v2148 = vpop.f32.mrf.mxu0
        %v2149 = vadd.f32 %v1684, %v2148
        %v2150 = vpop.f32.mrf.mxu0
        %2151 = vmatprep.mubr.bf16.mxu0 0
        %2152 = vmatmul.mubr.bf16.gmra.mxu0 %v1793
        %v2153 = vpop.f32.mrf.mxu0
        %v2154 = vadd.f32 %v1684, %v2153
        %v2155 = vpop.f32.mrf.mxu0
        %v2156 = vpop.f32.mrf.mxu0
        %v2157 = vadd.f32 %v1684, %v2156
        %v2158 = vpop.f32.mrf.mxu0
        %2159 = vmatprep.mubr.bf16.mxu0 0
        %2160 = vmatmul.mubr.bf16.gmra.mxu0 %v1796
        %v2161 = vpop.f32.mrf.mxu0
        %v2162 = vadd.f32 %v1684, %v2161
        %v2163 = vpop.f32.mrf.mxu0
        %v2164 = vpop.f32.mrf.mxu0
        %v2165 = vadd.f32 %v1684, %v2164
        %v2166 = vpop.f32.mrf.mxu0
        %2167 = vmatprep.mubr.bf16.mxu0 0
        %2168 = vmatmul.mubr.bf16.gmra.mxu0 %v1799
        %v2169 = vpop.f32.mrf.mxu0
        %v2170 = vadd.f32 %v1684, %v2169
        %v2171 = vpop.f32.mrf.mxu0
        %v2172 = vpop.f32.mrf.mxu0
        %v2173 = vadd.f32 %v1684, %v2172
        %v2174 = vpop.f32.mrf.mxu0
        %2175 = vmatprep.mubr.bf16.mxu0 0
        %2176 = vmatmul.mubr.bf16.gmra.mxu0 %v1802
        %v2177 = vpop.f32.mrf.mxu0
        %v2178 = vadd.f32 %v1684, %v2177
        %v2179 = vpop.f32.mrf.mxu0
        %v2180 = vpop.f32.mrf.mxu0
        %v2181 = vadd.f32 %v1684, %v2180
        %v2182 = vpop.f32.mrf.mxu0
        %2183 = vmatprep.mubr.bf16.mxu0 0
        %2184 = vmatmul.mubr.bf16.gmra.mxu0 %v1805
        %v2185 = vpop.f32.mrf.mxu0
        %v2186 = vadd.f32 %v1684, %v2185
        %v2187 = vpop.f32.mrf.mxu0
        %v2188 = vpop.f32.mrf.mxu0
        %v2189 = vadd.f32 %v1684, %v2188
        %v2190 = vpop.f32.mrf.mxu0
        %2191 = vmatprep.mubr.bf16.mxu0 0
        %2192 = vmatmul.mubr.bf16.gmra.mxu0 %v1808
        %v2193 = vpop.f32.mrf.mxu0
        %v2194 = vadd.f32 %v1684, %v2193
        %v2195 = vpop.f32.mrf.mxu0
        %v2196 = vpop.f32.mrf.mxu0
        %v2197 = vadd.f32 %v1684, %v2196
        %v2198 = vpop.f32.mrf.mxu0
        %2199 = vmatprep.mubr.bf16.mxu0 0
        %2200 = vmatmul.mubr.bf16.gmra.mxu0 %v1811
        %v2201 = vpop.f32.mrf.mxu0
        %v2202 = vadd.f32 %v1684, %v2201
        %v2203 = vpop.f32.mrf.mxu0
        %v2204 = vpop.f32.mrf.mxu0
        %v2205 = vadd.f32 %v1684, %v2204
        %v2206 = vpop.f32.mrf.mxu0
        %2207 = vmatprep.mubr.bf16.mxu0 0
        %2208 = vmatmul.mubr.bf16.gmra.mxu0 %v1814
        %v2209 = vpop.f32.mrf.mxu0
        %v2210 = vadd.f32 %v1684, %v2209
        %v2211 = vpop.f32.mrf.mxu0
        %v2212 = vpop.f32.mrf.mxu0
        %v2213 = vadd.f32 %v1684, %v2212
        %v2214 = vpop.f32.mrf.mxu0
        %2215 = vmatprep.mubr.bf16.mxu0 0
        %2216 = vmatmul.mubr.bf16.gmra.mxu0 %v1817
        %v2217 = vpop.f32.mrf.mxu0
        %v2218 = vadd.f32 %v1684, %v2217
        %v2219 = vpop.f32.mrf.mxu0
        %v2220 = vpop.f32.mrf.mxu0
        %v2221 = vadd.f32 %v1684, %v2220
        %v2222 = vpop.f32.mrf.mxu0
        %2223 = vmatprep.mubr.bf16.mxu0 0
        %2224 = vmatmul.mubr.bf16.gmra.mxu0 %v1820
        %v2225 = vpop.f32.mrf.mxu0
        %v2226 = vadd.f32 %v1684, %v2225
        %v2227 = vpop.f32.mrf.mxu0
        %v2228 = vpop.f32.mrf.mxu0
        %v2229 = vadd.f32 %v1684, %v2228
        %v2230 = vpop.f32.mrf.mxu0
        %2231 = vmatprep.mubr.bf16.mxu0 0
        %2232 = vmatmul.mubr.bf16.gmra.mxu0 %v1823
        %v2233 = vpop.f32.mrf.mxu0
        %v2234 = vadd.f32 %v1684, %v2233
        %v2235 = vpop.f32.mrf.mxu0
        %v2236 = vpop.f32.mrf.mxu0
        %v2237 = vadd.f32 %v1684, %v2236
        %v2238 = vpop.f32.mrf.mxu0
        %2239 = vmatprep.mubr.bf16.mxu0 0
        %2240 = vmatmul.mubr.bf16.gmra.mxu0 %v1826
        %v2241 = vpop.f32.mrf.mxu0
        %v2242 = vadd.f32 %v1684, %v2241
        %v2243 = vpop.f32.mrf.mxu0
        %v2244 = vpop.f32.mrf.mxu0
        %v2245 = vadd.f32 %v1684, %v2244
        %v2246 = vpop.f32.mrf.mxu0
        %2247 = vmatprep.mubr.bf16.mxu0 0
        %2248 = vmatmul.mubr.bf16.gmra.mxu0 %v1829
        %v2249 = vpop.f32.mrf.mxu0
        %v2250 = vadd.f32 %v1684, %v2249
        %v2251 = vpop.f32.mrf.mxu0
        %v2252 = vpop.f32.mrf.mxu0
        %v2253 = vadd.f32 %v1684, %v2252
        %v2254 = vpop.f32.mrf.mxu0
        %2255 = vmatprep.mubr.bf16.mxu0 0
        %2256 = vmatmul.mubr.bf16.gmra.mxu0 %v1832
        %v2257 = vpop.f32.mrf.mxu0
        %v2258 = vadd.f32 %v1684, %v2257
        %v2259 = vpop.f32.mrf.mxu0
        %v2260 = vpop.f32.mrf.mxu0
        %v2261 = vadd.f32 %v1684, %v2260
        %v2262 = vpop.f32.mrf.mxu0
        %2263 = vmatprep.mubr.bf16.mxu0 0
        %2264 = vmatmul.mubr.bf16.gmra.mxu0 %v1835
        %v2265 = vpop.f32.mrf.mxu0
        %v2266 = vadd.f32 %v1684, %v2265
        %v2267 = vpop.f32.mrf.mxu0
        %v2268 = vpop.f32.mrf.mxu0
        %v2269 = vadd.f32 %v1684, %v2268
        %v2270 = vpop.f32.mrf.mxu0
        %2271 = vmatprep.mubr.bf16.mxu0 0
        %2272 = vmatmul.mubr.bf16.gmra.mxu0 %v1838
        %v2273 = vpop.f32.mrf.mxu0
        %v2274 = vadd.f32 %v1684, %v2273
        %v2275 = vpop.f32.mrf.mxu0
        %v2276 = vpop.f32.mrf.mxu0
        %v2277 = vadd.f32 %v1684, %v2276
        %v2278 = vpop.f32.mrf.mxu0
        %2279 = vmatprep.mubr.bf16.mxu0 0
        %2280 = vmatmul.mubr.bf16.gmra.mxu0 %v1841
        %v2281 = vpop.f32.mrf.mxu0
        %v2282 = vadd.f32 %v1684, %v2281
        %v2283 = vpop.f32.mrf.mxu0
        %v2284 = vpop.f32.mrf.mxu0
        %v2285 = vadd.f32 %v1684, %v2284
        %v2286 = vpop.f32.mrf.mxu0
        %2287 = vmatprep.mubr.bf16.mxu0 0
        %2288 = vmatmul.mubr.bf16.gmra.mxu0 %v1844
        %v2289 = vpop.f32.mrf.mxu0
        %v2290 = vadd.f32 %v1684, %v2289
        %v2291 = vpop.f32.mrf.mxu0
        %v2292 = vpop.f32.mrf.mxu0
        %v2293 = vadd.f32 %v1684, %v2292
        %v2294 = vpop.f32.mrf.mxu0
        %2295 = vmatprep.mubr.bf16.mxu0 0
        %2296 = vmatmul.mubr.bf16.gmra.mxu0 %v1847
        %v2297 = vpop.f32.mrf.mxu0
        %v2298 = vadd.f32 %v1684, %v2297
        %v2299 = vpop.f32.mrf.mxu0
        %v2300 = vpop.f32.mrf.mxu0
        %v2301 = vadd.f32 %v1684, %v2300
        %v2302 = vpop.f32.mrf.mxu0
        %2303 = vmatprep.mubr.bf16.mxu0 0
        %2304 = vmatmul.mubr.bf16.gmra.mxu0 %v1850
        %v2305 = vpop.f32.mrf.mxu0
        %v2306 = vadd.f32 %v1684, %v2305
        %v2307 = vpop.f32.mrf.mxu0
        %v2308 = vpop.f32.mrf.mxu0
        %v2309 = vadd.f32 %v1684, %v2308
        %v2310 = vpop.f32.mrf.mxu0
        %2311 = vmatprep.mubr.bf16.mxu0 0
        %2312 = vmatmul.mubr.bf16.gmra.mxu0 %v1853
        %v2313 = vpop.f32.mrf.mxu0
        %v2314 = vadd.f32 %v1684, %v2313
        %v2315 = vpop.f32.mrf.mxu0
        %v2316 = vpop.f32.mrf.mxu0
        %v2317 = vadd.f32 %v1684, %v2316
        %v2318 = vpop.f32.mrf.mxu0
        %2319 = vmatprep.mubr.bf16.mxu0 0
        %2320 = vmatmul.mubr.bf16.gmra.mxu0 %v1856
        %v2321 = vpop.f32.mrf.mxu0
        %v2322 = vadd.f32 %v1684, %v2321
        %v2323 = vpop.f32.mrf.mxu0
        %v2324 = vpop.f32.mrf.mxu0
        %v2325 = vadd.f32 %v1684, %v2324
        %v2326 = vpop.f32.mrf.mxu0
        %2327 = vmatprep.mubr.bf16.mxu0 0
        %2328 = vmatmul.mubr.bf16.gmra.mxu0 %v1859
        %v2329 = vpop.f32.mrf.mxu0
        %v2330 = vadd.f32 %v1684, %v2329
        %v2331 = vpop.f32.mrf.mxu0
        %v2332 = vpop.f32.mrf.mxu0
        %v2333 = vadd.f32 %v1684, %v2332
        %v2334 = vpop.f32.mrf.mxu0
        %2335 = vmatprep.mubr.bf16.mxu0 0
        %2336 = vmatmul.mubr.bf16.gmra.mxu0 %v1862
        %v2337 = vpop.f32.mrf.mxu0
        %v2338 = vadd.f32 %v1684, %v2337
        %v2339 = vpop.f32.mrf.mxu0
        %v2340 = vpop.f32.mrf.mxu0
        %v2341 = vadd.f32 %v1684, %v2340
        %v2342 = vpop.f32.mrf.mxu0
        %2343 = vmatprep.mubr.bf16.mxu0 0
        %2344 = vmatmul.mubr.bf16.gmra.mxu0 %v1865
        %v2345 = vpop.f32.mrf.mxu0
        %v2346 = vadd.f32 %v1684, %v2345
        %v2347 = vpop.f32.mrf.mxu0
        %v2348 = vpop.f32.mrf.mxu0
        %v2349 = vadd.f32 %v1684, %v2348
        %v2350 = vpop.f32.mrf.mxu0
        %2351 = vmatprep.mubr.bf16.mxu0 0
        %2352 = vmatmul.mubr.bf16.gmra.mxu0 %v1868
        %v2353 = vpop.f32.mrf.mxu0
        %v2354 = vadd.f32 %v1684, %v2353
        %v2355 = vpop.f32.mrf.mxu0
        %v2356 = vpop.f32.mrf.mxu0
        %v2357 = vadd.f32 %v1684, %v2356
        %v2358 = vpop.f32.mrf.mxu0
        %2359 = vmatprep.mubr.bf16.mxu0 0
        %2360 = vmatmul.mubr.bf16.gmra.mxu0 %v1871
        %v2361 = vpop.f32.mrf.mxu0
        %v2362 = vadd.f32 %v1684, %v2361
        %v2363 = vpop.f32.mrf.mxu0
        %v2364 = vpop.f32.mrf.mxu0
        %v2365 = vadd.f32 %v1684, %v2364
        %v2366 = vpop.f32.mrf.mxu0
        %2367 = vmatprep.mubr.bf16.mxu0 0
        %2368 = vmatmul.mubr.bf16.gmra.mxu0 %v1874
        %v2369 = vpop.f32.mrf.mxu0
        %v2370 = vadd.f32 %v1684, %v2369
        %v2371 = vpop.f32.mrf.mxu0
        %v2372 = vpop.f32.mrf.mxu0
        %v2373 = vadd.f32 %v1684, %v2372
        %v2374 = vpop.f32.mrf.mxu0
        %2375 = vmatprep.mubr.bf16.mxu0 0
        %2376 = vmatmul.mubr.bf16.gmra.mxu0 %v1877
        %v2377 = vpop.f32.mrf.mxu0
        %v2378 = vadd.f32 %v1684, %v2377
        %v2379 = vpop.f32.mrf.mxu0
        %v2380 = vpop.f32.mrf.mxu0
        %v2381 = vadd.f32 %v1684, %v2380
        %v2382 = vpop.f32.mrf.mxu0
        %2383 = vmatprep.mubr.bf16.mxu0 0
        %2384 = vmatmul.mubr.bf16.gmra.mxu0 %v1880
        %v2385 = vpop.f32.mrf.mxu0
        %v2386 = vadd.f32 %v1684, %v2385
        %v2387 = vpop.f32.mrf.mxu0
        %v2388 = vpop.f32.mrf.mxu0
        %v2389 = vadd.f32 %v1684, %v2388
        %v2390 = vpop.f32.mrf.mxu0
        %2391 = vmatprep.mubr.bf16.mxu0 0
        %2392 = vmatmul.mubr.bf16.gmra.mxu0 %v1883
        %v2393 = vpop.f32.mrf.mxu0
        %v2394 = vadd.f32 %v1684, %v2393
        %v2395 = vpop.f32.mrf.mxu0
        %v2396 = vpop.f32.mrf.mxu0
        %v2397 = vadd.f32 %v1684, %v2396
        %v2398 = vpop.f32.mrf.mxu0
        %2399 = vmatprep.mubr.bf16.mxu0 0
        %2400 = vmatmul.mubr.bf16.gmra.mxu0 %v1886
        %v2401 = vpop.f32.mrf.mxu0
        %v2402 = vadd.f32 %v1684, %v2401
        %v2403 = vpop.f32.mrf.mxu0
        %v2404 = vpop.f32.mrf.mxu0
        %v2405 = vadd.f32 %v1684, %v2404
        %v2406 = vpop.f32.mrf.mxu0
        %2407 = vmatprep.mubr.bf16.mxu0 0
        %2408 = vmatmul.mubr.bf16.gmra.mxu0 %v1889
        %v2409 = vpop.f32.mrf.mxu0
        %v2410 = vadd.f32 %v1684, %v2409
        %v2411 = vpop.f32.mrf.mxu0
        %v2412 = vpop.f32.mrf.mxu0
        %v2413 = vadd.f32 %v1684, %v2412
        %v2414 = vpop.f32.mrf.mxu0
        %2415 = vmatprep.mubr.bf16.mxu0 0
        %2416 = vmatmul.mubr.bf16.gmra.mxu0 %v1892
        %v2417 = vpop.f32.mrf.mxu0
        %v2418 = vadd.f32 %v1684, %v2417
        %v2419 = vpop.f32.mrf.mxu0
        %v2420 = vpop.f32.mrf.mxu0
        %v2421 = vadd.f32 %v1684, %v2420
        %v2422 = vpop.f32.mrf.mxu0
        %2423 = vmatprep.mubr.bf16.mxu0 0
        %2424 = vmatmul.mubr.bf16.gmra.mxu0 %v1895
        %v2425 = vpop.f32.mrf.mxu0
        %v2426 = vadd.f32 %v1684, %v2425
        %v2427 = vpop.f32.mrf.mxu0
        %v2428 = vpop.f32.mrf.mxu0
        %v2429 = vadd.f32 %v1684, %v2428
        %v2430 = vpop.f32.mrf.mxu0
        %2431 = vmatprep.mubr.bf16.mxu0 0
        %2432 = vmatmul.mubr.bf16.gmra.mxu0 %v1898
        %v2433 = vpop.f32.mrf.mxu0
        %v2434 = vadd.f32 %v1684, %v2433
        %v2435 = vpop.f32.mrf.mxu0
        %v2436 = vpop.f32.mrf.mxu0
        %v2437 = vadd.f32 %v1684, %v2436
        %v2438 = vpop.f32.mrf.mxu0
        %2439 = vmatprep.mubr.bf16.mxu0 0
        %2440 = vmatmul.mubr.bf16.gmra.mxu0 %v1901
        %v2441 = vpop.f32.mrf.mxu0
        %v2442 = vadd.f32 %v1684, %v2441
        %v2443 = vpop.f32.mrf.mxu0
        %v2444 = vpop.f32.mrf.mxu0
        %v2445 = vadd.f32 %v1684, %v2444
        %v2446 = vpop.f32.mrf.mxu0
        %2447 = vdwg.mxu0
        %v2448 = vmax.f32 %v1938, 0.0
        %v2449 = vmax.f32 %v1941, 0.0
        %v2450 = vmax.f32 %v1946, 0.0
        %v2451 = vmax.f32 %v1949, 0.0
        %v2452 = vmax.f32 %v1954, 0.0
        %v2453 = vmax.f32 %v1957, 0.0
        %v2454 = vmax.f32 %v1962, 0.0
        %v2455 = vmax.f32 %v1965, 0.0
        %v2456 = vmax.f32 %v1970, 0.0
        %v2457 = vmax.f32 %v1973, 0.0
        %v2458 = vmax.f32 %v1978, 0.0
        %v2459 = vmax.f32 %v1981, 0.0
        %v2460 = vmax.f32 %v1986, 0.0
        %v2461 = vmax.f32 %v1989, 0.0
        %v2462 = vmax.f32 %v1994, 0.0
        %v2463 = vmax.f32 %v1997, 0.0
        %v2464 = vmax.f32 %v2002, 0.0
        %v2465 = vmax.f32 %v2005, 0.0
        %v2466 = vmax.f32 %v2010, 0.0
        %v2467 = vmax.f32 %v2013, 0.0
        %v2468 = vmax.f32 %v2018, 0.0
        %v2469 = vmax.f32 %v2021, 0.0
        %v2470 = vmax.f32 %v2026, 0.0
        %v2471 = vmax.f32 %v2029, 0.0
        %v2472 = vmax.f32 %v2034, 0.0
        %v2473 = vmax.f32 %v2037, 0.0
        %v2474 = vmax.f32 %v2042, 0.0
        %v2475 = vmax.f32 %v2045, 0.0
        %v2476 = vmax.f32 %v2050, 0.0
        %v2477 = vmax.f32 %v2053, 0.0
        %v2478 = vmax.f32 %v2058, 0.0
        %v2479 = vmax.f32 %v2061, 0.0
        %v2480 = vmax.f32 %v2066, 0.0
        %v2481 = vmax.f32 %v2069, 0.0
        %v2482 = vmax.f32 %v2074, 0.0
        %v2483 = vmax.f32 %v2077, 0.0
        %v2484 = vmax.f32 %v2082, 0.0
        %v2485 = vmax.f32 %v2085, 0.0
        %v2486 = vmax.f32 %v2090, 0.0
        %v2487 = vmax.f32 %v2093, 0.0
        %v2488 = vmax.f32 %v2098, 0.0
        %v2489 = vmax.f32 %v2101, 0.0
        %v2490 = vmax.f32 %v2106, 0.0
        %v2491 = vmax.f32 %v2109, 0.0
        %v2492 = vmax.f32 %v2114, 0.0
        %v2493 = vmax.f32 %v2117, 0.0
        %v2494 = vmax.f32 %v2122, 0.0
        %v2495 = vmax.f32 %v2125, 0.0
        %v2496 = vmax.f32 %v2130, 0.0
        %v2497 = vmax.f32 %v2133, 0.0
        %v2498 = vmax.f32 %v2138, 0.0
        %v2499 = vmax.f32 %v2141, 0.0
        %v2500 = vmax.f32 %v2146, 0.0
        %v2501 = vmax.f32 %v2149, 0.0
        %v2502 = vmax.f32 %v2154, 0.0
        %v2503 = vmax.f32 %v2157, 0.0
        %v2504 = vmax.f32 %v2162, 0.0
        %v2505 = vmax.f32 %v2165, 0.0
        %v2506 = vmax.f32 %v2170, 0.0
        %v2507 = vmax.f32 %v2173, 0.0
        %v2508 = vmax.f32 %v2178, 0.0
        %v2509 = vmax.f32 %v2181, 0.0
        %v2510 = vmax.f32 %v2186, 0.0
        %v2511 = vmax.f32 %v2189, 0.0
        %v2512 = vmax.f32 %v2194, 0.0
        %v2513 = vmax.f32 %v2197, 0.0
        %v2514 = vmax.f32 %v2202, 0.0
        %v2515 = vmax.f32 %v2205, 0.0
        %v2516 = vmax.f32 %v2210, 0.0
        %v2517 = vmax.f32 %v2213, 0.0
        %v2518 = vmax.f32 %v2218, 0.0
        %v2519 = vmax.f32 %v2221, 0.0
        %v2520 = vmax.f32 %v2226, 0.0
        %v2521 = vmax.f32 %v2229, 0.0
        %v2522 = vmax.f32 %v2234, 0.0
        %v2523 = vmax.f32 %v2237, 0.0
        %v2524 = vmax.f32 %v2242, 0.0
        %v2525 = vmax.f32 %v2245, 0.0
        %v2526 = vmax.f32 %v2250, 0.0
        %v2527 = vmax.f32 %v2253, 0.0
        %v2528 = vmax.f32 %v2258, 0.0
        %v2529 = vmax.f32 %v2261, 0.0
        %v2530 = vmax.f32 %v2266, 0.0
        %v2531 = vmax.f32 %v2269, 0.0
        %v2532 = vmax.f32 %v2274, 0.0
        %v2533 = vmax.f32 %v2277, 0.0
        %v2534 = vmax.f32 %v2282, 0.0
        %v2535 = vmax.f32 %v2285, 0.0
        %v2536 = vmax.f32 %v2290, 0.0
        %v2537 = vmax.f32 %v2293, 0.0
        %v2538 = vmax.f32 %v2298, 0.0
        %v2539 = vmax.f32 %v2301, 0.0
        %v2540 = vmax.f32 %v2306, 0.0
        %v2541 = vmax.f32 %v2309, 0.0
        %v2542 = vmax.f32 %v2314, 0.0
        %v2543 = vmax.f32 %v2317, 0.0
        %v2544 = vmax.f32 %v2322, 0.0
        %v2545 = vmax.f32 %v2325, 0.0
        %v2546 = vmax.f32 %v2330, 0.0
        %v2547 = vmax.f32 %v2333, 0.0
        %v2548 = vmax.f32 %v2338, 0.0
        %v2549 = vmax.f32 %v2341, 0.0
        %v2550 = vmax.f32 %v2346, 0.0
        %v2551 = vmax.f32 %v2349, 0.0
        %v2552 = vmax.f32 %v2354, 0.0
        %v2553 = vmax.f32 %v2357, 0.0
        %v2554 = vmax.f32 %v2362, 0.0
        %v2555 = vmax.f32 %v2365, 0.0
        %v2556 = vmax.f32 %v2370, 0.0
        %v2557 = vmax.f32 %v2373, 0.0
        %v2558 = vmax.f32 %v2378, 0.0
        %v2559 = vmax.f32 %v2381, 0.0
        %v2560 = vmax.f32 %v2386, 0.0
        %v2561 = vmax.f32 %v2389, 0.0
        %v2562 = vmax.f32 %v2394, 0.0
        %v2563 = vmax.f32 %v2397, 0.0
        %v2564 = vmax.f32 %v2402, 0.0
        %v2565 = vmax.f32 %v2405, 0.0
        %v2566 = vmax.f32 %v2410, 0.0
        %v2567 = vmax.f32 %v2413, 0.0
        %v2568 = vmax.f32 %v2418, 0.0
        %v2569 = vmax.f32 %v2421, 0.0
        %v2570 = vmax.f32 %v2426, 0.0
        %v2571 = vmax.f32 %v2429, 0.0
        %v2572 = vmax.f32 %v2434, 0.0
        %v2573 = vmax.f32 %v2437, 0.0
        %v2574 = vmax.f32 %v2442, 0.0
        %v2575 = vmax.f32 %v2445, 0.0
        %v2576 = vpack.c.bf16 %v2449, %v2448
        %v2577 = vpack.c.bf16 %v2451, %v2450
        %v2578 = vpack.c.bf16 %v2453, %v2452
        %v2579 = vpack.c.bf16 %v2455, %v2454
        %v2580 = vpack.c.bf16 %v2457, %v2456
        %v2581 = vpack.c.bf16 %v2459, %v2458
        %v2582 = vpack.c.bf16 %v2461, %v2460
        %v2583 = vpack.c.bf16 %v2463, %v2462
        %v2584 = vpack.c.bf16 %v2465, %v2464
        %v2585 = vpack.c.bf16 %v2467, %v2466
        %v2586 = vpack.c.bf16 %v2469, %v2468
        %v2587 = vpack.c.bf16 %v2471, %v2470
        %v2588 = vpack.c.bf16 %v2473, %v2472
        %v2589 = vpack.c.bf16 %v2475, %v2474
        %v2590 = vpack.c.bf16 %v2477, %v2476
        %v2591 = vpack.c.bf16 %v2479, %v2478
        %v2592 = vpack.c.bf16 %v2481, %v2480
        %v2593 = vpack.c.bf16 %v2483, %v2482
        %v2594 = vpack.c.bf16 %v2485, %v2484
        %v2595 = vpack.c.bf16 %v2487, %v2486
        %v2596 = vpack.c.bf16 %v2489, %v2488
        %v2597 = vpack.c.bf16 %v2491, %v2490
        %v2598 = vpack.c.bf16 %v2493, %v2492
        %v2599 = vpack.c.bf16 %v2495, %v2494
        %v2600 = vpack.c.bf16 %v2497, %v2496
        %v2601 = vpack.c.bf16 %v2499, %v2498
        %v2602 = vpack.c.bf16 %v2501, %v2500
        %v2603 = vpack.c.bf16 %v2503, %v2502
        %v2604 = vpack.c.bf16 %v2505, %v2504
        %v2605 = vpack.c.bf16 %v2507, %v2506
        %v2606 = vpack.c.bf16 %v2509, %v2508
        %v2607 = vpack.c.bf16 %v2511, %v2510
        %v2608 = vpack.c.bf16 %v2513, %v2512
        %v2609 = vpack.c.bf16 %v2515, %v2514
        %v2610 = vpack.c.bf16 %v2517, %v2516
        %v2611 = vpack.c.bf16 %v2519, %v2518
        %v2612 = vpack.c.bf16 %v2521, %v2520
        %v2613 = vpack.c.bf16 %v2523, %v2522
        %v2614 = vpack.c.bf16 %v2525, %v2524
        %v2615 = vpack.c.bf16 %v2527, %v2526
        %v2616 = vpack.c.bf16 %v2529, %v2528
        %v2617 = vpack.c.bf16 %v2531, %v2530
        %v2618 = vpack.c.bf16 %v2533, %v2532
        %v2619 = vpack.c.bf16 %v2535, %v2534
        %v2620 = vpack.c.bf16 %v2537, %v2536
        %v2621 = vpack.c.bf16 %v2539, %v2538
        %v2622 = vpack.c.bf16 %v2541, %v2540
        %v2623 = vpack.c.bf16 %v2543, %v2542
        %v2624 = vpack.c.bf16 %v2545, %v2544
        %v2625 = vpack.c.bf16 %v2547, %v2546
        %v2626 = vpack.c.bf16 %v2549, %v2548
        %v2627 = vpack.c.bf16 %v2551, %v2550
        %v2628 = vpack.c.bf16 %v2553, %v2552
        %v2629 = vpack.c.bf16 %v2555, %v2554
        %v2630 = vpack.c.bf16 %v2557, %v2556
        %v2631 = vpack.c.bf16 %v2559, %v2558
        %v2632 = vpack.c.bf16 %v2561, %v2560
        %v2633 = vpack.c.bf16 %v2563, %v2562
        %v2634 = vpack.c.bf16 %v2565, %v2564
        %v2635 = vpack.c.bf16 %v2567, %v2566
        %v2636 = vpack.c.bf16 %v2569, %v2568
        %v2637 = vpack.c.bf16 %v2571, %v2570
        %v2638 = vpack.c.bf16 %v2573, %v2572
        %v2639 = vpack.c.bf16 %v2575, %v2574
        %v2640 = vld [vmem:[%s5] sm:$0xf]
        %v2641 = vld [vmem:[%s5 + $0x4] sm:$0xf]
        %v2642 = vld [vmem:[%s5 + $0x8] sm:$0xf]
        %v2643 = vld [vmem:[%s5 + $0xc] sm:$0xf]
        %v2644 = vld [vmem:[%s5 + $0x10] sm:$0xf]
        %v2645 = vld [vmem:[%s5 + $0x14] sm:$0xf]
        %v2646 = vld [vmem:[%s5 + $0x18] sm:$0xf]
        %v2647 = vld [vmem:[%s5 + $0x1c] sm:$0xf]
        %v2648 = vld [vmem:[%s5 + $0x20] sm:$0xf]
        %v2649 = vld [vmem:[%s5 + $0x24] sm:$0xf]
        %v2650 = vld [vmem:[%s5 + $0x28] sm:$0xf]
        %v2651 = vld [vmem:[%s5 + $0x2c] sm:$0xf]
        %v2652 = vld [vmem:[%s5 + $0x30] sm:$0xf]
        %v2653 = vld [vmem:[%s5 + $0x34] sm:$0xf]
        %v2654 = vld [vmem:[%s5 + $0x38] sm:$0xf]
        %v2655 = vld [vmem:[%s5 + $0x3c] sm:$0xf]
        %v2656 = vld [vmem:[%s6] sm:$0x1]
        %v2658 = vlaneseq
        %v2659 = vshrl.u32 %v2658, 7
        %v2660 = vsub.s32 0, %v2659
        %v2661 = vrot.slane %v2656, %v2660
        %v2679 = vunpack.c.l.b16 %v2640
        %v2680 = vunpack.c.l.b16 %v2641
        %v2681 = vunpack.c.l.b16 %v2642
        %v2682 = vunpack.c.l.b16 %v2643
        %v2683 = vunpack.c.l.b16 %v2644
        %v2684 = vunpack.c.l.b16 %v2645
        %v2685 = vunpack.c.l.b16 %v2646
        %v2686 = vunpack.c.l.b16 %v2647
        %v2687 = vunpack.c.l.b16 %v2648
        %v2688 = vunpack.c.l.b16 %v2649
        %v2689 = vunpack.c.l.b16 %v2650
        %v2690 = vunpack.c.l.b16 %v2651
        %v2691 = vunpack.c.l.b16 %v2652
        %v2692 = vunpack.c.l.b16 %v2653
        %v2693 = vunpack.c.l.b16 %v2654
        %v2694 = vunpack.c.l.b16 %v2655
        %v2695 = vpack.c.b16 %v2680, %v2679
        %v2696 = vpack.c.b16 %v2682, %v2681
        %v2697 = vpack.c.b16 %v2684, %v2683
        %v2698 = vpack.c.b16 %v2686, %v2685
        %v2699 = vpack.c.b16 %v2688, %v2687
        %v2700 = vpack.c.b16 %v2690, %v2689
        %v2701 = vpack.c.b16 %v2692, %v2691
        %v2702 = vpack.c.b16 %v2694, %v2693
        %2711 = vmatprep.subr.bf16.mxu0 0
        %2712 = vmatpush1.bf16.msra.mxu0 %v2702
        %2713 = vmatprep.subr.bf16.mxu0 0
        %2714 = vmatpush1.bf16.msra.mxu0 %v2701
        %2715 = vmatprep.subr.bf16.mxu0 0
        %2716 = vmatpush1.bf16.msra.mxu0 %v2700
        %2717 = vmatprep.subr.bf16.mxu0 0
        %2718 = vmatpush1.bf16.msra.mxu0 %v2699
        %2719 = vmatprep.subr.bf16.mxu0 0
        %2720 = vmatpush1.bf16.msra.mxu0 %v2698
        %2721 = vmatprep.subr.bf16.mxu0 0
        %2722 = vmatpush1.bf16.msra.mxu0 %v2697
        %2723 = vmatprep.subr.bf16.mxu0 0
        %2724 = vmatpush1.bf16.msra.mxu0 %v2696
        %2725 = vmatprep.subr.bf16.mxu0 0
        %2726 = vmatpush1.bf16.msra.mxu0 %v2695
        %2727 = vmatprep.subr.bf16.mxu0 0
        %2728 = vmatpush2.bf16.msra.mxu0 0
        %2729 = vmatprep.subr.bf16.mxu0 0
        %2730 = vmatpush2.bf16.msra.mxu0 0
        %2731 = vmatprep.subr.bf16.mxu0 0
        %2732 = vmatpush2.bf16.msra.mxu0 0
        %2733 = vmatprep.subr.bf16.mxu0 0
        %2734 = vmatpush2.bf16.msra.mxu0 0
        %2735 = vmatprep.subr.bf16.mxu0 0
        %2736 = vmatpush2.bf16.msra.mxu0 0
        %2737 = vmatprep.subr.bf16.mxu0 0
        %2738 = vmatpush2.bf16.msra.mxu0 0
        %2739 = vmatprep.subr.bf16.mxu0 0
        %2740 = vmatpush2.bf16.msra.mxu0 0
        %2741 = vmatprep.subr.bf16.mxu0 0
        %2742 = vmatpush2.bf16.msra.mxu0 0
        %2743 = vmatprep.mubr.bf16.mxu0 0
        %2744 = vmatmul.mubr.bf16.gmra.mxu0 %v2576
        %v2745 = vpop.f32.mrf.mxu0
        %v2746 = vadd.f32 %v2661, %v2745
        %v2747 = vpop.f32.mrf.mxu0
        %v2748 = vpop.f32.mrf.mxu0
        %v2749 = vadd.f32 %v2661, %v2748
        %v2750 = vpop.f32.mrf.mxu0
        %2751 = vmatprep.mubr.bf16.mxu0 0
        %2752 = vmatmul.mubr.bf16.gmra.mxu0 %v2577
        %v2753 = vpop.f32.mrf.mxu0
        %v2754 = vadd.f32 %v2661, %v2753
        %v2755 = vpop.f32.mrf.mxu0
        %v2756 = vpop.f32.mrf.mxu0
        %v2757 = vadd.f32 %v2661, %v2756
        %v2758 = vpop.f32.mrf.mxu0
        %2759 = vmatprep.mubr.bf16.mxu0 0
        %2760 = vmatmul.mubr.bf16.gmra.mxu0 %v2578
        %v2761 = vpop.f32.mrf.mxu0
        %v2762 = vadd.f32 %v2661, %v2761
        %v2763 = vpop.f32.mrf.mxu0
        %v2764 = vpop.f32.mrf.mxu0
        %v2765 = vadd.f32 %v2661, %v2764
        %v2766 = vpop.f32.mrf.mxu0
        %2767 = vmatprep.mubr.bf16.mxu0 0
        %2768 = vmatmul.mubr.bf16.gmra.mxu0 %v2579
        %v2769 = vpop.f32.mrf.mxu0
        %v2770 = vadd.f32 %v2661, %v2769
        %v2771 = vpop.f32.mrf.mxu0
        %v2772 = vpop.f32.mrf.mxu0
        %v2773 = vadd.f32 %v2661, %v2772
        %v2774 = vpop.f32.mrf.mxu0
        %2775 = vmatprep.mubr.bf16.mxu0 0
        %2776 = vmatmul.mubr.bf16.gmra.mxu0 %v2580
        %v2777 = vpop.f32.mrf.mxu0
        %v2778 = vadd.f32 %v2661, %v2777
        %v2779 = vpop.f32.mrf.mxu0
        %v2780 = vpop.f32.mrf.mxu0
        %v2781 = vadd.f32 %v2661, %v2780
        %v2782 = vpop.f32.mrf.mxu0
        %2783 = vmatprep.mubr.bf16.mxu0 0
        %2784 = vmatmul.mubr.bf16.gmra.mxu0 %v2581
        %v2785 = vpop.f32.mrf.mxu0
        %v2786 = vadd.f32 %v2661, %v2785
        %v2787 = vpop.f32.mrf.mxu0
        %v2788 = vpop.f32.mrf.mxu0
        %v2789 = vadd.f32 %v2661, %v2788
        %v2790 = vpop.f32.mrf.mxu0
        %2791 = vmatprep.mubr.bf16.mxu0 0
        %2792 = vmatmul.mubr.bf16.gmra.mxu0 %v2582
        %v2793 = vpop.f32.mrf.mxu0
        %v2794 = vadd.f32 %v2661, %v2793
        %v2795 = vpop.f32.mrf.mxu0
        %v2796 = vpop.f32.mrf.mxu0
        %v2797 = vadd.f32 %v2661, %v2796
        %v2798 = vpop.f32.mrf.mxu0
        %2799 = vmatprep.mubr.bf16.mxu0 0
        %2800 = vmatmul.mubr.bf16.gmra.mxu0 %v2583
        %v2801 = vpop.f32.mrf.mxu0
        %v2802 = vadd.f32 %v2661, %v2801
        %v2803 = vpop.f32.mrf.mxu0
        %v2804 = vpop.f32.mrf.mxu0
        %v2805 = vadd.f32 %v2661, %v2804
        %v2806 = vpop.f32.mrf.mxu0
        %2807 = vmatprep.mubr.bf16.mxu0 0
        %2808 = vmatmul.mubr.bf16.gmra.mxu0 %v2584
        %v2809 = vpop.f32.mrf.mxu0
        %v2810 = vadd.f32 %v2661, %v2809
        %v2811 = vpop.f32.mrf.mxu0
        %v2812 = vpop.f32.mrf.mxu0
        %v2813 = vadd.f32 %v2661, %v2812
        %v2814 = vpop.f32.mrf.mxu0
        %2815 = vmatprep.mubr.bf16.mxu0 0
        %2816 = vmatmul.mubr.bf16.gmra.mxu0 %v2585
        %v2817 = vpop.f32.mrf.mxu0
        %v2818 = vadd.f32 %v2661, %v2817
        %v2819 = vpop.f32.mrf.mxu0
        %v2820 = vpop.f32.mrf.mxu0
        %v2821 = vadd.f32 %v2661, %v2820
        %v2822 = vpop.f32.mrf.mxu0
        %2823 = vmatprep.mubr.bf16.mxu0 0
        %2824 = vmatmul.mubr.bf16.gmra.mxu0 %v2586
        %v2825 = vpop.f32.mrf.mxu0
        %v2826 = vadd.f32 %v2661, %v2825
        %v2827 = vpop.f32.mrf.mxu0
        %v2828 = vpop.f32.mrf.mxu0
        %v2829 = vadd.f32 %v2661, %v2828
        %v2830 = vpop.f32.mrf.mxu0
        %2831 = vmatprep.mubr.bf16.mxu0 0
        %2832 = vmatmul.mubr.bf16.gmra.mxu0 %v2587
        %v2833 = vpop.f32.mrf.mxu0
        %v2834 = vadd.f32 %v2661, %v2833
        %v2835 = vpop.f32.mrf.mxu0
        %v2836 = vpop.f32.mrf.mxu0
        %v2837 = vadd.f32 %v2661, %v2836
        %v2838 = vpop.f32.mrf.mxu0
        %2839 = vmatprep.mubr.bf16.mxu0 0
        %2840 = vmatmul.mubr.bf16.gmra.mxu0 %v2588
        %v2841 = vpop.f32.mrf.mxu0
        %v2842 = vadd.f32 %v2661, %v2841
        %v2843 = vpop.f32.mrf.mxu0
        %v2844 = vpop.f32.mrf.mxu0
        %v2845 = vadd.f32 %v2661, %v2844
        %v2846 = vpop.f32.mrf.mxu0
        %2847 = vmatprep.mubr.bf16.mxu0 0
        %2848 = vmatmul.mubr.bf16.gmra.mxu0 %v2589
        %v2849 = vpop.f32.mrf.mxu0
        %v2850 = vadd.f32 %v2661, %v2849
        %v2851 = vpop.f32.mrf.mxu0
        %v2852 = vpop.f32.mrf.mxu0
        %v2853 = vadd.f32 %v2661, %v2852
        %v2854 = vpop.f32.mrf.mxu0
        %2855 = vmatprep.mubr.bf16.mxu0 0
        %2856 = vmatmul.mubr.bf16.gmra.mxu0 %v2590
        %v2857 = vpop.f32.mrf.mxu0
        %v2858 = vadd.f32 %v2661, %v2857
        %v2859 = vpop.f32.mrf.mxu0
        %v2860 = vpop.f32.mrf.mxu0
        %v2861 = vadd.f32 %v2661, %v2860
        %v2862 = vpop.f32.mrf.mxu0
        %2863 = vmatprep.mubr.bf16.mxu0 0
        %2864 = vmatmul.mubr.bf16.gmra.mxu0 %v2591
        %v2865 = vpop.f32.mrf.mxu0
        %v2866 = vadd.f32 %v2661, %v2865
        %v2867 = vpop.f32.mrf.mxu0
        %v2868 = vpop.f32.mrf.mxu0
        %v2869 = vadd.f32 %v2661, %v2868
        %v2870 = vpop.f32.mrf.mxu0
        %2871 = vmatprep.mubr.bf16.mxu0 0
        %2872 = vmatmul.mubr.bf16.gmra.mxu0 %v2592
        %v2873 = vpop.f32.mrf.mxu0
        %v2874 = vadd.f32 %v2661, %v2873
        %v2875 = vpop.f32.mrf.mxu0
        %v2876 = vpop.f32.mrf.mxu0
        %v2877 = vadd.f32 %v2661, %v2876
        %v2878 = vpop.f32.mrf.mxu0
        %2879 = vmatprep.mubr.bf16.mxu0 0
        %2880 = vmatmul.mubr.bf16.gmra.mxu0 %v2593
        %v2881 = vpop.f32.mrf.mxu0
        %v2882 = vadd.f32 %v2661, %v2881
        %v2883 = vpop.f32.mrf.mxu0
        %v2884 = vpop.f32.mrf.mxu0
        %v2885 = vadd.f32 %v2661, %v2884
        %v2886 = vpop.f32.mrf.mxu0
        %2887 = vmatprep.mubr.bf16.mxu0 0
        %2888 = vmatmul.mubr.bf16.gmra.mxu0 %v2594
        %v2889 = vpop.f32.mrf.mxu0
        %v2890 = vadd.f32 %v2661, %v2889
        %v2891 = vpop.f32.mrf.mxu0
        %v2892 = vpop.f32.mrf.mxu0
        %v2893 = vadd.f32 %v2661, %v2892
        %v2894 = vpop.f32.mrf.mxu0
        %2895 = vmatprep.mubr.bf16.mxu0 0
        %2896 = vmatmul.mubr.bf16.gmra.mxu0 %v2595
        %v2897 = vpop.f32.mrf.mxu0
        %v2898 = vadd.f32 %v2661, %v2897
        %v2899 = vpop.f32.mrf.mxu0
        %v2900 = vpop.f32.mrf.mxu0
        %v2901 = vadd.f32 %v2661, %v2900
        %v2902 = vpop.f32.mrf.mxu0
        %2903 = vmatprep.mubr.bf16.mxu0 0
        %2904 = vmatmul.mubr.bf16.gmra.mxu0 %v2596
        %v2905 = vpop.f32.mrf.mxu0
        %v2906 = vadd.f32 %v2661, %v2905
        %v2907 = vpop.f32.mrf.mxu0
        %v2908 = vpop.f32.mrf.mxu0
        %v2909 = vadd.f32 %v2661, %v2908
        %v2910 = vpop.f32.mrf.mxu0
        %2911 = vmatprep.mubr.bf16.mxu0 0
        %2912 = vmatmul.mubr.bf16.gmra.mxu0 %v2597
        %v2913 = vpop.f32.mrf.mxu0
        %v2914 = vadd.f32 %v2661, %v2913
        %v2915 = vpop.f32.mrf.mxu0
        %v2916 = vpop.f32.mrf.mxu0
        %v2917 = vadd.f32 %v2661, %v2916
        %v2918 = vpop.f32.mrf.mxu0
        %2919 = vmatprep.mubr.bf16.mxu0 0
        %2920 = vmatmul.mubr.bf16.gmra.mxu0 %v2598
        %v2921 = vpop.f32.mrf.mxu0
        %v2922 = vadd.f32 %v2661, %v2921
        %v2923 = vpop.f32.mrf.mxu0
        %v2924 = vpop.f32.mrf.mxu0
        %v2925 = vadd.f32 %v2661, %v2924
        %v2926 = vpop.f32.mrf.mxu0
        %2927 = vmatprep.mubr.bf16.mxu0 0
        %2928 = vmatmul.mubr.bf16.gmra.mxu0 %v2599
        %v2929 = vpop.f32.mrf.mxu0
        %v2930 = vadd.f32 %v2661, %v2929
        %v2931 = vpop.f32.mrf.mxu0
        %v2932 = vpop.f32.mrf.mxu0
        %v2933 = vadd.f32 %v2661, %v2932
        %v2934 = vpop.f32.mrf.mxu0
        %2935 = vmatprep.mubr.bf16.mxu0 0
        %2936 = vmatmul.mubr.bf16.gmra.mxu0 %v2600
        %v2937 = vpop.f32.mrf.mxu0
        %v2938 = vadd.f32 %v2661, %v2937
        %v2939 = vpop.f32.mrf.mxu0
        %v2940 = vpop.f32.mrf.mxu0
        %v2941 = vadd.f32 %v2661, %v2940
        %v2942 = vpop.f32.mrf.mxu0
        %2943 = vmatprep.mubr.bf16.mxu0 0
        %2944 = vmatmul.mubr.bf16.gmra.mxu0 %v2601
        %v2945 = vpop.f32.mrf.mxu0
        %v2946 = vadd.f32 %v2661, %v2945
        %v2947 = vpop.f32.mrf.mxu0
        %v2948 = vpop.f32.mrf.mxu0
        %v2949 = vadd.f32 %v2661, %v2948
        %v2950 = vpop.f32.mrf.mxu0
        %2951 = vmatprep.mubr.bf16.mxu0 0
        %2952 = vmatmul.mubr.bf16.gmra.mxu0 %v2602
        %v2953 = vpop.f32.mrf.mxu0
        %v2954 = vadd.f32 %v2661, %v2953
        %v2955 = vpop.f32.mrf.mxu0
        %v2956 = vpop.f32.mrf.mxu0
        %v2957 = vadd.f32 %v2661, %v2956
        %v2958 = vpop.f32.mrf.mxu0
        %2959 = vmatprep.mubr.bf16.mxu0 0
        %2960 = vmatmul.mubr.bf16.gmra.mxu0 %v2603
        %v2961 = vpop.f32.mrf.mxu0
        %v2962 = vadd.f32 %v2661, %v2961
        %v2963 = vpop.f32.mrf.mxu0
        %v2964 = vpop.f32.mrf.mxu0
        %v2965 = vadd.f32 %v2661, %v2964
        %v2966 = vpop.f32.mrf.mxu0
        %2967 = vmatprep.mubr.bf16.mxu0 0
        %2968 = vmatmul.mubr.bf16.gmra.mxu0 %v2604
        %v2969 = vpop.f32.mrf.mxu0
        %v2970 = vadd.f32 %v2661, %v2969
        %v2971 = vpop.f32.mrf.mxu0
        %v2972 = vpop.f32.mrf.mxu0
        %v2973 = vadd.f32 %v2661, %v2972
        %v2974 = vpop.f32.mrf.mxu0
        %2975 = vmatprep.mubr.bf16.mxu0 0
        %2976 = vmatmul.mubr.bf16.gmra.mxu0 %v2605
        %v2977 = vpop.f32.mrf.mxu0
        %v2978 = vadd.f32 %v2661, %v2977
        %v2979 = vpop.f32.mrf.mxu0
        %v2980 = vpop.f32.mrf.mxu0
        %v2981 = vadd.f32 %v2661, %v2980
        %v2982 = vpop.f32.mrf.mxu0
        %2983 = vmatprep.mubr.bf16.mxu0 0
        %2984 = vmatmul.mubr.bf16.gmra.mxu0 %v2606
        %v2985 = vpop.f32.mrf.mxu0
        %v2986 = vadd.f32 %v2661, %v2985
        %v2987 = vpop.f32.mrf.mxu0
        %v2988 = vpop.f32.mrf.mxu0
        %v2989 = vadd.f32 %v2661, %v2988
        %v2990 = vpop.f32.mrf.mxu0
        %2991 = vmatprep.mubr.bf16.mxu0 0
        %2992 = vmatmul.mubr.bf16.gmra.mxu0 %v2607
        %v2993 = vpop.f32.mrf.mxu0
        %v2994 = vadd.f32 %v2661, %v2993
        %v2995 = vpop.f32.mrf.mxu0
        %v2996 = vpop.f32.mrf.mxu0
        %v2997 = vadd.f32 %v2661, %v2996
        %v2998 = vpop.f32.mrf.mxu0
        %2999 = vmatprep.mubr.bf16.mxu0 0
        %3000 = vmatmul.mubr.bf16.gmra.mxu0 %v2608
        %v3001 = vpop.f32.mrf.mxu0
        %v3002 = vadd.f32 %v2661, %v3001
        %v3003 = vpop.f32.mrf.mxu0
        %v3004 = vpop.f32.mrf.mxu0
        %v3005 = vadd.f32 %v2661, %v3004
        %v3006 = vpop.f32.mrf.mxu0
        %3007 = vmatprep.mubr.bf16.mxu0 0
        %3008 = vmatmul.mubr.bf16.gmra.mxu0 %v2609
        %v3009 = vpop.f32.mrf.mxu0
        %v3010 = vadd.f32 %v2661, %v3009
        %v3011 = vpop.f32.mrf.mxu0
        %v3012 = vpop.f32.mrf.mxu0
        %v3013 = vadd.f32 %v2661, %v3012
        %v3014 = vpop.f32.mrf.mxu0
        %3015 = vmatprep.mubr.bf16.mxu0 0
        %3016 = vmatmul.mubr.bf16.gmra.mxu0 %v2610
        %v3017 = vpop.f32.mrf.mxu0
        %v3018 = vadd.f32 %v2661, %v3017
        %v3019 = vpop.f32.mrf.mxu0
        %v3020 = vpop.f32.mrf.mxu0
        %v3021 = vadd.f32 %v2661, %v3020
        %v3022 = vpop.f32.mrf.mxu0
        %3023 = vmatprep.mubr.bf16.mxu0 0
        %3024 = vmatmul.mubr.bf16.gmra.mxu0 %v2611
        %v3025 = vpop.f32.mrf.mxu0
        %v3026 = vadd.f32 %v2661, %v3025
        %v3027 = vpop.f32.mrf.mxu0
        %v3028 = vpop.f32.mrf.mxu0
        %v3029 = vadd.f32 %v2661, %v3028
        %v3030 = vpop.f32.mrf.mxu0
        %3031 = vmatprep.mubr.bf16.mxu0 0
        %3032 = vmatmul.mubr.bf16.gmra.mxu0 %v2612
        %v3033 = vpop.f32.mrf.mxu0
        %v3034 = vadd.f32 %v2661, %v3033
        %v3035 = vpop.f32.mrf.mxu0
        %v3036 = vpop.f32.mrf.mxu0
        %v3037 = vadd.f32 %v2661, %v3036
        %v3038 = vpop.f32.mrf.mxu0
        %3039 = vmatprep.mubr.bf16.mxu0 0
        %3040 = vmatmul.mubr.bf16.gmra.mxu0 %v2613
        %v3041 = vpop.f32.mrf.mxu0
        %v3042 = vadd.f32 %v2661, %v3041
        %v3043 = vpop.f32.mrf.mxu0
        %v3044 = vpop.f32.mrf.mxu0
        %v3045 = vadd.f32 %v2661, %v3044
        %v3046 = vpop.f32.mrf.mxu0
        %3047 = vmatprep.mubr.bf16.mxu0 0
        %3048 = vmatmul.mubr.bf16.gmra.mxu0 %v2614
        %v3049 = vpop.f32.mrf.mxu0
        %v3050 = vadd.f32 %v2661, %v3049
        %v3051 = vpop.f32.mrf.mxu0
        %v3052 = vpop.f32.mrf.mxu0
        %v3053 = vadd.f32 %v2661, %v3052
        %v3054 = vpop.f32.mrf.mxu0
        %3055 = vmatprep.mubr.bf16.mxu0 0
        %3056 = vmatmul.mubr.bf16.gmra.mxu0 %v2615
        %v3057 = vpop.f32.mrf.mxu0
        %v3058 = vadd.f32 %v2661, %v3057
        %v3059 = vpop.f32.mrf.mxu0
        %v3060 = vpop.f32.mrf.mxu0
        %v3061 = vadd.f32 %v2661, %v3060
        %v3062 = vpop.f32.mrf.mxu0
        %3063 = vmatprep.mubr.bf16.mxu0 0
        %3064 = vmatmul.mubr.bf16.gmra.mxu0 %v2616
        %v3065 = vpop.f32.mrf.mxu0
        %v3066 = vadd.f32 %v2661, %v3065
        %v3067 = vpop.f32.mrf.mxu0
        %v3068 = vpop.f32.mrf.mxu0
        %v3069 = vadd.f32 %v2661, %v3068
        %v3070 = vpop.f32.mrf.mxu0
        %3071 = vmatprep.mubr.bf16.mxu0 0
        %3072 = vmatmul.mubr.bf16.gmra.mxu0 %v2617
        %v3073 = vpop.f32.mrf.mxu0
        %v3074 = vadd.f32 %v2661, %v3073
        %v3075 = vpop.f32.mrf.mxu0
        %v3076 = vpop.f32.mrf.mxu0
        %v3077 = vadd.f32 %v2661, %v3076
        %v3078 = vpop.f32.mrf.mxu0
        %3079 = vmatprep.mubr.bf16.mxu0 0
        %3080 = vmatmul.mubr.bf16.gmra.mxu0 %v2618
        %v3081 = vpop.f32.mrf.mxu0
        %v3082 = vadd.f32 %v2661, %v3081
        %v3083 = vpop.f32.mrf.mxu0
        %v3084 = vpop.f32.mrf.mxu0
        %v3085 = vadd.f32 %v2661, %v3084
        %v3086 = vpop.f32.mrf.mxu0
        %3087 = vmatprep.mubr.bf16.mxu0 0
        %3088 = vmatmul.mubr.bf16.gmra.mxu0 %v2619
        %v3089 = vpop.f32.mrf.mxu0
        %v3090 = vadd.f32 %v2661, %v3089
        %v3091 = vpop.f32.mrf.mxu0
        %v3092 = vpop.f32.mrf.mxu0
        %v3093 = vadd.f32 %v2661, %v3092
        %v3094 = vpop.f32.mrf.mxu0
        %3095 = vmatprep.mubr.bf16.mxu0 0
        %3096 = vmatmul.mubr.bf16.gmra.mxu0 %v2620
        %v3097 = vpop.f32.mrf.mxu0
        %v3098 = vadd.f32 %v2661, %v3097
        %v3099 = vpop.f32.mrf.mxu0
        %v3100 = vpop.f32.mrf.mxu0
        %v3101 = vadd.f32 %v2661, %v3100
        %v3102 = vpop.f32.mrf.mxu0
        %3103 = vmatprep.mubr.bf16.mxu0 0
        %3104 = vmatmul.mubr.bf16.gmra.mxu0 %v2621
        %v3105 = vpop.f32.mrf.mxu0
        %v3106 = vadd.f32 %v2661, %v3105
        %v3107 = vpop.f32.mrf.mxu0
        %v3108 = vpop.f32.mrf.mxu0
        %v3109 = vadd.f32 %v2661, %v3108
        %v3110 = vpop.f32.mrf.mxu0
        %3111 = vmatprep.mubr.bf16.mxu0 0
        %3112 = vmatmul.mubr.bf16.gmra.mxu0 %v2622
        %v3113 = vpop.f32.mrf.mxu0
        %v3114 = vadd.f32 %v2661, %v3113
        %v3115 = vpop.f32.mrf.mxu0
        %v3116 = vpop.f32.mrf.mxu0
        %v3117 = vadd.f32 %v2661, %v3116
        %v3118 = vpop.f32.mrf.mxu0
        %3119 = vmatprep.mubr.bf16.mxu0 0
        %3120 = vmatmul.mubr.bf16.gmra.mxu0 %v2623
        %v3121 = vpop.f32.mrf.mxu0
        %v3122 = vadd.f32 %v2661, %v3121
        %v3123 = vpop.f32.mrf.mxu0
        %v3124 = vpop.f32.mrf.mxu0
        %v3125 = vadd.f32 %v2661, %v3124
        %v3126 = vpop.f32.mrf.mxu0
        %3127 = vmatprep.mubr.bf16.mxu0 0
        %3128 = vmatmul.mubr.bf16.gmra.mxu0 %v2624
        %v3129 = vpop.f32.mrf.mxu0
        %v3130 = vadd.f32 %v2661, %v3129
        %v3131 = vpop.f32.mrf.mxu0
        %v3132 = vpop.f32.mrf.mxu0
        %v3133 = vadd.f32 %v2661, %v3132
        %v3134 = vpop.f32.mrf.mxu0
        %3135 = vmatprep.mubr.bf16.mxu0 0
        %3136 = vmatmul.mubr.bf16.gmra.mxu0 %v2625
        %v3137 = vpop.f32.mrf.mxu0
        %v3138 = vadd.f32 %v2661, %v3137
        %v3139 = vpop.f32.mrf.mxu0
        %v3140 = vpop.f32.mrf.mxu0
        %v3141 = vadd.f32 %v2661, %v3140
        %v3142 = vpop.f32.mrf.mxu0
        %3143 = vmatprep.mubr.bf16.mxu0 0
        %3144 = vmatmul.mubr.bf16.gmra.mxu0 %v2626
        %v3145 = vpop.f32.mrf.mxu0
        %v3146 = vadd.f32 %v2661, %v3145
        %v3147 = vpop.f32.mrf.mxu0
        %v3148 = vpop.f32.mrf.mxu0
        %v3149 = vadd.f32 %v2661, %v3148
        %v3150 = vpop.f32.mrf.mxu0
        %3151 = vmatprep.mubr.bf16.mxu0 0
        %3152 = vmatmul.mubr.bf16.gmra.mxu0 %v2627
        %v3153 = vpop.f32.mrf.mxu0
        %v3154 = vadd.f32 %v2661, %v3153
        %v3155 = vpop.f32.mrf.mxu0
        %v3156 = vpop.f32.mrf.mxu0
        %v3157 = vadd.f32 %v2661, %v3156
        %v3158 = vpop.f32.mrf.mxu0
        %3159 = vmatprep.mubr.bf16.mxu0 0
        %3160 = vmatmul.mubr.bf16.gmra.mxu0 %v2628
        %v3161 = vpop.f32.mrf.mxu0
        %v3162 = vadd.f32 %v2661, %v3161
        %v3163 = vpop.f32.mrf.mxu0
        %v3164 = vpop.f32.mrf.mxu0
        %v3165 = vadd.f32 %v2661, %v3164
        %v3166 = vpop.f32.mrf.mxu0
        %3167 = vmatprep.mubr.bf16.mxu0 0
        %3168 = vmatmul.mubr.bf16.gmra.mxu0 %v2629
        %v3169 = vpop.f32.mrf.mxu0
        %v3170 = vadd.f32 %v2661, %v3169
        %v3171 = vpop.f32.mrf.mxu0
        %v3172 = vpop.f32.mrf.mxu0
        %v3173 = vadd.f32 %v2661, %v3172
        %v3174 = vpop.f32.mrf.mxu0
        %3175 = vmatprep.mubr.bf16.mxu0 0
        %3176 = vmatmul.mubr.bf16.gmra.mxu0 %v2630
        %v3177 = vpop.f32.mrf.mxu0
        %v3178 = vadd.f32 %v2661, %v3177
        %v3179 = vpop.f32.mrf.mxu0
        %v3180 = vpop.f32.mrf.mxu0
        %v3181 = vadd.f32 %v2661, %v3180
        %v3182 = vpop.f32.mrf.mxu0
        %3183 = vmatprep.mubr.bf16.mxu0 0
        %3184 = vmatmul.mubr.bf16.gmra.mxu0 %v2631
        %v3185 = vpop.f32.mrf.mxu0
        %v3186 = vadd.f32 %v2661, %v3185
        %v3187 = vpop.f32.mrf.mxu0
        %v3188 = vpop.f32.mrf.mxu0
        %v3189 = vadd.f32 %v2661, %v3188
        %v3190 = vpop.f32.mrf.mxu0
        %3191 = vmatprep.mubr.bf16.mxu0 0
        %3192 = vmatmul.mubr.bf16.gmra.mxu0 %v2632
        %v3193 = vpop.f32.mrf.mxu0
        %v3194 = vadd.f32 %v2661, %v3193
        %v3195 = vpop.f32.mrf.mxu0
        %v3196 = vpop.f32.mrf.mxu0
        %v3197 = vadd.f32 %v2661, %v3196
        %v3198 = vpop.f32.mrf.mxu0
        %3199 = vmatprep.mubr.bf16.mxu0 0
        %3200 = vmatmul.mubr.bf16.gmra.mxu0 %v2633
        %v3201 = vpop.f32.mrf.mxu0
        %v3202 = vadd.f32 %v2661, %v3201
        %v3203 = vpop.f32.mrf.mxu0
        %v3204 = vpop.f32.mrf.mxu0
        %v3205 = vadd.f32 %v2661, %v3204
        %v3206 = vpop.f32.mrf.mxu0
        %3207 = vmatprep.mubr.bf16.mxu0 0
        %3208 = vmatmul.mubr.bf16.gmra.mxu0 %v2634
        %v3209 = vpop.f32.mrf.mxu0
        %v3210 = vadd.f32 %v2661, %v3209
        %v3211 = vpop.f32.mrf.mxu0
        %v3212 = vpop.f32.mrf.mxu0
        %v3213 = vadd.f32 %v2661, %v3212
        %v3214 = vpop.f32.mrf.mxu0
        %3215 = vmatprep.mubr.bf16.mxu0 0
        %3216 = vmatmul.mubr.bf16.gmra.mxu0 %v2635
        %v3217 = vpop.f32.mrf.mxu0
        %v3218 = vadd.f32 %v2661, %v3217
        %v3219 = vpop.f32.mrf.mxu0
        %v3220 = vpop.f32.mrf.mxu0
        %v3221 = vadd.f32 %v2661, %v3220
        %v3222 = vpop.f32.mrf.mxu0
        %3223 = vmatprep.mubr.bf16.mxu0 0
        %3224 = vmatmul.mubr.bf16.gmra.mxu0 %v2636
        %v3225 = vpop.f32.mrf.mxu0
        %v3226 = vadd.f32 %v2661, %v3225
        %v3227 = vpop.f32.mrf.mxu0
        %v3228 = vpop.f32.mrf.mxu0
        %v3229 = vadd.f32 %v2661, %v3228
        %v3230 = vpop.f32.mrf.mxu0
        %3231 = vmatprep.mubr.bf16.mxu0 0
        %3232 = vmatmul.mubr.bf16.gmra.mxu0 %v2637
        %v3233 = vpop.f32.mrf.mxu0
        %v3234 = vadd.f32 %v2661, %v3233
        %v3235 = vpop.f32.mrf.mxu0
        %v3236 = vpop.f32.mrf.mxu0
        %v3237 = vadd.f32 %v2661, %v3236
        %v3238 = vpop.f32.mrf.mxu0
        %3239 = vmatprep.mubr.bf16.mxu0 0
        %3240 = vmatmul.mubr.bf16.gmra.mxu0 %v2638
        %v3241 = vpop.f32.mrf.mxu0
        %v3242 = vadd.f32 %v2661, %v3241
        %v3243 = vpop.f32.mrf.mxu0
        %v3244 = vpop.f32.mrf.mxu0
        %v3245 = vadd.f32 %v2661, %v3244
        %v3246 = vpop.f32.mrf.mxu0
        %3247 = vmatprep.mubr.bf16.mxu0 0
        %3248 = vmatmul.mubr.bf16.gmra.mxu0 %v2639
        %v3249 = vpop.f32.mrf.mxu0
        %v3250 = vadd.f32 %v2661, %v3249
        %v3251 = vpop.f32.mrf.mxu0
        %v3252 = vpop.f32.mrf.mxu0
        %v3253 = vadd.f32 %v2661, %v3252
        %v3254 = vpop.f32.mrf.mxu0
        %3255 = vdwg.mxu0
        %v3256 = vmax.f32 %v2746, 0.0
        %v3257 = vmax.f32 %v2749, 0.0
        %v3258 = vmax.f32 %v2754, 0.0
        %v3259 = vmax.f32 %v2757, 0.0
        %v3260 = vmax.f32 %v2762, 0.0
        %v3261 = vmax.f32 %v2765, 0.0
        %v3262 = vmax.f32 %v2770, 0.0
        %v3263 = vmax.f32 %v2773, 0.0
        %v3264 = vmax.f32 %v2778, 0.0
        %v3265 = vmax.f32 %v2781, 0.0
        %v3266 = vmax.f32 %v2786, 0.0
        %v3267 = vmax.f32 %v2789, 0.0
        %v3268 = vmax.f32 %v2794, 0.0
        %v3269 = vmax.f32 %v2797, 0.0
        %v3270 = vmax.f32 %v2802, 0.0
        %v3271 = vmax.f32 %v2805, 0.0
        %v3272 = vmax.f32 %v2810, 0.0
        %v3273 = vmax.f32 %v2813, 0.0
        %v3274 = vmax.f32 %v2818, 0.0
        %v3275 = vmax.f32 %v2821, 0.0
        %v3276 = vmax.f32 %v2826, 0.0
        %v3277 = vmax.f32 %v2829, 0.0
        %v3278 = vmax.f32 %v2834, 0.0
        %v3279 = vmax.f32 %v2837, 0.0
        %v3280 = vmax.f32 %v2842, 0.0
        %v3281 = vmax.f32 %v2845, 0.0
        %v3282 = vmax.f32 %v2850, 0.0
        %v3283 = vmax.f32 %v2853, 0.0
        %v3284 = vmax.f32 %v2858, 0.0
        %v3285 = vmax.f32 %v2861, 0.0
        %v3286 = vmax.f32 %v2866, 0.0
        %v3287 = vmax.f32 %v2869, 0.0
        %v3288 = vmax.f32 %v2874, 0.0
        %v3289 = vmax.f32 %v2877, 0.0
        %v3290 = vmax.f32 %v2882, 0.0
        %v3291 = vmax.f32 %v2885, 0.0
        %v3292 = vmax.f32 %v2890, 0.0
        %v3293 = vmax.f32 %v2893, 0.0
        %v3294 = vmax.f32 %v2898, 0.0
        %v3295 = vmax.f32 %v2901, 0.0
        %v3296 = vmax.f32 %v2906, 0.0
        %v3297 = vmax.f32 %v2909, 0.0
        %v3298 = vmax.f32 %v2914, 0.0
        %v3299 = vmax.f32 %v2917, 0.0
        %v3300 = vmax.f32 %v2922, 0.0
        %v3301 = vmax.f32 %v2925, 0.0
        %v3302 = vmax.f32 %v2930, 0.0
        %v3303 = vmax.f32 %v2933, 0.0
        %v3304 = vmax.f32 %v2938, 0.0
        %v3305 = vmax.f32 %v2941, 0.0
        %v3306 = vmax.f32 %v2946, 0.0
        %v3307 = vmax.f32 %v2949, 0.0
        %v3308 = vmax.f32 %v2954, 0.0
        %v3309 = vmax.f32 %v2957, 0.0
        %v3310 = vmax.f32 %v2962, 0.0
        %v3311 = vmax.f32 %v2965, 0.0
        %v3312 = vmax.f32 %v2970, 0.0
        %v3313 = vmax.f32 %v2973, 0.0
        %v3314 = vmax.f32 %v2978, 0.0
        %v3315 = vmax.f32 %v2981, 0.0
        %v3316 = vmax.f32 %v2986, 0.0
        %v3317 = vmax.f32 %v2989, 0.0
        %v3318 = vmax.f32 %v2994, 0.0
        %v3319 = vmax.f32 %v2997, 0.0
        %v3320 = vmax.f32 %v3002, 0.0
        %v3321 = vmax.f32 %v3005, 0.0
        %v3322 = vmax.f32 %v3010, 0.0
        %v3323 = vmax.f32 %v3013, 0.0
        %v3324 = vmax.f32 %v3018, 0.0
        %v3325 = vmax.f32 %v3021, 0.0
        %v3326 = vmax.f32 %v3026, 0.0
        %v3327 = vmax.f32 %v3029, 0.0
        %v3328 = vmax.f32 %v3034, 0.0
        %v3329 = vmax.f32 %v3037, 0.0
        %v3330 = vmax.f32 %v3042, 0.0
        %v3331 = vmax.f32 %v3045, 0.0
        %v3332 = vmax.f32 %v3050, 0.0
        %v3333 = vmax.f32 %v3053, 0.0
        %v3334 = vmax.f32 %v3058, 0.0
        %v3335 = vmax.f32 %v3061, 0.0
        %v3336 = vmax.f32 %v3066, 0.0
        %v3337 = vmax.f32 %v3069, 0.0
        %v3338 = vmax.f32 %v3074, 0.0
        %v3339 = vmax.f32 %v3077, 0.0
        %v3340 = vmax.f32 %v3082, 0.0
        %v3341 = vmax.f32 %v3085, 0.0
        %v3342 = vmax.f32 %v3090, 0.0
        %v3343 = vmax.f32 %v3093, 0.0
        %v3344 = vmax.f32 %v3098, 0.0
        %v3345 = vmax.f32 %v3101, 0.0
        %v3346 = vmax.f32 %v3106, 0.0
        %v3347 = vmax.f32 %v3109, 0.0
        %v3348 = vmax.f32 %v3114, 0.0
        %v3349 = vmax.f32 %v3117, 0.0
        %v3350 = vmax.f32 %v3122, 0.0
        %v3351 = vmax.f32 %v3125, 0.0
        %v3352 = vmax.f32 %v3130, 0.0
        %v3353 = vmax.f32 %v3133, 0.0
        %v3354 = vmax.f32 %v3138, 0.0
        %v3355 = vmax.f32 %v3141, 0.0
        %v3356 = vmax.f32 %v3146, 0.0
        %v3357 = vmax.f32 %v3149, 0.0
        %v3358 = vmax.f32 %v3154, 0.0
        %v3359 = vmax.f32 %v3157, 0.0
        %v3360 = vmax.f32 %v3162, 0.0
        %v3361 = vmax.f32 %v3165, 0.0
        %v3362 = vmax.f32 %v3170, 0.0
        %v3363 = vmax.f32 %v3173, 0.0
        %v3364 = vmax.f32 %v3178, 0.0
        %v3365 = vmax.f32 %v3181, 0.0
        %v3366 = vmax.f32 %v3186, 0.0
        %v3367 = vmax.f32 %v3189, 0.0
        %v3368 = vmax.f32 %v3194, 0.0
        %v3369 = vmax.f32 %v3197, 0.0
        %v3370 = vmax.f32 %v3202, 0.0
        %v3371 = vmax.f32 %v3205, 0.0
        %v3372 = vmax.f32 %v3210, 0.0
        %v3373 = vmax.f32 %v3213, 0.0
        %v3374 = vmax.f32 %v3218, 0.0
        %v3375 = vmax.f32 %v3221, 0.0
        %v3376 = vmax.f32 %v3226, 0.0
        %v3377 = vmax.f32 %v3229, 0.0
        %v3378 = vmax.f32 %v3234, 0.0
        %v3379 = vmax.f32 %v3237, 0.0
        %v3380 = vmax.f32 %v3242, 0.0
        %v3381 = vmax.f32 %v3245, 0.0
        %v3382 = vmax.f32 %v3250, 0.0
        %v3383 = vmax.f32 %v3253, 0.0
        %v3384 = vmax.f32 %v3256, %v3257
        %v3385 = vrot.slane %v3384, 4
        %v3386 = vmax.f32 %v3384, %v3385
        %v3387 = vrot.slane %v3386, 2
        %v3388 = vmax.f32 %v3386, %v3387
        %v3389 = vrot.slane %v3388, 1
        %v3390 = vmax.f32 %v3388, %v3389
        %v3391 = vmax.f32 %v3258, %v3259
        %v3392 = vrot.slane %v3391, 4
        %v3393 = vmax.f32 %v3391, %v3392
        %v3394 = vrot.slane %v3393, 2
        %v3395 = vmax.f32 %v3393, %v3394
        %v3396 = vrot.slane %v3395, 1
        %v3397 = vmax.f32 %v3395, %v3396
        %v3398 = vmax.f32 %v3260, %v3261
        %v3399 = vrot.slane %v3398, 4
        %v3400 = vmax.f32 %v3398, %v3399
        %v3401 = vrot.slane %v3400, 2
        %v3402 = vmax.f32 %v3400, %v3401
        %v3403 = vrot.slane %v3402, 1
        %v3404 = vmax.f32 %v3402, %v3403
        %v3405 = vmax.f32 %v3262, %v3263
        %v3406 = vrot.slane %v3405, 4
        %v3407 = vmax.f32 %v3405, %v3406
        %v3408 = vrot.slane %v3407, 2
        %v3409 = vmax.f32 %v3407, %v3408
        %v3410 = vrot.slane %v3409, 1
        %v3411 = vmax.f32 %v3409, %v3410
        %v3412 = vmax.f32 %v3264, %v3265
        %v3413 = vrot.slane %v3412, 4
        %v3414 = vmax.f32 %v3412, %v3413
        %v3415 = vrot.slane %v3414, 2
        %v3416 = vmax.f32 %v3414, %v3415
        %v3417 = vrot.slane %v3416, 1
        %v3418 = vmax.f32 %v3416, %v3417
        %v3419 = vmax.f32 %v3266, %v3267
        %v3420 = vrot.slane %v3419, 4
        %v3421 = vmax.f32 %v3419, %v3420
        %v3422 = vrot.slane %v3421, 2
        %v3423 = vmax.f32 %v3421, %v3422
        %v3424 = vrot.slane %v3423, 1
        %v3425 = vmax.f32 %v3423, %v3424
        %v3426 = vmax.f32 %v3268, %v3269
        %v3427 = vrot.slane %v3426, 4
        %v3428 = vmax.f32 %v3426, %v3427
        %v3429 = vrot.slane %v3428, 2
        %v3430 = vmax.f32 %v3428, %v3429
        %v3431 = vrot.slane %v3430, 1
        %v3432 = vmax.f32 %v3430, %v3431
        %v3433 = vmax.f32 %v3270, %v3271
        %v3434 = vrot.slane %v3433, 4
        %v3435 = vmax.f32 %v3433, %v3434
        %v3436 = vrot.slane %v3435, 2
        %v3437 = vmax.f32 %v3435, %v3436
        %v3438 = vrot.slane %v3437, 1
        %v3439 = vmax.f32 %v3437, %v3438
        %v3440 = vmax.f32 %v3272, %v3273
        %v3441 = vrot.slane %v3440, 4
        %v3442 = vmax.f32 %v3440, %v3441
        %v3443 = vrot.slane %v3442, 2
        %v3444 = vmax.f32 %v3442, %v3443
        %v3445 = vrot.slane %v3444, 1
        %v3446 = vmax.f32 %v3444, %v3445
        %v3447 = vmax.f32 %v3274, %v3275
        %v3448 = vrot.slane %v3447, 4
        %v3449 = vmax.f32 %v3447, %v3448
        %v3450 = vrot.slane %v3449, 2
        %v3451 = vmax.f32 %v3449, %v3450
        %v3452 = vrot.slane %v3451, 1
        %v3453 = vmax.f32 %v3451, %v3452
        %v3454 = vmax.f32 %v3276, %v3277
        %v3455 = vrot.slane %v3454, 4
        %v3456 = vmax.f32 %v3454, %v3455
        %v3457 = vrot.slane %v3456, 2
        %v3458 = vmax.f32 %v3456, %v3457
        %v3459 = vrot.slane %v3458, 1
        %v3460 = vmax.f32 %v3458, %v3459
        %v3461 = vmax.f32 %v3278, %v3279
        %v3462 = vrot.slane %v3461, 4
        %v3463 = vmax.f32 %v3461, %v3462
        %v3464 = vrot.slane %v3463, 2
        %v3465 = vmax.f32 %v3463, %v3464
        %v3466 = vrot.slane %v3465, 1
        %v3467 = vmax.f32 %v3465, %v3466
        %v3468 = vmax.f32 %v3280, %v3281
        %v3469 = vrot.slane %v3468, 4
        %v3470 = vmax.f32 %v3468, %v3469
        %v3471 = vrot.slane %v3470, 2
        %v3472 = vmax.f32 %v3470, %v3471
        %v3473 = vrot.slane %v3472, 1
        %v3474 = vmax.f32 %v3472, %v3473
        %v3475 = vmax.f32 %v3282, %v3283
        %v3476 = vrot.slane %v3475, 4
        %v3477 = vmax.f32 %v3475, %v3476
        %v3478 = vrot.slane %v3477, 2
        %v3479 = vmax.f32 %v3477, %v3478
        %v3480 = vrot.slane %v3479, 1
        %v3481 = vmax.f32 %v3479, %v3480
        %v3482 = vmax.f32 %v3284, %v3285
        %v3483 = vrot.slane %v3482, 4
        %v3484 = vmax.f32 %v3482, %v3483
        %v3485 = vrot.slane %v3484, 2
        %v3486 = vmax.f32 %v3484, %v3485
        %v3487 = vrot.slane %v3486, 1
        %v3488 = vmax.f32 %v3486, %v3487
        %v3489 = vmax.f32 %v3286, %v3287
        %v3490 = vrot.slane %v3489, 4
        %v3491 = vmax.f32 %v3489, %v3490
        %v3492 = vrot.slane %v3491, 2
        %v3493 = vmax.f32 %v3491, %v3492
        %v3494 = vrot.slane %v3493, 1
        %v3495 = vmax.f32 %v3493, %v3494
        %v3496 = vmax.f32 %v3288, %v3289
        %v3497 = vrot.slane %v3496, 4
        %v3498 = vmax.f32 %v3496, %v3497
        %v3499 = vrot.slane %v3498, 2
        %v3500 = vmax.f32 %v3498, %v3499
        %v3501 = vrot.slane %v3500, 1
        %v3502 = vmax.f32 %v3500, %v3501
        %v3503 = vmax.f32 %v3290, %v3291
        %v3504 = vrot.slane %v3503, 4
        %v3505 = vmax.f32 %v3503, %v3504
        %v3506 = vrot.slane %v3505, 2
        %v3507 = vmax.f32 %v3505, %v3506
        %v3508 = vrot.slane %v3507, 1
        %v3509 = vmax.f32 %v3507, %v3508
        %v3510 = vmax.f32 %v3292, %v3293
        %v3511 = vrot.slane %v3510, 4
        %v3512 = vmax.f32 %v3510, %v3511
        %v3513 = vrot.slane %v3512, 2
        %v3514 = vmax.f32 %v3512, %v3513
        %v3515 = vrot.slane %v3514, 1
        %v3516 = vmax.f32 %v3514, %v3515
        %v3517 = vmax.f32 %v3294, %v3295
        %v3518 = vrot.slane %v3517, 4
        %v3519 = vmax.f32 %v3517, %v3518
        %v3520 = vrot.slane %v3519, 2
        %v3521 = vmax.f32 %v3519, %v3520
        %v3522 = vrot.slane %v3521, 1
        %v3523 = vmax.f32 %v3521, %v3522
        %v3524 = vmax.f32 %v3296, %v3297
        %v3525 = vrot.slane %v3524, 4
        %v3526 = vmax.f32 %v3524, %v3525
        %v3527 = vrot.slane %v3526, 2
        %v3528 = vmax.f32 %v3526, %v3527
        %v3529 = vrot.slane %v3528, 1
        %v3530 = vmax.f32 %v3528, %v3529
        %v3531 = vmax.f32 %v3298, %v3299
        %v3532 = vrot.slane %v3531, 4
        %v3533 = vmax.f32 %v3531, %v3532
        %v3534 = vrot.slane %v3533, 2
        %v3535 = vmax.f32 %v3533, %v3534
        %v3536 = vrot.slane %v3535, 1
        %v3537 = vmax.f32 %v3535, %v3536
        %v3538 = vmax.f32 %v3300, %v3301
        %v3539 = vrot.slane %v3538, 4
        %v3540 = vmax.f32 %v3538, %v3539
        %v3541 = vrot.slane %v3540, 2
        %v3542 = vmax.f32 %v3540, %v3541
        %v3543 = vrot.slane %v3542, 1
        %v3544 = vmax.f32 %v3542, %v3543
        %v3545 = vmax.f32 %v3302, %v3303
        %v3546 = vrot.slane %v3545, 4
        %v3547 = vmax.f32 %v3545, %v3546
        %v3548 = vrot.slane %v3547, 2
        %v3549 = vmax.f32 %v3547, %v3548
        %v3550 = vrot.slane %v3549, 1
        %v3551 = vmax.f32 %v3549, %v3550
        %v3552 = vmax.f32 %v3304, %v3305
        %v3553 = vrot.slane %v3552, 4
        %v3554 = vmax.f32 %v3552, %v3553
        %v3555 = vrot.slane %v3554, 2
        %v3556 = vmax.f32 %v3554, %v3555
        %v3557 = vrot.slane %v3556, 1
        %v3558 = vmax.f32 %v3556, %v3557
        %v3559 = vmax.f32 %v3306, %v3307
        %v3560 = vrot.slane %v3559, 4
        %v3561 = vmax.f32 %v3559, %v3560
        %v3562 = vrot.slane %v3561, 2
        %v3563 = vmax.f32 %v3561, %v3562
        %v3564 = vrot.slane %v3563, 1
        %v3565 = vmax.f32 %v3563, %v3564
        %v3566 = vmax.f32 %v3308, %v3309
        %v3567 = vrot.slane %v3566, 4
        %v3568 = vmax.f32 %v3566, %v3567
        %v3569 = vrot.slane %v3568, 2
        %v3570 = vmax.f32 %v3568, %v3569
        %v3571 = vrot.slane %v3570, 1
        %v3572 = vmax.f32 %v3570, %v3571
        %v3573 = vmax.f32 %v3310, %v3311
        %v3574 = vrot.slane %v3573, 4
        %v3575 = vmax.f32 %v3573, %v3574
        %v3576 = vrot.slane %v3575, 2
        %v3577 = vmax.f32 %v3575, %v3576
        %v3578 = vrot.slane %v3577, 1
        %v3579 = vmax.f32 %v3577, %v3578
        %v3580 = vmax.f32 %v3312, %v3313
        %v3581 = vrot.slane %v3580, 4
        %v3582 = vmax.f32 %v3580, %v3581
        %v3583 = vrot.slane %v3582, 2
        %v3584 = vmax.f32 %v3582, %v3583
        %v3585 = vrot.slane %v3584, 1
        %v3586 = vmax.f32 %v3584, %v3585
        %v3587 = vmax.f32 %v3314, %v3315
        %v3588 = vrot.slane %v3587, 4
        %v3589 = vmax.f32 %v3587, %v3588
        %v3590 = vrot.slane %v3589, 2
        %v3591 = vmax.f32 %v3589, %v3590
        %v3592 = vrot.slane %v3591, 1
        %v3593 = vmax.f32 %v3591, %v3592
        %v3594 = vmax.f32 %v3316, %v3317
        %v3595 = vrot.slane %v3594, 4
        %v3596 = vmax.f32 %v3594, %v3595
        %v3597 = vrot.slane %v3596, 2
        %v3598 = vmax.f32 %v3596, %v3597
        %v3599 = vrot.slane %v3598, 1
        %v3600 = vmax.f32 %v3598, %v3599
        %v3601 = vmax.f32 %v3318, %v3319
        %v3602 = vrot.slane %v3601, 4
        %v3603 = vmax.f32 %v3601, %v3602
        %v3604 = vrot.slane %v3603, 2
        %v3605 = vmax.f32 %v3603, %v3604
        %v3606 = vrot.slane %v3605, 1
        %v3607 = vmax.f32 %v3605, %v3606
        %v3608 = vmax.f32 %v3320, %v3321
        %v3609 = vrot.slane %v3608, 4
        %v3610 = vmax.f32 %v3608, %v3609
        %v3611 = vrot.slane %v3610, 2
        %v3612 = vmax.f32 %v3610, %v3611
        %v3613 = vrot.slane %v3612, 1
        %v3614 = vmax.f32 %v3612, %v3613
        %v3615 = vmax.f32 %v3322, %v3323
        %v3616 = vrot.slane %v3615, 4
        %v3617 = vmax.f32 %v3615, %v3616
        %v3618 = vrot.slane %v3617, 2
        %v3619 = vmax.f32 %v3617, %v3618
        %v3620 = vrot.slane %v3619, 1
        %v3621 = vmax.f32 %v3619, %v3620
        %v3622 = vmax.f32 %v3324, %v3325
        %v3623 = vrot.slane %v3622, 4
        %v3624 = vmax.f32 %v3622, %v3623
        %v3625 = vrot.slane %v3624, 2
        %v3626 = vmax.f32 %v3624, %v3625
        %v3627 = vrot.slane %v3626, 1
        %v3628 = vmax.f32 %v3626, %v3627
        %v3629 = vmax.f32 %v3326, %v3327
        %v3630 = vrot.slane %v3629, 4
        %v3631 = vmax.f32 %v3629, %v3630
        %v3632 = vrot.slane %v3631, 2
        %v3633 = vmax.f32 %v3631, %v3632
        %v3634 = vrot.slane %v3633, 1
        %v3635 = vmax.f32 %v3633, %v3634
        %v3636 = vmax.f32 %v3328, %v3329
        %v3637 = vrot.slane %v3636, 4
        %v3638 = vmax.f32 %v3636, %v3637
        %v3639 = vrot.slane %v3638, 2
        %v3640 = vmax.f32 %v3638, %v3639
        %v3641 = vrot.slane %v3640, 1
        %v3642 = vmax.f32 %v3640, %v3641
        %v3643 = vmax.f32 %v3330, %v3331
        %v3644 = vrot.slane %v3643, 4
        %v3645 = vmax.f32 %v3643, %v3644
        %v3646 = vrot.slane %v3645, 2
        %v3647 = vmax.f32 %v3645, %v3646
        %v3648 = vrot.slane %v3647, 1
        %v3649 = vmax.f32 %v3647, %v3648
        %v3650 = vmax.f32 %v3332, %v3333
        %v3651 = vrot.slane %v3650, 4
        %v3652 = vmax.f32 %v3650, %v3651
        %v3653 = vrot.slane %v3652, 2
        %v3654 = vmax.f32 %v3652, %v3653
        %v3655 = vrot.slane %v3654, 1
        %v3656 = vmax.f32 %v3654, %v3655
        %v3657 = vmax.f32 %v3334, %v3335
        %v3658 = vrot.slane %v3657, 4
        %v3659 = vmax.f32 %v3657, %v3658
        %v3660 = vrot.slane %v3659, 2
        %v3661 = vmax.f32 %v3659, %v3660
        %v3662 = vrot.slane %v3661, 1
        %v3663 = vmax.f32 %v3661, %v3662
        %v3664 = vmax.f32 %v3336, %v3337
        %v3665 = vrot.slane %v3664, 4
        %v3666 = vmax.f32 %v3664, %v3665
        %v3667 = vrot.slane %v3666, 2
        %v3668 = vmax.f32 %v3666, %v3667
        %v3669 = vrot.slane %v3668, 1
        %v3670 = vmax.f32 %v3668, %v3669
        %v3671 = vmax.f32 %v3338, %v3339
        %v3672 = vrot.slane %v3671, 4
        %v3673 = vmax.f32 %v3671, %v3672
        %v3674 = vrot.slane %v3673, 2
        %v3675 = vmax.f32 %v3673, %v3674
        %v3676 = vrot.slane %v3675, 1
        %v3677 = vmax.f32 %v3675, %v3676
        %v3678 = vmax.f32 %v3340, %v3341
        %v3679 = vrot.slane %v3678, 4
        %v3680 = vmax.f32 %v3678, %v3679
        %v3681 = vrot.slane %v3680, 2
        %v3682 = vmax.f32 %v3680, %v3681
        %v3683 = vrot.slane %v3682, 1
        %v3684 = vmax.f32 %v3682, %v3683
        %v3685 = vmax.f32 %v3342, %v3343
        %v3686 = vrot.slane %v3685, 4
        %v3687 = vmax.f32 %v3685, %v3686
        %v3688 = vrot.slane %v3687, 2
        %v3689 = vmax.f32 %v3687, %v3688
        %v3690 = vrot.slane %v3689, 1
        %v3691 = vmax.f32 %v3689, %v3690
        %v3692 = vmax.f32 %v3344, %v3345
        %v3693 = vrot.slane %v3692, 4
        %v3694 = vmax.f32 %v3692, %v3693
        %v3695 = vrot.slane %v3694, 2
        %v3696 = vmax.f32 %v3694, %v3695
        %v3697 = vrot.slane %v3696, 1
        %v3698 = vmax.f32 %v3696, %v3697
        %v3699 = vmax.f32 %v3346, %v3347
        %v3700 = vrot.slane %v3699, 4
        %v3701 = vmax.f32 %v3699, %v3700
        %v3702 = vrot.slane %v3701, 2
        %v3703 = vmax.f32 %v3701, %v3702
        %v3704 = vrot.slane %v3703, 1
        %v3705 = vmax.f32 %v3703, %v3704
        %v3706 = vmax.f32 %v3348, %v3349
        %v3707 = vrot.slane %v3706, 4
        %v3708 = vmax.f32 %v3706, %v3707
        %v3709 = vrot.slane %v3708, 2
        %v3710 = vmax.f32 %v3708, %v3709
        %v3711 = vrot.slane %v3710, 1
        %v3712 = vmax.f32 %v3710, %v3711
        %v3713 = vmax.f32 %v3350, %v3351
        %v3714 = vrot.slane %v3713, 4
        %v3715 = vmax.f32 %v3713, %v3714
        %v3716 = vrot.slane %v3715, 2
        %v3717 = vmax.f32 %v3715, %v3716
        %v3718 = vrot.slane %v3717, 1
        %v3719 = vmax.f32 %v3717, %v3718
        %v3720 = vmax.f32 %v3352, %v3353
        %v3721 = vrot.slane %v3720, 4
        %v3722 = vmax.f32 %v3720, %v3721
        %v3723 = vrot.slane %v3722, 2
        %v3724 = vmax.f32 %v3722, %v3723
        %v3725 = vrot.slane %v3724, 1
        %v3726 = vmax.f32 %v3724, %v3725
        %v3727 = vmax.f32 %v3354, %v3355
        %v3728 = vrot.slane %v3727, 4
        %v3729 = vmax.f32 %v3727, %v3728
        %v3730 = vrot.slane %v3729, 2
        %v3731 = vmax.f32 %v3729, %v3730
        %v3732 = vrot.slane %v3731, 1
        %v3733 = vmax.f32 %v3731, %v3732
        %v3734 = vmax.f32 %v3356, %v3357
        %v3735 = vrot.slane %v3734, 4
        %v3736 = vmax.f32 %v3734, %v3735
        %v3737 = vrot.slane %v3736, 2
        %v3738 = vmax.f32 %v3736, %v3737
        %v3739 = vrot.slane %v3738, 1
        %v3740 = vmax.f32 %v3738, %v3739
        %v3741 = vmax.f32 %v3358, %v3359
        %v3742 = vrot.slane %v3741, 4
        %v3743 = vmax.f32 %v3741, %v3742
        %v3744 = vrot.slane %v3743, 2
        %v3745 = vmax.f32 %v3743, %v3744
        %v3746 = vrot.slane %v3745, 1
        %v3747 = vmax.f32 %v3745, %v3746
        %v3748 = vmax.f32 %v3360, %v3361
        %v3749 = vrot.slane %v3748, 4
        %v3750 = vmax.f32 %v3748, %v3749
        %v3751 = vrot.slane %v3750, 2
        %v3752 = vmax.f32 %v3750, %v3751
        %v3753 = vrot.slane %v3752, 1
        %v3754 = vmax.f32 %v3752, %v3753
        %v3755 = vmax.f32 %v3362, %v3363
        %v3756 = vrot.slane %v3755, 4
        %v3757 = vmax.f32 %v3755, %v3756
        %v3758 = vrot.slane %v3757, 2
        %v3759 = vmax.f32 %v3757, %v3758
        %v3760 = vrot.slane %v3759, 1
        %v3761 = vmax.f32 %v3759, %v3760
        %v3762 = vmax.f32 %v3364, %v3365
        %v3763 = vrot.slane %v3762, 4
        %v3764 = vmax.f32 %v3762, %v3763
        %v3765 = vrot.slane %v3764, 2
        %v3766 = vmax.f32 %v3764, %v3765
        %v3767 = vrot.slane %v3766, 1
        %v3768 = vmax.f32 %v3766, %v3767
        %v3769 = vmax.f32 %v3366, %v3367
        %v3770 = vrot.slane %v3769, 4
        %v3771 = vmax.f32 %v3769, %v3770
        %v3772 = vrot.slane %v3771, 2
        %v3773 = vmax.f32 %v3771, %v3772
        %v3774 = vrot.slane %v3773, 1
        %v3775 = vmax.f32 %v3773, %v3774
        %v3776 = vmax.f32 %v3368, %v3369
        %v3777 = vrot.slane %v3776, 4
        %v3778 = vmax.f32 %v3776, %v3777
        %v3779 = vrot.slane %v3778, 2
        %v3780 = vmax.f32 %v3778, %v3779
        %v3781 = vrot.slane %v3780, 1
        %v3782 = vmax.f32 %v3780, %v3781
        %v3783 = vmax.f32 %v3370, %v3371
        %v3784 = vrot.slane %v3783, 4
        %v3785 = vmax.f32 %v3783, %v3784
        %v3786 = vrot.slane %v3785, 2
        %v3787 = vmax.f32 %v3785, %v3786
        %v3788 = vrot.slane %v3787, 1
        %v3789 = vmax.f32 %v3787, %v3788
        %v3790 = vmax.f32 %v3372, %v3373
        %v3791 = vrot.slane %v3790, 4
        %v3792 = vmax.f32 %v3790, %v3791
        %v3793 = vrot.slane %v3792, 2
        %v3794 = vmax.f32 %v3792, %v3793
        %v3795 = vrot.slane %v3794, 1
        %v3796 = vmax.f32 %v3794, %v3795
        %v3797 = vmax.f32 %v3374, %v3375
        %v3798 = vrot.slane %v3797, 4
        %v3799 = vmax.f32 %v3797, %v3798
        %v3800 = vrot.slane %v3799, 2
        %v3801 = vmax.f32 %v3799, %v3800
        %v3802 = vrot.slane %v3801, 1
        %v3803 = vmax.f32 %v3801, %v3802
        %v3804 = vmax.f32 %v3376, %v3377
        %v3805 = vrot.slane %v3804, 4
        %v3806 = vmax.f32 %v3804, %v3805
        %v3807 = vrot.slane %v3806, 2
        %v3808 = vmax.f32 %v3806, %v3807
        %v3809 = vrot.slane %v3808, 1
        %v3810 = vmax.f32 %v3808, %v3809
        %v3811 = vmax.f32 %v3378, %v3379
        %v3812 = vrot.slane %v3811, 4
        %v3813 = vmax.f32 %v3811, %v3812
        %v3814 = vrot.slane %v3813, 2
        %v3815 = vmax.f32 %v3813, %v3814
        %v3816 = vrot.slane %v3815, 1
        %v3817 = vmax.f32 %v3815, %v3816
        %v3818 = vmax.f32 %v3380, %v3381
        %v3819 = vrot.slane %v3818, 4
        %v3820 = vmax.f32 %v3818, %v3819
        %v3821 = vrot.slane %v3820, 2
        %v3822 = vmax.f32 %v3820, %v3821
        %v3823 = vrot.slane %v3822, 1
        %v3824 = vmax.f32 %v3822, %v3823
        %v3825 = vmax.f32 %v3382, %v3383
        %v3826 = vrot.slane %v3825, 4
        %v3827 = vmax.f32 %v3825, %v3826
        %v3828 = vrot.slane %v3827, 2
        %v3829 = vmax.f32 %v3827, %v3828
        %v3830 = vrot.slane %v3829, 1
        %v3831 = vmax.f32 %v3829, %v3830
        %vm3896 = vcmask 1041409
        %v3897 = vsel %vm3896, %v3397, %v3390
        %vm3898 = vcmask 1042434
        %v3899 = vsel %vm3898, %v3404, %v3897
        %vm3900 = vcmask 1043459
        %v3901 = vsel %vm3900, %v3411, %v3899
        %vm3902 = vcmask 1044484
        %v3903 = vsel %vm3902, %v3418, %v3901
        %vm3904 = vcmask 1045509
        %v3905 = vsel %vm3904, %v3425, %v3903
        %vm3906 = vcmask 1046534
        %v3907 = vsel %vm3906, %v3432, %v3905
        %vm3908 = vcmask 1047559
        %v3909 = vsel %vm3908, %v3439, %v3907
        %v3910 = vsel %vm3896, %v3453, %v3446
        %v3911 = vsel %vm3898, %v3460, %v3910
        %v3912 = vsel %vm3900, %v3467, %v3911
        %v3913 = vsel %vm3902, %v3474, %v3912
        %v3914 = vsel %vm3904, %v3481, %v3913
        %v3915 = vsel %vm3906, %v3488, %v3914
        %v3916 = vsel %vm3908, %v3495, %v3915
        %v3917 = vsel %vm3896, %v3509, %v3502
        %v3918 = vsel %vm3898, %v3516, %v3917
        %v3919 = vsel %vm3900, %v3523, %v3918
        %v3920 = vsel %vm3902, %v3530, %v3919
        %v3921 = vsel %vm3904, %v3537, %v3920
        %v3922 = vsel %vm3906, %v3544, %v3921
        %v3923 = vsel %vm3908, %v3551, %v3922
        %v3924 = vsel %vm3896, %v3565, %v3558
        %v3925 = vsel %vm3898, %v3572, %v3924
        %v3926 = vsel %vm3900, %v3579, %v3925
        %v3927 = vsel %vm3902, %v3586, %v3926
        %v3928 = vsel %vm3904, %v3593, %v3927
        %v3929 = vsel %vm3906, %v3600, %v3928
        %v3930 = vsel %vm3908, %v3607, %v3929
        %v3931 = vsel %vm3896, %v3621, %v3614
        %v3932 = vsel %vm3898, %v3628, %v3931
        %v3933 = vsel %vm3900, %v3635, %v3932
        %v3934 = vsel %vm3902, %v3642, %v3933
        %v3935 = vsel %vm3904, %v3649, %v3934
        %v3936 = vsel %vm3906, %v3656, %v3935
        %v3937 = vsel %vm3908, %v3663, %v3936
        %v3938 = vsel %vm3896, %v3677, %v3670
        %v3939 = vsel %vm3898, %v3684, %v3938
        %v3940 = vsel %vm3900, %v3691, %v3939
        %v3941 = vsel %vm3902, %v3698, %v3940
        %v3942 = vsel %vm3904, %v3705, %v3941
        %v3943 = vsel %vm3906, %v3712, %v3942
        %v3944 = vsel %vm3908, %v3719, %v3943
        %v3945 = vsel %vm3896, %v3733, %v3726
        %v3946 = vsel %vm3898, %v3740, %v3945
        %v3947 = vsel %vm3900, %v3747, %v3946
        %v3948 = vsel %vm3902, %v3754, %v3947
        %v3949 = vsel %vm3904, %v3761, %v3948
        %v3950 = vsel %vm3906, %v3768, %v3949
        %v3951 = vsel %vm3908, %v3775, %v3950
        %v3952 = vsel %vm3896, %v3789, %v3782
        %v3953 = vsel %vm3898, %v3796, %v3952
        %v3954 = vsel %vm3900, %v3803, %v3953
        %v3955 = vsel %vm3902, %v3810, %v3954
        %v3956 = vsel %vm3904, %v3817, %v3955
        %v3957 = vsel %vm3906, %v3824, %v3956
        %v3958 = vsel %vm3908, %v3831, %v3957
        %3967 = vst [vmem:[%s272] sm:$0xff] %v3909
        %3968 = vst [vmem:[%s272 + $0x8] sm:$0xff] %v3916
        %3969 = vst [vmem:[%s272 + $0x10] sm:$0xff] %v3923
        %3970 = vst [vmem:[%s272 + $0x18] sm:$0xff] %v3930
        %3971 = vst [vmem:[%s272 + $0x20] sm:$0xff] %v3937
        %3972 = vst [vmem:[%s272 + $0x28] sm:$0xff] %v3944
        %3973 = vst [vmem:[%s272 + $0x30] sm:$0xff] %v3951
        %3974 = vst [vmem:[%s272 + $0x38] sm:$0xff] %v3958
        %s3975 = sand.u32 %s181, 1
        %s3976 = scalar_lea.sflag [#allocation3], %s3975
        %s3977 = sand.u32 %s181, 1
        %s3978 = smul.addr %s3977, 64
        %s3979 = scalar_lea.vmem [#allocation2], %s3978
        // Predicated region
        $region49: #{tpu_custom_call.1} parent=47 // pred_check
          %p3980 = pneg %p191
        $region50: #{tpu_custom_call.1} parent=47 // pred_check_branch
          %3982 = sbr.rel (%p3980) target = $region52
        $region51: #{tpu_custom_call.1} parent=47 // pred_region
          %s3983 = smul.u32 8, %s21
          %s3985 = ssub.s32 1024, 1024
          %3986 = vsyncadd %s3976, %s3985
          %s3987 = smul.addr %s3983, 128
          %s3988 = scalar_lea.hbm %s7, %s3987
          %s3989 = sshll.u32 %s3979, 4
          %s3990 = int_to_ptr.vmem [resolvable:$true] %s3989
          %3995 = dma.vmem_to_hbm [thread:$0]  %s3990, 1024, %s3988, %s3976, 128, 128, 8
        $region52: #{tpu_custom_call.1} parent=47 // pred_fallthru
          _
      $region48: #{tpu_custom_call.1} parent=5 // pred_fallthru
        _
      %p3996 = scmp.le.s32.totalorder 2, %s16
      // Predicated region
      $region53: #{tpu_custom_call.1} parent=5 // pred_check
        %p3997 = pneg %p3996
      $region54: #{tpu_custom_call.1} parent=5 // pred_check_branch
        %3999 = sbr.rel (%p3997) target = $region56
      $region55: #{tpu_custom_call.1} parent=5 // pred_region
        %s4000 = ssub.s32 %s16, 2
        // Predicated region
        $region57: #{tpu_custom_call.1} parent=55 // pred_check
          %p4001 = pneg %p197
        $region58: #{tpu_custom_call.1} parent=55 // pred_check_branch
          %4003 = sbr.rel (%p4001) target = $region60
        $region59: #{tpu_custom_call.1} parent=55 // pred_region
          %s4004 = sand.u32 %s182, 1
          %s4005 = scalar_lea.sflag [#allocation3], %s4004
          %s4006 = sand.u32 %s182, 1
          %s4007 = smul.addr %s4006, 64
          %s4008 = scalar_lea.vmem [#allocation2], %s4007
          %4009 = dma.done %s4005, 1024
        $region60: #{tpu_custom_call.1} parent=55 // pred_fallthru
          _
      $region56: #{tpu_custom_call.1} parent=5 // pred_fallthru
        _
    $region6: #{tpu_custom_call.1} parent=1 // loop_footer
      %s20 = sadd.s32 1, %s16
    $region7: #{tpu_custom_call.1} parent=1 // loop_footer_branch
      %15 = sbr.rel target = $region3
    $region8: #{tpu_custom_call.1} parent=1 // loop_exit
      _
    %4010 = vsyncpa [#allocation3], 1
    %s4011 = scalar_lea.sflag [#allocation3], 1
    %4012 = vsyncpa %s4011, 1

</llo_original>
